<compile_context>
chip_gen: v7x
topology: tpu7x:2x2x1
jax: 0.10.0
libtpu: 0.0.40
codegen_flags: <defaults>
</compile_context>

<pallas_src>
import functools

import jax
import jax.numpy as jnp
from jax import lax
from jax.experimental import pallas as pl
from jax.experimental.pallas import tpu as pltpu

_HALO = 8                     # sublane-aligned halo rows (> fused receptive field 3)
_MM_DTYPE = jnp.bfloat16      # MXU operand dtype (f32 accumulation)
_ACT_DTYPE = jnp.bfloat16     # inter-layer activation dtype in HBM


# ----------------------------------------------------------------------------
# In-kernel helpers (masks hoisted by the caller)
# ----------------------------------------------------------------------------
def _shift_down(x, not_first):
    """y[t] = x[t-1], zero at t=0.  (T, C) -> (T, C)."""
    return jnp.where(not_first, pltpu.roll(x, 1, axis=0), 0.0)


def _shift_up(x, not_last):
    """y[t] = x[t+1], zero at t=T-1.  (T, C) -> (T, C)."""
    # roll by T-1 == roll by -1 (pltpu.roll requires a non-negative shift).
    return jnp.where(not_last, pltpu.roll(x, x.shape[0] - 1, axis=0), 0.0)


def _conv_k3(x_f32, w, b, not_first, not_last):
    """Conv1d(k=3, stride=1, pad=1) as one K=3*Cin MXU matmul (bf16 in, f32 acc)."""
    packed = jnp.concatenate(
        [_shift_down(x_f32, not_first), x_f32, _shift_up(x_f32, not_last)], axis=-1)
    return jnp.dot(packed.astype(_MM_DTYPE), w,
                   preferred_element_type=jnp.float32) + b


def _tile_masks(text, t_valid, ti, nt):
    """Hoisted per-tile masks.

    vmask zeroes the halo rows that lie outside the true sequence (only at the
    first / last T tile); re-applying it after every spatial conv stage
    reproduces the per-conv zero padding of the reference.
    """
    row = lax.broadcasted_iota(jnp.int32, (text, 1), 0)
    invalid = ((row < _HALO) & (ti == 0)) | \
              ((row >= _HALO + t_valid) & (ti == nt - 1))
    vmask = jnp.where(invalid, 0.0, 1.0)
    return vmask, row > 0, row < text - 1


# ----------------------------------------------------------------------------
# Pallas kernels
# ----------------------------------------------------------------------------
def _layer_kernel(xc_ref, xl_ref, xr_ref, w1_ref, b1_ref, wr1_ref, br1_ref,
                  wr2_ref, br2_ref, wup_ref, bup_ref, o_ref):
    """One decoder layer: conv3 -> resnet -> (fused x2 upsample) conv3.

    Input blocks : center (1, tT, C), left/right halos (1, 8, C)
    Output block : (1, tT, 2C), lanes [0:C]=even rows, [C:2C]=odd rows.
    """
    tT = o_ref.shape[1]
    text = tT + 2 * _HALO
    ti = pl.program_id(1)
    nt = pl.num_programs(1)

    vmask, not_first, not_last = _tile_masks(text, tT, ti, nt)

    # Extended tile with halos (elementwise math stays f32; v5e has no bf16 VPU).
    x = jnp.concatenate([xl_ref[0], xc_ref[0], xr_ref[0]],
                        axis=0).astype(jnp.float32) * vmask

    # res_block_conv_i : Conv1d(k=3, pad=1)
    h = _conv_k3(x, w1_ref[...], b1_ref[...], not_first, not_last) * vmask

    # res_block_resnet_i : x + conv1x1(relu(conv3(relu(x))))
    r = jnp.maximum(h, 0.0)
    r = _conv_k3(r, wr1_ref[...], br1_ref[...], not_first, not_last)
    r = jnp.maximum(r, 0.0)
    r = jnp.dot(r.astype(_MM_DTYPE), wr2_ref[...],
                preferred_element_type=jnp.float32) + br2_ref[...]
    h = (h + r) * vmask

    # res_block_upsample_i + res_block_conv2_i:
    # x2 nearest upsample folded into the weights AND even/odd merged into a
    # single (text, 3C) @ (3C, 2C) matmul -> output is [y_even | y_odd].
    y = _conv_k3(h, wup_ref[...], bup_ref[...], not_first, not_last)

    o_ref[0] = y[_HALO:_HALO + tT].astype(o_ref.dtype)


def _final_conv_kernel(xc_ref, xl_ref, xr_ref, w_ref, b_ref, o_ref, *, activation):
    """Final Conv1d(k=3, pad=1) + activation; output channels are lane-padded."""
    tT = o_ref.shape[1]
    text = tT + 2 * _HALO
    ti = pl.program_id(1)
    nt = pl.num_programs(1)

    vmask, not_first, not_last = _tile_masks(text, tT, ti, nt)
    x = jnp.concatenate([xl_ref[0], xc_ref[0], xr_ref[0]],
                        axis=0).astype(jnp.float32) * vmask
    y = _conv_k3(x, w_ref[...], b_ref[...], not_first, not_last)
    if activation == "relu":
        y = jnp.maximum(y, 0.0)
    elif activation == "tanh":
        y = jnp.tanh(y)
    o_ref[0] = y[_HALO:_HALO + tT].astype(o_ref.dtype)


# ----------------------------------------------------------------------------
# Wrappers
# ----------------------------------------------------------------------------
@functools.lru_cache(maxsize=None)
def _vmem_limit_bytes():
    # Derive the scoped-VMEM limit from the running chip (v7x only has 64 MiB
    # physical per TC); half of physical, capped at 64 MiB.
    try:
        cap = int(pltpu.get_tpu_info().vmem_capacity_bytes)
    except Exception:
        cap = 64 * 1024 * 1024
    return min(cap // 2, 64 * 1024 * 1024)


def _compiler_params():
    # Both grid axes (batch, T-tile) are independent -> parallel; the T-tile
    # axis keeps both v7x TensorCores busy even when B == 1.
    return pltpu.CompilerParams(
        dimension_semantics=("parallel", "parallel"),
        vmem_limit_bytes=_vmem_limit_bytes(),
    )


def _choose_tile_t(T, C):
    """T-tile size: bounded VMEM working set, multiple of 8, divides T."""
    target = max(128, min(1024, 262144 // max(C, 1)))
    tT = T
    while tT > target and tT % 16 == 0:
        tT //= 2
    return tT


def _halo_specs(T, tT, C):
    """Center block + sublane-aligned 8-row halo blocks (clamped at edges)."""
    tpb = tT // _HALO          # T-tile size in units of 8-row blocks
    nb8 = T // _HALO           # total number of 8-row blocks along T
    center = pl.BlockSpec((1, tT, C), lambda b, i: (b, i, 0))
    left = pl.BlockSpec((1, _HALO, C),
                        lambda b, i: (b, jnp.maximum(i * tpb - 1, 0), 0))
    right = pl.BlockSpec((1, _HALO, C),
                         lambda b, i: (b, jnp.minimum((i + 1) * tpb, nb8 - 1), 0))
    return center, left, right


def fused_layer(h, lw):
    """h: (B, T, C) -> (B, 2T, C). One pallas_call for the whole layer."""
    B, T, C = h.shape
    assert T % _HALO == 0, "sequence length must be a multiple of 8"
    tT = _choose_tile_t(T, C)
    nT = T // tT
    center, left, right = _halo_specs(T, tT, C)
    wmap = lambda b, i: (0, 0)

    out = pl.pallas_call(
        _layer_kernel,
        out_shape=jax.ShapeDtypeStruct((B, T, 2 * C), _ACT_DTYPE),
        grid=(B, nT),
        in_specs=[
            center, left, right,
            pl.BlockSpec((3 * C, C), wmap),      # w1   (bf16)
            pl.BlockSpec((1, C), wmap),          # b1   (f32)
            pl.BlockSpec((3 * C, C), wmap),      # wr1  (bf16)
            pl.BlockSpec((1, C), wmap),          # br1  (f32)
            pl.BlockSpec((C, C), wmap),          # wr2  (bf16)
            pl.BlockSpec((1, C), wmap),          # br2  (f32)
            pl.BlockSpec((3 * C, 2 * C), wmap),  # wup  (bf16, upsample-folded)
            pl.BlockSpec((1, 2 * C), wmap),      # bup  (f32)
        ],
        out_specs=pl.BlockSpec((1, tT, 2 * C), lambda b, i: (b, i, 0)),
        compiler_params=_compiler_params(),
    )(h, h, h, lw["w1"], lw["b1"], lw["wr1"], lw["br1"], lw["wr2"], lw["br2"],
      lw["wup"], lw["bup"])
    # Row-major (B, T, 2C) -> (B, 2T, C) is a free metadata reshape and yields
    # exactly the interleaved (even, odd) time sequence.
    return out.reshape(B, 2 * T, C)


def final_conv(h, w_packed, b_padded, *, out_dim, activation):
    """h: (B, T, C) -> (B, T, out_dim). Lane-dense padded output, slice after."""
    B, T, C = h.shape
    assert T % _HALO == 0
    cout_pad = w_packed.shape[1]
    tT = _choose_tile_t(T, max(C, cout_pad))
    nT = T // tT
    center, left, right = _halo_specs(T, tT, C)
    wmap = lambda b, i: (0, 0)

    kern = functools.partial(_final_conv_kernel, activation=activation)
    y = pl.pallas_call(
        kern,
        out_shape=jax.ShapeDtypeStruct((B, T, cout_pad), jnp.float32),
        grid=(B, nT),
        in_specs=[
            center, left, right,
            pl.BlockSpec((3 * C, cout_pad), wmap),
            pl.BlockSpec((1, cout_pad), wmap),
        ],
        out_specs=pl.BlockSpec((1, tT, cout_pad), lambda b, i: (b, i, 0)),
        compiler_params=_compiler_params(),
    )(h, h, h, w_packed, b_padded)
    return y[:, :, :out_dim]


# ----------------------------------------------------------------------------
# One-time parameter preprocessing (hoisted out of the forward wrappers)
# ----------------------------------------------------------------------------
def prepare_params(params):
    """Transpose / K-pack / fold-upsample / merge even|odd / bf16-cast weights."""
    prepped = {"layers": []}
    for layer in params["layers"]:
        C = layer["conv_w"].shape[0]
        w2k = jnp.transpose(layer["conv2_w"], (2, 1, 0))        # (3, Cin, Cout) f32
        zero = jnp.zeros((C, C), jnp.float32)
        # Upsample(x2 nearest) folded into conv2 + even/odd merged into one
        # (3C, 2C) weight; columns [0:C]=even, [C:2C]=odd:
        #   even: [w0 ; w1+w2 ; 0]      odd: [0 ; w0+w1 ; w2]
        wup = jnp.concatenate([
            jnp.concatenate([w2k[0], zero], axis=1),
            jnp.concatenate([w2k[1] + w2k[2], w2k[0] + w2k[1]], axis=1),
            jnp.concatenate([zero, w2k[2]], axis=1)], axis=0)   # (3C, 2C)
        prepped["layers"].append({
            "w1": jnp.transpose(layer["conv_w"], (2, 1, 0)).reshape(3 * C, C)
                     .astype(_MM_DTYPE),
            "b1": layer["conv_b"].reshape(1, C).astype(jnp.float32),
            "wr1": jnp.transpose(layer["res_w1"], (2, 1, 0)).reshape(3 * C, C)
                      .astype(_MM_DTYPE),
            "br1": layer["res_b1"].reshape(1, C).astype(jnp.float32),
            "wr2": jnp.transpose(layer["res_w2"][:, :, 0], (1, 0)).astype(_MM_DTYPE),
            "br2": layer["res_b2"].reshape(1, C).astype(jnp.float32),
            "wup": wup.astype(_MM_DTYPE),
            "bup": jnp.concatenate([layer["conv2_b"], layer["conv2_b"]])
                      .reshape(1, 2 * C).astype(jnp.float32),
        })
    out_dim, emb_dim, _ = params["conv1_w"].shape
    cout_pad = ((out_dim + 127) // 128) * 128                   # lane-dense store
    wf = jnp.transpose(params["conv1_w"], (2, 1, 0)).reshape(3 * emb_dim, out_dim)
    prepped["conv1_w"] = jnp.pad(wf, ((0, 0), (0, cout_pad - out_dim))).astype(_MM_DTYPE)
    prepped["conv1_b"] = jnp.pad(params["conv1_b"],
                                 (0, cout_pad - out_dim)).reshape(1, cout_pad) \
                            .astype(jnp.float32)
    return prepped


# ----------------------------------------------------------------------------
# Parameter init (mirrors nn.init.kaiming_normal_ + zero bias)
# ----------------------------------------------------------------------------
def _kaiming_normal(key, cout, cin, k):
    std = (2.0 / (cin * k)) ** 0.5
    return jax.random.normal(key, (cout, cin, k), jnp.float32) * std


def init_decoder_params(key, L, out_dim, emb_dim):
    params = {"layers": []}
    for _ in range(L):
        key, k1, k2, k3, k4 = jax.random.split(key, 5)
        params["layers"].append({
            "conv_w": _kaiming_normal(k1, emb_dim, emb_dim, 3),
            "conv_b": jnp.zeros((emb_dim,), jnp.float32),
            "res_w1": _kaiming_normal(k2, emb_dim, emb_dim, 3),
            "res_b1": jnp.zeros((emb_dim,), jnp.float32),
            "res_w2": _kaiming_normal(k3, emb_dim, emb_dim, 1),
            "res_b2": jnp.zeros((emb_dim,), jnp.float32),
            "conv2_w": _kaiming_normal(k4, emb_dim, emb_dim, 3),
            "conv2_b": jnp.zeros((emb_dim,), jnp.float32),
        })
    key, kc = jax.random.split(key)
    params["conv1_w"] = _kaiming_normal(kc, out_dim, emb_dim, 3)
    params["conv1_b"] = jnp.zeros((out_dim,), jnp.float32)
    return params


# ----------------------------------------------------------------------------
# Decoder forward (Pallas): x (B, T_in, emb_dim) -> (B, T_in * 2**L, out_dim)
# ----------------------------------------------------------------------------
def decoder_forward(prepped, x, *, out_dim, activation_type="linear"):
    h = x
    for lw in prepped["layers"]:
        h = fused_layer(h, lw)                       # conv3 + resnet + up + conv3
    return final_conv(h, prepped["conv1_w"], prepped["conv1_b"],
                      out_dim=out_dim, activation=activation_type)


# ----------------------------------------------------------------------------
# Pure-JAX (XLA) reference, PyTorch-equivalent NCW math, for correctness check
# ----------------------------------------------------------------------------
def _ref_conv1d(x_ncw, w, b, pad):
    y = lax.conv_general_dilated(
        x_ncw, w, window_strides=(1,), padding=[(pad, pad)],
        dimension_numbers=("NCH", "OIH", "NCH"),
        precision=lax.Precision.HIGHEST)
    return y + b[None, :, None]


def decoder_forward_ref(params, x, activation_type="linear"):
    h = jnp.transpose(x, (0, 2, 1))                  # permute(0,2,1) -> NCW
    for layer in params["layers"]:
        h = _ref_conv1d(h, layer["conv_w"], layer["conv_b"], 1)
        r = jnp.maximum(h, 0.0)
        r = _ref_conv1d(r, layer["res_w1"], layer["res_b1"], 1)
        r = jnp.maximum(r, 0.0)
        r = _ref_conv1d(r, layer["res_w2"], layer["res_b2"], 0)
        h = h + r
        h = jnp.repeat(h, 2, axis=2)                 # nearest upsample x2
        h = _ref_conv1d(h, layer["conv2_w"], layer["conv2_b"], 1)
    out = _ref_conv1d(h, params["conv1_w"], params["conv1_b"], 1)
    if activation_type == "relu":
        out = jnp.maximum(out, 0.0)
    elif activation_type == "tanh":
        out = jnp.tanh(out)
    return jnp.transpose(out, (0, 2, 1))             # permute back -> (B, T, X)


# ----------------------------------------------------------------------------
if __name__ == "__main__":
    B, T_in, emb_dim, out_dim, L = 2, 8, 128, 64, 2

    key = jax.random.PRNGKey(0)
    key, kx, kp = jax.random.split(key, 3)
    x = jax.random.normal(kx, (B, T_in, emb_dim), jnp.float32)
    params = init_decoder_params(kp, L=L, out_dim=out_dim, emb_dim=emb_dim)
    prepped = prepare_params(params)                 # one-time weight prep

    fwd = jax.jit(decoder_forward, static_argnames=("out_dim", "activation_type"))
    out = fwd(prepped, x, out_dim=out_dim, activation_type="linear")
    out = jax.block_until_ready(out)

    ref = jax.block_until_ready(decoder_forward_ref(params, x, "linear"))
    assert out.shape == (B, T_in * (2 ** L), out_dim), out.shape
    # bf16 matmul operands / bf16 inter-layer activations: ~1e-2 expected error
    # vs the f32 XLA reference (the f32 variant of this kernel is < 1e-5).
    err = jnp.max(jnp.abs(out - ref)) / (jnp.max(jnp.abs(ref)) + 1e-6)
    assert err < 3e-2, f"mismatch vs reference: rel err {err}"

    print("KERNEL_OK")
</pallas_src>

<mosaic_0001>
module attributes {stable_mosaic.version = 11 : i64} {
  func.func @_layer_kernel(%arg0: i32, %arg1: i32, %arg2: memref<1x16x128xbf16, #tpu.memory_space<vmem>>, %arg3: memref<1x8x128xbf16, #tpu.memory_space<vmem>>, %arg4: memref<1x8x128xbf16, #tpu.memory_space<vmem>>, %arg5: memref<384x128xbf16, #tpu.memory_space<vmem>>, %arg6: memref<1x128xf32, #tpu.memory_space<vmem>>, %arg7: memref<384x128xbf16, #tpu.memory_space<vmem>>, %arg8: memref<1x128xf32, #tpu.memory_space<vmem>>, %arg9: memref<128x128xbf16, #tpu.memory_space<vmem>>, %arg10: memref<1x128xf32, #tpu.memory_space<vmem>>, %arg11: memref<384x256xbf16, #tpu.memory_space<vmem>>, %arg12: memref<1x256xf32, #tpu.memory_space<vmem>>, %arg13: memref<1x16x256xbf16, #tpu.memory_space<vmem>>) attributes {dimension_semantics = [#tpu.dimension_semantics<parallel>, #tpu.dimension_semantics<parallel>], iteration_bounds = array<i64: 2, 1>, scalar_prefetch = 0 : i64, scratch_operands = 0 : i64, tpu.core_type = #tpu.core_type<tc>, window_params = [{transform_indices = @transform_0, window_bounds = array<i64: 1, 16, 128>}, {transform_indices = @transform_1, window_bounds = array<i64: 1, 8, 128>}, {transform_indices = @transform_2, window_bounds = array<i64: 1, 8, 128>}, {pipeline_mode = #tpu.pipeline_mode<synchronous>, transform_indices = @transform_3, window_bounds = array<i64: 384, 128>}, {pipeline_mode = #tpu.pipeline_mode<synchronous>, transform_indices = @transform_4, window_bounds = array<i64: 1, 128>}, {pipeline_mode = #tpu.pipeline_mode<synchronous>, transform_indices = @transform_5, window_bounds = array<i64: 384, 128>}, {pipeline_mode = #tpu.pipeline_mode<synchronous>, transform_indices = @transform_6, window_bounds = array<i64: 1, 128>}, {pipeline_mode = #tpu.pipeline_mode<synchronous>, transform_indices = @transform_7, window_bounds = array<i64: 128, 128>}, {pipeline_mode = #tpu.pipeline_mode<synchronous>, transform_indices = @transform_8, window_bounds = array<i64: 1, 128>}, {pipeline_mode = #tpu.pipeline_mode<synchronous>, transform_indices = @transform_9, window_bounds = array<i64: 384, 256>}, {pipeline_mode = #tpu.pipeline_mode<synchronous>, transform_indices = @transform_10, window_bounds = array<i64: 1, 256>}, {transform_indices = @transform_11, window_bounds = array<i64: 1, 16, 256>}]} {
    %0 = tpu.iota {dimensions = array<i32: 0>} : vector<32x1xi32>
    %c8_i32 = arith.constant 8 : i32
    %1 = vector.broadcast %c8_i32 : i32 to vector<32x1xi32>
    %2 = arith.cmpi slt, %0, %1 : vector<32x1xi32>
    %c0_i32 = arith.constant 0 : i32
    %3 = arith.cmpi eq, %arg1, %c0_i32 : i32
    %4 = vector.broadcast %3 : i1 to vector<32x1xi1>
    %5 = arith.andi %2, %4 : vector<32x1xi1>
    %c24_i32 = arith.constant 24 : i32
    %6 = vector.broadcast %c24_i32 : i32 to vector<32x1xi32>
    %7 = arith.cmpi sge, %0, %6 : vector<32x1xi32>
    %c0_i32_0 = arith.constant 0 : i32
    %8 = arith.cmpi eq, %arg1, %c0_i32_0 : i32
    %9 = vector.broadcast %8 : i1 to vector<32x1xi1>
    %10 = arith.andi %7, %9 : vector<32x1xi1>
    %11 = arith.ori %5, %10 : vector<32x1xi1>
    %cst = arith.constant 0.000000e+00 : f32
    %cst_1 = arith.constant 1.000000e+00 : f32
    %12 = vector.broadcast %cst : f32 to vector<32x1xf32>
    %13 = vector.broadcast %cst_1 : f32 to vector<32x1xf32>
    %14 = arith.select %11, %12, %13 : vector<32x1xi1>, vector<32x1xf32>
    %c0_i32_2 = arith.constant 0 : i32
    %15 = vector.broadcast %c0_i32_2 : i32 to vector<32x1xi32>
    %16 = arith.cmpi sgt, %0, %15 : vector<32x1xi32>
    %c31_i32 = arith.constant 31 : i32
    %17 = vector.broadcast %c31_i32 : i32 to vector<32x1xi32>
    %18 = arith.cmpi slt, %0, %17 : vector<32x1xi32>
    %c0 = arith.constant 0 : index
    %c0_3 = arith.constant 0 : index
    %c0_4 = arith.constant 0 : index
    %19 = vector.load %arg3[%c0, %c0_3, %c0_4] : memref<1x8x128xbf16, #tpu.memory_space<vmem>>, vector<1x8x128xbf16>
    %20 = vector.shape_cast %19 : vector<1x8x128xbf16> to vector<8x128xbf16>
    %c0_5 = arith.constant 0 : index
    %c0_6 = arith.constant 0 : index
    %c0_7 = arith.constant 0 : index
    %21 = vector.load %arg2[%c0_5, %c0_6, %c0_7] : memref<1x16x128xbf16, #tpu.memory_space<vmem>>, vector<1x16x128xbf16>
    %22 = vector.shape_cast %21 : vector<1x16x128xbf16> to vector<16x128xbf16>
    %c0_8 = arith.constant 0 : index
    %c0_9 = arith.constant 0 : index
    %c0_10 = arith.constant 0 : index
    %23 = vector.load %arg4[%c0_8, %c0_9, %c0_10] : memref<1x8x128xbf16, #tpu.memory_space<vmem>>, vector<1x8x128xbf16>
    %24 = vector.shape_cast %23 : vector<1x8x128xbf16> to vector<8x128xbf16>
    %25 = tpu.concatenate %20, %22, %24 in 0 : vector<8x128xbf16>, vector<16x128xbf16>, vector<8x128xbf16> -> vector<32x128xbf16>
    %26 = arith.extf %25 : vector<32x128xbf16> to vector<32x128xf32>
    %27 = vector.broadcast %14 : vector<32x1xf32> to vector<32x128xf32>
    %28 = arith.mulf %26, %27 : vector<32x128xf32>
    %c0_11 = arith.constant 0 : index
    %c0_12 = arith.constant 0 : index
    %29 = vector.load %arg5[%c0_11, %c0_12] : memref<384x128xbf16, #tpu.memory_space<vmem>>, vector<384x128xbf16>
    %c0_13 = arith.constant 0 : index
    %c0_14 = arith.constant 0 : index
    %30 = vector.load %arg6[%c0_13, %c0_14] : memref<1x128xf32, #tpu.memory_space<vmem>>, vector<1x128xf32>
    %c1_i32 = arith.constant 1 : i32
    %31 = tpu.dynamic_rotate %28 by %c1_i32 dim 0 : vector<32x128xf32>, i32 -> vector<32x128xf32>
    %cst_15 = arith.constant 0.000000e+00 : f32
    %32 = vector.shape_cast %16 : vector<32x1xi1> to vector<32x1xi1>
    %33 = vector.broadcast %32 : vector<32x1xi1> to vector<32x128xi1>
    %34 = vector.broadcast %cst_15 : f32 to vector<32x128xf32>
    %35 = arith.select %33, %31, %34 : vector<32x128xi1>, vector<32x128xf32>
    %c31_i32_16 = arith.constant 31 : i32
    %36 = tpu.dynamic_rotate %28 by %c31_i32_16 dim 0 : vector<32x128xf32>, i32 -> vector<32x128xf32>
    %cst_17 = arith.constant 0.000000e+00 : f32
    %37 = vector.shape_cast %18 : vector<32x1xi1> to vector<32x1xi1>
    %38 = vector.broadcast %37 : vector<32x1xi1> to vector<32x128xi1>
    %39 = vector.broadcast %cst_17 : f32 to vector<32x128xf32>
    %40 = arith.select %38, %36, %39 : vector<32x128xi1>, vector<32x128xf32>
    %41 = tpu.concatenate %35, %28, %40 in 1 : vector<32x128xf32>, vector<32x128xf32>, vector<32x128xf32> -> vector<32x384xf32>
    %42 = arith.truncf %41 : vector<32x384xf32> to vector<32x384xbf16>
    %cst_18 = arith.constant dense<0.000000e+00> : vector<32x128xf32>
    %43 = tpu.matmul %42, %29, %cst_18 {dimension_numbers = #tpu.dot_dimension_numbers<[1], [0], [0], [1], [0, 0, 1, 1], [], []>} : vector<32x384xbf16>, vector<384x128xbf16>, vector<32x128xf32> -> vector<32x128xf32>
    %44 = vector.broadcast %30 : vector<1x128xf32> to vector<32x128xf32>
    %45 = arith.addf %43, %44 : vector<32x128xf32>
    %46 = vector.broadcast %14 : vector<32x1xf32> to vector<32x128xf32>
    %47 = arith.mulf %45, %46 : vector<32x128xf32>
    %cst_19 = arith.constant 0.000000e+00 : f32
    %48 = vector.broadcast %cst_19 : f32 to vector<32x128xf32>
    %49 = arith.maximumf %47, %48 : vector<32x128xf32>
    %c0_20 = arith.constant 0 : index
    %c0_21 = arith.constant 0 : index
    %50 = vector.load %arg7[%c0_20, %c0_21] : memref<384x128xbf16, #tpu.memory_space<vmem>>, vector<384x128xbf16>
    %c0_22 = arith.constant 0 : index
    %c0_23 = arith.constant 0 : index
    %51 = vector.load %arg8[%c0_22, %c0_23] : memref<1x128xf32, #tpu.memory_space<vmem>>, vector<1x128xf32>
    %c1_i32_24 = arith.constant 1 : i32
    %52 = tpu.dynamic_rotate %49 by %c1_i32_24 dim 0 : vector<32x128xf32>, i32 -> vector<32x128xf32>
    %cst_25 = arith.constant 0.000000e+00 : f32
    %53 = vector.shape_cast %16 : vector<32x1xi1> to vector<32x1xi1>
    %54 = vector.broadcast %53 : vector<32x1xi1> to vector<32x128xi1>
    %55 = vector.broadcast %cst_25 : f32 to vector<32x128xf32>
    %56 = arith.select %54, %52, %55 : vector<32x128xi1>, vector<32x128xf32>
    %c31_i32_26 = arith.constant 31 : i32
    %57 = tpu.dynamic_rotate %49 by %c31_i32_26 dim 0 : vector<32x128xf32>, i32 -> vector<32x128xf32>
    %cst_27 = arith.constant 0.000000e+00 : f32
    %58 = vector.shape_cast %18 : vector<32x1xi1> to vector<32x1xi1>
    %59 = vector.broadcast %58 : vector<32x1xi1> to vector<32x128xi1>
    %60 = vector.broadcast %cst_27 : f32 to vector<32x128xf32>
    %61 = arith.select %59, %57, %60 : vector<32x128xi1>, vector<32x128xf32>
    %62 = tpu.concatenate %56, %49, %61 in 1 : vector<32x128xf32>, vector<32x128xf32>, vector<32x128xf32> -> vector<32x384xf32>
    %63 = arith.truncf %62 : vector<32x384xf32> to vector<32x384xbf16>
    %cst_28 = arith.constant dense<0.000000e+00> : vector<32x128xf32>
    %64 = tpu.matmul %63, %50, %cst_28 {dimension_numbers = #tpu.dot_dimension_numbers<[1], [0], [0], [1], [0, 0, 1, 1], [], []>} : vector<32x384xbf16>, vector<384x128xbf16>, vector<32x128xf32> -> vector<32x128xf32>
    %65 = vector.broadcast %51 : vector<1x128xf32> to vector<32x128xf32>
    %66 = arith.addf %64, %65 : vector<32x128xf32>
    %cst_29 = arith.constant 0.000000e+00 : f32
    %67 = vector.broadcast %cst_29 : f32 to vector<32x128xf32>
    %68 = arith.maximumf %66, %67 : vector<32x128xf32>
    %69 = arith.truncf %68 : vector<32x128xf32> to vector<32x128xbf16>
    %c0_30 = arith.constant 0 : index
    %c0_31 = arith.constant 0 : index
    %70 = vector.load %arg9[%c0_30, %c0_31] : memref<128x128xbf16, #tpu.memory_space<vmem>>, vector<128x128xbf16>
    %cst_32 = arith.constant dense<0.000000e+00> : vector<32x128xf32>
    %71 = tpu.matmul %69, %70, %cst_32 {dimension_numbers = #tpu.dot_dimension_numbers<[1], [0], [0], [1], [0, 0, 1, 1], [], []>} : vector<32x128xbf16>, vector<128x128xbf16>, vector<32x128xf32> -> vector<32x128xf32>
    %c0_33 = arith.constant 0 : index
    %c0_34 = arith.constant 0 : index
    %72 = vector.load %arg10[%c0_33, %c0_34] : memref<1x128xf32, #tpu.memory_space<vmem>>, vector<1x128xf32>
    %73 = vector.broadcast %72 : vector<1x128xf32> to vector<32x128xf32>
    %74 = arith.addf %71, %73 : vector<32x128xf32>
    %75 = arith.addf %47, %74 : vector<32x128xf32>
    %76 = vector.broadcast %14 : vector<32x1xf32> to vector<32x128xf32>
    %77 = arith.mulf %75, %76 : vector<32x128xf32>
    %c0_35 = arith.constant 0 : index
    %c0_36 = arith.constant 0 : index
    %78 = vector.load %arg11[%c0_35, %c0_36] : memref<384x256xbf16, #tpu.memory_space<vmem>>, vector<384x256xbf16>
    %c0_37 = arith.constant 0 : index
    %c0_38 = arith.constant 0 : index
    %79 = vector.load %arg12[%c0_37, %c0_38] : memref<1x256xf32, #tpu.memory_space<vmem>>, vector<1x256xf32>
    %c1_i32_39 = arith.constant 1 : i32
    %80 = tpu.dynamic_rotate %77 by %c1_i32_39 dim 0 : vector<32x128xf32>, i32 -> vector<32x128xf32>
    %cst_40 = arith.constant 0.000000e+00 : f32
    %81 = vector.shape_cast %16 : vector<32x1xi1> to vector<32x1xi1>
    %82 = vector.broadcast %81 : vector<32x1xi1> to vector<32x128xi1>
    %83 = vector.broadcast %cst_40 : f32 to vector<32x128xf32>
    %84 = arith.select %82, %80, %83 : vector<32x128xi1>, vector<32x128xf32>
    %c31_i32_41 = arith.constant 31 : i32
    %85 = tpu.dynamic_rotate %77 by %c31_i32_41 dim 0 : vector<32x128xf32>, i32 -> vector<32x128xf32>
    %cst_42 = arith.constant 0.000000e+00 : f32
    %86 = vector.shape_cast %18 : vector<32x1xi1> to vector<32x1xi1>
    %87 = vector.broadcast %86 : vector<32x1xi1> to vector<32x128xi1>
    %88 = vector.broadcast %cst_42 : f32 to vector<32x128xf32>
    %89 = arith.select %87, %85, %88 : vector<32x128xi1>, vector<32x128xf32>
    %90 = tpu.concatenate %84, %77, %89 in 1 : vector<32x128xf32>, vector<32x128xf32>, vector<32x128xf32> -> vector<32x384xf32>
    %91 = arith.truncf %90 : vector<32x384xf32> to vector<32x384xbf16>
    %cst_43 = arith.constant dense<0.000000e+00> : vector<32x256xf32>
    %92 = tpu.matmul %91, %78, %cst_43 {dimension_numbers = #tpu.dot_dimension_numbers<[1], [0], [0], [1], [0, 0, 1, 1], [], []>} : vector<32x384xbf16>, vector<384x256xbf16>, vector<32x256xf32> -> vector<32x256xf32>
    %93 = vector.broadcast %79 : vector<1x256xf32> to vector<32x256xf32>
    %94 = arith.addf %92, %93 : vector<32x256xf32>
    %95 = vector.extract_strided_slice %94 {offsets = [8, 0], sizes = [16, 256], strides = [1, 1]} : vector<32x256xf32> to vector<16x256xf32>
    %96 = arith.truncf %95 : vector<16x256xf32> to vector<16x256xbf16>
    %c0_44 = arith.constant 0 : index
    %c0_45 = arith.constant 0 : index
    %c0_46 = arith.constant 0 : index
    %97 = vector.load %arg13[%c0_44, %c0_45, %c0_46] : memref<1x16x256xbf16, #tpu.memory_space<vmem>>, vector<1x16x256xbf16>
    %98 = vector.shape_cast %97 : vector<1x16x256xbf16> to vector<16x256xbf16>
    %99 = vector.shape_cast %96 : vector<16x256xbf16> to vector<1x16x256xbf16>
    tpu.vector_store %arg13[%c0_44, %c0_45, %c0_46], %99 {strides = array<i32>} : memref<1x16x256xbf16, #tpu.memory_space<vmem>>, vector<1x16x256xbf16>,
    return
  }
  func.func @transform_0(%arg0: i32, %arg1: i32) -> (i32, i32, i32) {
    %c0_i32 = arith.constant 0 : i32
    %c0_i32_0 = arith.constant 0 : i32
    return %arg0, %arg1, %c0_i32 : i32, i32, i32
  }
  func.func @transform_1(%arg0: i32, %arg1: i32) -> (i32, i32, i32) {
    %c2_i32 = arith.constant 2 : i32
    %0 = arith.muli %arg1, %c2_i32 : i32
    %c1_i32 = arith.constant 1 : i32
    %1 = arith.subi %0, %c1_i32 : i32
    %c0_i32 = arith.constant 0 : i32
    %2 = arith.maxsi %1, %c0_i32 : i32
    %c0_i32_0 = arith.constant 0 : i32
    %c0_i32_1 = arith.constant 0 : i32
    return %arg0, %2, %c0_i32_0 : i32, i32, i32
  }
  func.func @transform_2(%arg0: i32, %arg1: i32) -> (i32, i32, i32) {
    %c1_i32 = arith.constant 1 : i32
    %0 = arith.addi %arg1, %c1_i32 : i32
    %c2_i32 = arith.constant 2 : i32
    %1 = arith.muli %0, %c2_i32 : i32
    %c1_i32_0 = arith.constant 1 : i32
    %2 = arith.minsi %1, %c1_i32_0 : i32
    %c0_i32 = arith.constant 0 : i32
    %c0_i32_1 = arith.constant 0 : i32
    return %arg0, %2, %c0_i32 : i32, i32, i32
  }
  func.func @transform_3(%arg0: i32, %arg1: i32) -> (i32, i32) {
    %c0_i32 = arith.constant 0 : i32
    %c0_i32_0 = arith.constant 0 : i32
    %c0_i32_1 = arith.constant 0 : i32
    return %c0_i32, %c0_i32_0 : i32, i32
  }
  func.func @transform_4(%arg0: i32, %arg1: i32) -> (i32, i32) {
    %c0_i32 = arith.constant 0 : i32
    %c0_i32_0 = arith.constant 0 : i32
    %c0_i32_1 = arith.constant 0 : i32
    return %c0_i32, %c0_i32_0 : i32, i32
  }
  func.func @transform_5(%arg0: i32, %arg1: i32) -> (i32, i32) {
    %c0_i32 = arith.constant 0 : i32
    %c0_i32_0 = arith.constant 0 : i32
    %c0_i32_1 = arith.constant 0 : i32
    return %c0_i32, %c0_i32_0 : i32, i32
  }
  func.func @transform_6(%arg0: i32, %arg1: i32) -> (i32, i32) {
    %c0_i32 = arith.constant 0 : i32
    %c0_i32_0 = arith.constant 0 : i32
    %c0_i32_1 = arith.constant 0 : i32
    return %c0_i32, %c0_i32_0 : i32, i32
  }
  func.func @transform_7(%arg0: i32, %arg1: i32) -> (i32, i32) {
    %c0_i32 = arith.constant 0 : i32
    %c0_i32_0 = arith.constant 0 : i32
    %c0_i32_1 = arith.constant 0 : i32
    return %c0_i32, %c0_i32_0 : i32, i32
  }
  func.func @transform_8(%arg0: i32, %arg1: i32) -> (i32, i32) {
    %c0_i32 = arith.constant 0 : i32
    %c0_i32_0 = arith.constant 0 : i32
    %c0_i32_1 = arith.constant 0 : i32
    return %c0_i32, %c0_i32_0 : i32, i32
  }
  func.func @transform_9(%arg0: i32, %arg1: i32) -> (i32, i32) {
    %c0_i32 = arith.constant 0 : i32
    %c0_i32_0 = arith.constant 0 : i32
    %c0_i32_1 = arith.constant 0 : i32
    return %c0_i32, %c0_i32_0 : i32, i32
  }
  func.func @transform_10(%arg0: i32, %arg1: i32) -> (i32, i32) {
    %c0_i32 = arith.constant 0 : i32
    %c0_i32_0 = arith.constant 0 : i32
    %c0_i32_1 = arith.constant 0 : i32
    return %c0_i32, %c0_i32_0 : i32, i32
  }
  func.func @transform_11(%arg0: i32, %arg1: i32) -> (i32, i32, i32) {
    %c0_i32 = arith.constant 0 : i32
    %c0_i32_0 = arith.constant 0 : i32
    return %arg0, %arg1, %c0_i32 : i32, i32, i32
  }
}

module attributes {stable_mosaic.version = 11 : i64} {
  func.func @_layer_kernel(%arg0: i32, %arg1: i32, %arg2: memref<1x8x128xf32, #tpu.memory_space<vmem>>, %arg3: memref<1x8x128xf32, #tpu.memory_space<vmem>>, %arg4: memref<1x8x128xf32, #tpu.memory_space<vmem>>, %arg5: memref<384x128xbf16, #tpu.memory_space<vmem>>, %arg6: memref<1x128xf32, #tpu.memory_space<vmem>>, %arg7: memref<384x128xbf16, #tpu.memory_space<vmem>>, %arg8: memref<1x128xf32, #tpu.memory_space<vmem>>, %arg9: memref<128x128xbf16, #tpu.memory_space<vmem>>, %arg10: memref<1x128xf32, #tpu.memory_space<vmem>>, %arg11: memref<384x256xbf16, #tpu.memory_space<vmem>>, %arg12: memref<1x256xf32, #tpu.memory_space<vmem>>, %arg13: memref<1x8x256xbf16, #tpu.memory_space<vmem>>) attributes {dimension_semantics = [#tpu.dimension_semantics<parallel>, #tpu.dimension_semantics<parallel>], iteration_bounds = array<i64: 2, 1>, scalar_prefetch = 0 : i64, scratch_operands = 0 : i64, tpu.core_type = #tpu.core_type<tc>, window_params = [{transform_indices = @transform_0, window_bounds = array<i64: 1, 8, 128>}, {transform_indices = @transform_1, window_bounds = array<i64: 1, 8, 128>}, {transform_indices = @transform_2, window_bounds = array<i64: 1, 8, 128>}, {pipeline_mode = #tpu.pipeline_mode<synchronous>, transform_indices = @transform_3, window_bounds = array<i64: 384, 128>}, {pipeline_mode = #tpu.pipeline_mode<synchronous>, transform_indices = @transform_4, window_bounds = array<i64: 1, 128>}, {pipeline_mode = #tpu.pipeline_mode<synchronous>, transform_indices = @transform_5, window_bounds = array<i64: 384, 128>}, {pipeline_mode = #tpu.pipeline_mode<synchronous>, transform_indices = @transform_6, window_bounds = array<i64: 1, 128>}, {pipeline_mode = #tpu.pipeline_mode<synchronous>, transform_indices = @transform_7, window_bounds = array<i64: 128, 128>}, {pipeline_mode = #tpu.pipeline_mode<synchronous>, transform_indices = @transform_8, window_bounds = array<i64: 1, 128>}, {pipeline_mode = #tpu.pipeline_mode<synchronous>, transform_indices = @transform_9, window_bounds = array<i64: 384, 256>}, {pipeline_mode = #tpu.pipeline_mode<synchronous>, transform_indices = @transform_10, window_bounds = array<i64: 1, 256>}, {transform_indices = @transform_11, window_bounds = array<i64: 1, 8, 256>}]} {
    %0 = tpu.iota {dimensions = array<i32: 0>} : vector<24x1xi32>
    %c8_i32 = arith.constant 8 : i32
    %1 = vector.broadcast %c8_i32 : i32 to vector<24x1xi32>
    %2 = arith.cmpi slt, %0, %1 : vector<24x1xi32>
    %c0_i32 = arith.constant 0 : i32
    %3 = arith.cmpi eq, %arg1, %c0_i32 : i32
    %4 = vector.broadcast %3 : i1 to vector<24x1xi1>
    %5 = arith.andi %2, %4 : vector<24x1xi1>
    %c16_i32 = arith.constant 16 : i32
    %6 = vector.broadcast %c16_i32 : i32 to vector<24x1xi32>
    %7 = arith.cmpi sge, %0, %6 : vector<24x1xi32>
    %c0_i32_0 = arith.constant 0 : i32
    %8 = arith.cmpi eq, %arg1, %c0_i32_0 : i32
    %9 = vector.broadcast %8 : i1 to vector<24x1xi1>
    %10 = arith.andi %7, %9 : vector<24x1xi1>
    %11 = arith.ori %5, %10 : vector<24x1xi1>
    %cst = arith.constant 0.000000e+00 : f32
    %cst_1 = arith.constant 1.000000e+00 : f32
    %12 = vector.broadcast %cst : f32 to vector<24x1xf32>
    %13 = vector.broadcast %cst_1 : f32 to vector<24x1xf32>
    %14 = arith.select %11, %12, %13 : vector<24x1xi1>, vector<24x1xf32>
    %c0_i32_2 = arith.constant 0 : i32
    %15 = vector.broadcast %c0_i32_2 : i32 to vector<24x1xi32>
    %16 = arith.cmpi sgt, %0, %15 : vector<24x1xi32>
    %c23_i32 = arith.constant 23 : i32
    %17 = vector.broadcast %c23_i32 : i32 to vector<24x1xi32>
    %18 = arith.cmpi slt, %0, %17 : vector<24x1xi32>
    %c0 = arith.constant 0 : index
    %c0_3 = arith.constant 0 : index
    %c0_4 = arith.constant 0 : index
    %19 = vector.load %arg3[%c0, %c0_3, %c0_4] : memref<1x8x128xf32, #tpu.memory_space<vmem>>, vector<1x8x128xf32>
    %20 = vector.shape_cast %19 : vector<1x8x128xf32> to vector<8x128xf32>
    %c0_5 = arith.constant 0 : index
    %c0_6 = arith.constant 0 : index
    %c0_7 = arith.constant 0 : index
    %21 = vector.load %arg2[%c0_5, %c0_6, %c0_7] : memref<1x8x128xf32, #tpu.memory_space<vmem>>, vector<1x8x128xf32>
    %22 = vector.shape_cast %21 : vector<1x8x128xf32> to vector<8x128xf32>
    %c0_8 = arith.constant 0 : index
    %c0_9 = arith.constant 0 : index
    %c0_10 = arith.constant 0 : index
    %23 = vector.load %arg4[%c0_8, %c0_9, %c0_10] : memref<1x8x128xf32, #tpu.memory_space<vmem>>, vector<1x8x128xf32>
    %24 = vector.shape_cast %23 : vector<1x8x128xf32> to vector<8x128xf32>
    %25 = tpu.concatenate %20, %22, %24 in 0 : vector<8x128xf32>, vector<8x128xf32>, vector<8x128xf32> -> vector<24x128xf32>
    %26 = vector.broadcast %14 : vector<24x1xf32> to vector<24x128xf32>
    %27 = arith.mulf %25, %26 : vector<24x128xf32>
    %c0_11 = arith.constant 0 : index
    %c0_12 = arith.constant 0 : index
    %28 = vector.load %arg5[%c0_11, %c0_12] : memref<384x128xbf16, #tpu.memory_space<vmem>>, vector<384x128xbf16>
    %c0_13 = arith.constant 0 : index
    %c0_14 = arith.constant 0 : index
    %29 = vector.load %arg6[%c0_13, %c0_14] : memref<1x128xf32, #tpu.memory_space<vmem>>, vector<1x128xf32>
    %c1_i32 = arith.constant 1 : i32
    %30 = tpu.dynamic_rotate %27 by %c1_i32 dim 0 : vector<24x128xf32>, i32 -> vector<24x128xf32>
    %cst_15 = arith.constant 0.000000e+00 : f32
    %31 = vector.shape_cast %16 : vector<24x1xi1> to vector<24x1xi1>
    %32 = vector.broadcast %31 : vector<24x1xi1> to vector<24x128xi1>
    %33 = vector.broadcast %cst_15 : f32 to vector<24x128xf32>
    %34 = arith.select %32, %30, %33 : vector<24x128xi1>, vector<24x128xf32>
    %c23_i32_16 = arith.constant 23 : i32
    %35 = tpu.dynamic_rotate %27 by %c23_i32_16 dim 0 : vector<24x128xf32>, i32 -> vector<24x128xf32>
    %cst_17 = arith.constant 0.000000e+00 : f32
    %36 = vector.shape_cast %18 : vector<24x1xi1> to vector<24x1xi1>
    %37 = vector.broadcast %36 : vector<24x1xi1> to vector<24x128xi1>
    %38 = vector.broadcast %cst_17 : f32 to vector<24x128xf32>
    %39 = arith.select %37, %35, %38 : vector<24x128xi1>, vector<24x128xf32>
    %40 = tpu.concatenate %34, %27, %39 in 1 : vector<24x128xf32>, vector<24x128xf32>, vector<24x128xf32> -> vector<24x384xf32>
    %41 = arith.truncf %40 : vector<24x384xf32> to vector<24x384xbf16>
    %cst_18 = arith.constant dense<0.000000e+00> : vector<24x128xf32>
    %42 = tpu.matmul %41, %28, %cst_18 {dimension_numbers = #tpu.dot_dimension_numbers<[1], [0], [0], [1], [0, 0, 1, 1], [], []>} : vector<24x384xbf16>, vector<384x128xbf16>, vector<24x128xf32> -> vector<24x128xf32>
    %43 = vector.broadcast %29 : vector<1x128xf32> to vector<24x128xf32>
    %44 = arith.addf %42, %43 : vector<24x128xf32>
    %45 = vector.broadcast %14 : vector<24x1xf32> to vector<24x128xf32>
    %46 = arith.mulf %44, %45 : vector<24x128xf32>
    %cst_19 = arith.constant 0.000000e+00 : f32
    %47 = vector.broadcast %cst_19 : f32 to vector<24x128xf32>
    %48 = arith.maximumf %46, %47 : vector<24x128xf32>
    %c0_20 = arith.constant 0 : index
    %c0_21 = arith.constant 0 : index
    %49 = vector.load %arg7[%c0_20, %c0_21] : memref<384x128xbf16, #tpu.memory_space<vmem>>, vector<384x128xbf16>
    %c0_22 = arith.constant 0 : index
    %c0_23 = arith.constant 0 : index
    %50 = vector.load %arg8[%c0_22, %c0_23] : memref<1x128xf32, #tpu.memory_space<vmem>>, vector<1x128xf32>
    %c1_i32_24 = arith.constant 1 : i32
    %51 = tpu.dynamic_rotate %48 by %c1_i32_24 dim 0 : vector<24x128xf32>, i32 -> vector<24x128xf32>
    %cst_25 = arith.constant 0.000000e+00 : f32
    %52 = vector.shape_cast %16 : vector<24x1xi1> to vector<24x1xi1>
    %53 = vector.broadcast %52 : vector<24x1xi1> to vector<24x128xi1>
    %54 = vector.broadcast %cst_25 : f32 to vector<24x128xf32>
    %55 = arith.select %53, %51, %54 : vector<24x128xi1>, vector<24x128xf32>
    %c23_i32_26 = arith.constant 23 : i32
    %56 = tpu.dynamic_rotate %48 by %c23_i32_26 dim 0 : vector<24x128xf32>, i32 -> vector<24x128xf32>
    %cst_27 = arith.constant 0.000000e+00 : f32
    %57 = vector.shape_cast %18 : vector<24x1xi1> to vector<24x1xi1>
    %58 = vector.broadcast %57 : vector<24x1xi1> to vector<24x128xi1>
    %59 = vector.broadcast %cst_27 : f32 to vector<24x128xf32>
    %60 = arith.select %58, %56, %59 : vector<24x128xi1>, vector<24x128xf32>
    %61 = tpu.concatenate %55, %48, %60 in 1 : vector<24x128xf32>, vector<24x128xf32>, vector<24x128xf32> -> vector<24x384xf32>
    %62 = arith.truncf %61 : vector<24x384xf32> to vector<24x384xbf16>
    %cst_28 = arith.constant dense<0.000000e+00> : vector<24x128xf32>
    %63 = tpu.matmul %62, %49, %cst_28 {dimension_numbers = #tpu.dot_dimension_numbers<[1], [0], [0], [1], [0, 0, 1, 1], [], []>} : vector<24x384xbf16>, vector<384x128xbf16>, vector<24x128xf32> -> vector<24x128xf32>
    %64 = vector.broadcast %50 : vector<1x128xf32> to vector<24x128xf32>
    %65 = arith.addf %63, %64 : vector<24x128xf32>
    %cst_29 = arith.constant 0.000000e+00 : f32
    %66 = vector.broadcast %cst_29 : f32 to vector<24x128xf32>
    %67 = arith.maximumf %65, %66 : vector<24x128xf32>
    %68 = arith.truncf %67 : vector<24x128xf32> to vector<24x128xbf16>
    %c0_30 = arith.constant 0 : index
    %c0_31 = arith.constant 0 : index
    %69 = vector.load %arg9[%c0_30, %c0_31] : memref<128x128xbf16, #tpu.memory_space<vmem>>, vector<128x128xbf16>
    %cst_32 = arith.constant dense<0.000000e+00> : vector<24x128xf32>
    %70 = tpu.matmul %68, %69, %cst_32 {dimension_numbers = #tpu.dot_dimension_numbers<[1], [0], [0], [1], [0, 0, 1, 1], [], []>} : vector<24x128xbf16>, vector<128x128xbf16>, vector<24x128xf32> -> vector<24x128xf32>
    %c0_33 = arith.constant 0 : index
    %c0_34 = arith.constant 0 : index
    %71 = vector.load %arg10[%c0_33, %c0_34] : memref<1x128xf32, #tpu.memory_space<vmem>>, vector<1x128xf32>
    %72 = vector.broadcast %71 : vector<1x128xf32> to vector<24x128xf32>
    %73 = arith.addf %70, %72 : vector<24x128xf32>
    %74 = arith.addf %46, %73 : vector<24x128xf32>
    %75 = vector.broadcast %14 : vector<24x1xf32> to vector<24x128xf32>
    %76 = arith.mulf %74, %75 : vector<24x128xf32>
    %c0_35 = arith.constant 0 : index
    %c0_36 = arith.constant 0 : index
    %77 = vector.load %arg11[%c0_35, %c0_36] : memref<384x256xbf16, #tpu.memory_space<vmem>>, vector<384x256xbf16>
    %c0_37 = arith.constant 0 : index
    %c0_38 = arith.constant 0 : index
    %78 = vector.load %arg12[%c0_37, %c0_38] : memref<1x256xf32, #tpu.memory_space<vmem>>, vector<1x256xf32>
    %c1_i32_39 = arith.constant 1 : i32
    %79 = tpu.dynamic_rotate %76 by %c1_i32_39 dim 0 : vector<24x128xf32>, i32 -> vector<24x128xf32>
    %cst_40 = arith.constant 0.000000e+00 : f32
    %80 = vector.shape_cast %16 : vector<24x1xi1> to vector<24x1xi1>
    %81 = vector.broadcast %80 : vector<24x1xi1> to vector<24x128xi1>
    %82 = vector.broadcast %cst_40 : f32 to vector<24x128xf32>
    %83 = arith.select %81, %79, %82 : vector<24x128xi1>, vector<24x128xf32>
    %c23_i32_41 = arith.constant 23 : i32
    %84 = tpu.dynamic_rotate %76 by %c23_i32_41 dim 0 : vector<24x128xf32>, i32 -> vector<24x128xf32>
    %cst_42 = arith.constant 0.000000e+00 : f32
    %85 = vector.shape_cast %18 : vector<24x1xi1> to vector<24x1xi1>
    %86 = vector.broadcast %85 : vector<24x1xi1> to vector<24x128xi1>
    %87 = vector.broadcast %cst_42 : f32 to vector<24x128xf32>
    %88 = arith.select %86, %84, %87 : vector<24x128xi1>, vector<24x128xf32>
    %89 = tpu.concatenate %83, %76, %88 in 1 : vector<24x128xf32>, vector<24x128xf32>, vector<24x128xf32> -> vector<24x384xf32>
    %90 = arith.truncf %89 : vector<24x384xf32> to vector<24x384xbf16>
    %cst_43 = arith.constant dense<0.000000e+00> : vector<24x256xf32>
    %91 = tpu.matmul %90, %77, %cst_43 {dimension_numbers = #tpu.dot_dimension_numbers<[1], [0], [0], [1], [0, 0, 1, 1], [], []>} : vector<24x384xbf16>, vector<384x256xbf16>, vector<24x256xf32> -> vector<24x256xf32>
    %92 = vector.broadcast %78 : vector<1x256xf32> to vector<24x256xf32>
    %93 = arith.addf %91, %92 : vector<24x256xf32>
    %94 = vector.extract_strided_slice %93 {offsets = [8, 0], sizes = [8, 256], strides = [1, 1]} : vector<24x256xf32> to vector<8x256xf32>
    %95 = arith.truncf %94 : vector<8x256xf32> to vector<8x256xbf16>
    %c0_44 = arith.constant 0 : index
    %c0_45 = arith.constant 0 : index
    %c0_46 = arith.constant 0 : index
    %96 = vector.load %arg13[%c0_44, %c0_45, %c0_46] : memref<1x8x256xbf16, #tpu.memory_space<vmem>>, vector<1x8x256xbf16>
    %97 = vector.shape_cast %96 : vector<1x8x256xbf16> to vector<8x256xbf16>
    %98 = vector.shape_cast %95 : vector<8x256xbf16> to vector<1x8x256xbf16>
    tpu.vector_store %arg13[%c0_44, %c0_45, %c0_46], %98 {strides = array<i32>} : memref<1x8x256xbf16, #tpu.memory_space<vmem>>, vector<1x8x256xbf16>,
    return
  }
  func.func @transform_0(%arg0: i32, %arg1: i32) -> (i32, i32, i32) {
    %c0_i32 = arith.constant 0 : i32
    %c0_i32_0 = arith.constant 0 : i32
    return %arg0, %arg1, %c0_i32 : i32, i32, i32
  }
  func.func @transform_1(%arg0: i32, %arg1: i32) -> (i32, i32, i32) {
    %c1_i32 = arith.constant 1 : i32
    %0 = arith.muli %arg1, %c1_i32 : i32
    %c1_i32_0 = arith.constant 1 : i32
    %1 = arith.subi %0, %c1_i32_0 : i32
    %c0_i32 = arith.constant 0 : i32
    %2 = arith.maxsi %1, %c0_i32 : i32
    %c0_i32_1 = arith.constant 0 : i32
    %c0_i32_2 = arith.constant 0 : i32
    return %arg0, %2, %c0_i32_1 : i32, i32, i32
  }
  func.func @transform_2(%arg0: i32, %arg1: i32) -> (i32, i32, i32) {
    %c1_i32 = arith.constant 1 : i32
    %0 = arith.addi %arg1, %c1_i32 : i32
    %c1_i32_0 = arith.constant 1 : i32
    %1 = arith.muli %0, %c1_i32_0 : i32
    %c0_i32 = arith.constant 0 : i32
    %2 = arith.minsi %1, %c0_i32 : i32
    %c0_i32_1 = arith.constant 0 : i32
    %c0_i32_2 = arith.constant 0 : i32
    return %arg0, %2, %c0_i32_1 : i32, i32, i32
  }
  func.func @transform_3(%arg0: i32, %arg1: i32) -> (i32, i32) {
    %c0_i32 = arith.constant 0 : i32
    %c0_i32_0 = arith.constant 0 : i32
    %c0_i32_1 = arith.constant 0 : i32
    return %c0_i32, %c0_i32_0 : i32, i32
  }
  func.func @transform_4(%arg0: i32, %arg1: i32) -> (i32, i32) {
    %c0_i32 = arith.constant 0 : i32
    %c0_i32_0 = arith.constant 0 : i32
    %c0_i32_1 = arith.constant 0 : i32
    return %c0_i32, %c0_i32_0 : i32, i32
  }
  func.func @transform_5(%arg0: i32, %arg1: i32) -> (i32, i32) {
    %c0_i32 = arith.constant 0 : i32
    %c0_i32_0 = arith.constant 0 : i32
    %c0_i32_1 = arith.constant 0 : i32
    return %c0_i32, %c0_i32_0 : i32, i32
  }
  func.func @transform_6(%arg0: i32, %arg1: i32) -> (i32, i32) {
    %c0_i32 = arith.constant 0 : i32
    %c0_i32_0 = arith.constant 0 : i32
    %c0_i32_1 = arith.constant 0 : i32
    return %c0_i32, %c0_i32_0 : i32, i32
  }
  func.func @transform_7(%arg0: i32, %arg1: i32) -> (i32, i32) {
    %c0_i32 = arith.constant 0 : i32
    %c0_i32_0 = arith.constant 0 : i32
    %c0_i32_1 = arith.constant 0 : i32
    return %c0_i32, %c0_i32_0 : i32, i32
  }
  func.func @transform_8(%arg0: i32, %arg1: i32) -> (i32, i32) {
    %c0_i32 = arith.constant 0 : i32
    %c0_i32_0 = arith.constant 0 : i32
    %c0_i32_1 = arith.constant 0 : i32
    return %c0_i32, %c0_i32_0 : i32, i32
  }
  func.func @transform_9(%arg0: i32, %arg1: i32) -> (i32, i32) {
    %c0_i32 = arith.constant 0 : i32
    %c0_i32_0 = arith.constant 0 : i32
    %c0_i32_1 = arith.constant 0 : i32
    return %c0_i32, %c0_i32_0 : i32, i32
  }
  func.func @transform_10(%arg0: i32, %arg1: i32) -> (i32, i32) {
    %c0_i32 = arith.constant 0 : i32
    %c0_i32_0 = arith.constant 0 : i32
    %c0_i32_1 = arith.constant 0 : i32
    return %c0_i32, %c0_i32_0 : i32, i32
  }
  func.func @transform_11(%arg0: i32, %arg1: i32) -> (i32, i32, i32) {
    %c0_i32 = arith.constant 0 : i32
    %c0_i32_0 = arith.constant 0 : i32
    return %arg0, %arg1, %c0_i32 : i32, i32, i32
  }
}

module attributes {stable_mosaic.version = 11 : i64} {
  func.func @_final_conv_kernel(%arg0: i32, %arg1: i32, %arg2: memref<1x32x128xbf16, #tpu.memory_space<vmem>>, %arg3: memref<1x8x128xbf16, #tpu.memory_space<vmem>>, %arg4: memref<1x8x128xbf16, #tpu.memory_space<vmem>>, %arg5: memref<384x128xbf16, #tpu.memory_space<vmem>>, %arg6: memref<1x128xf32, #tpu.memory_space<vmem>>, %arg7: memref<1x32x128xf32, #tpu.memory_space<vmem>>) attributes {dimension_semantics = [#tpu.dimension_semantics<parallel>, #tpu.dimension_semantics<parallel>], iteration_bounds = array<i64: 2, 1>, scalar_prefetch = 0 : i64, scratch_operands = 0 : i64, tpu.core_type = #tpu.core_type<tc>, window_params = [{transform_indices = @transform_0, window_bounds = array<i64: 1, 32, 128>}, {transform_indices = @transform_1, window_bounds = array<i64: 1, 8, 128>}, {transform_indices = @transform_2, window_bounds = array<i64: 1, 8, 128>}, {pipeline_mode = #tpu.pipeline_mode<synchronous>, transform_indices = @transform_3, window_bounds = array<i64: 384, 128>}, {pipeline_mode = #tpu.pipeline_mode<synchronous>, transform_indices = @transform_4, window_bounds = array<i64: 1, 128>}, {transform_indices = @transform_5, window_bounds = array<i64: 1, 32, 128>}]} {
    %0 = tpu.iota {dimensions = array<i32: 0>} : vector<48x1xi32>
    %c8_i32 = arith.constant 8 : i32
    %1 = vector.broadcast %c8_i32 : i32 to vector<48x1xi32>
    %2 = arith.cmpi slt, %0, %1 : vector<48x1xi32>
    %c0_i32 = arith.constant 0 : i32
    %3 = arith.cmpi eq, %arg1, %c0_i32 : i32
    %4 = vector.broadcast %3 : i1 to vector<48x1xi1>
    %5 = arith.andi %2, %4 : vector<48x1xi1>
    %c40_i32 = arith.constant 40 : i32
    %6 = vector.broadcast %c40_i32 : i32 to vector<48x1xi32>
    %7 = arith.cmpi sge, %0, %6 : vector<48x1xi32>
    %c0_i32_0 = arith.constant 0 : i32
    %8 = arith.cmpi eq, %arg1, %c0_i32_0 : i32
    %9 = vector.broadcast %8 : i1 to vector<48x1xi1>
    %10 = arith.andi %7, %9 : vector<48x1xi1>
    %11 = arith.ori %5, %10 : vector<48x1xi1>
    %cst = arith.constant 0.000000e+00 : f32
    %cst_1 = arith.constant 1.000000e+00 : f32
    %12 = vector.broadcast %cst : f32 to vector<48x1xf32>
    %13 = vector.broadcast %cst_1 : f32 to vector<48x1xf32>
    %14 = arith.select %11, %12, %13 : vector<48x1xi1>, vector<48x1xf32>
    %c0_i32_2 = arith.constant 0 : i32
    %15 = vector.broadcast %c0_i32_2 : i32 to vector<48x1xi32>
    %16 = arith.cmpi sgt, %0, %15 : vector<48x1xi32>
    %c47_i32 = arith.constant 47 : i32
    %17 = vector.broadcast %c47_i32 : i32 to vector<48x1xi32>
    %18 = arith.cmpi slt, %0, %17 : vector<48x1xi32>
    %c0 = arith.constant 0 : index
    %c0_3 = arith.constant 0 : index
    %c0_4 = arith.constant 0 : index
    %19 = vector.load %arg3[%c0, %c0_3, %c0_4] : memref<1x8x128xbf16, #tpu.memory_space<vmem>>, vector<1x8x128xbf16>
    %20 = vector.shape_cast %19 : vector<1x8x128xbf16> to vector<8x128xbf16>
    %c0_5 = arith.constant 0 : index
    %c0_6 = arith.constant 0 : index
    %c0_7 = arith.constant 0 : index
    %21 = vector.load %arg2[%c0_5, %c0_6, %c0_7] : memref<1x32x128xbf16, #tpu.memory_space<vmem>>, vector<1x32x128xbf16>
    %22 = vector.shape_cast %21 : vector<1x32x128xbf16> to vector<32x128xbf16>
    %c0_8 = arith.constant 0 : index
    %c0_9 = arith.constant 0 : index
    %c0_10 = arith.constant 0 : index
    %23 = vector.load %arg4[%c0_8, %c0_9, %c0_10] : memref<1x8x128xbf16, #tpu.memory_space<vmem>>, vector<1x8x128xbf16>
    %24 = vector.shape_cast %23 : vector<1x8x128xbf16> to vector<8x128xbf16>
    %25 = tpu.concatenate %20, %22, %24 in 0 : vector<8x128xbf16>, vector<32x128xbf16>, vector<8x128xbf16> -> vector<48x128xbf16>
    %26 = arith.extf %25 : vector<48x128xbf16> to vector<48x128xf32>
    %27 = vector.broadcast %14 : vector<48x1xf32> to vector<48x128xf32>
    %28 = arith.mulf %26, %27 : vector<48x128xf32>
    %c0_11 = arith.constant 0 : index
    %c0_12 = arith.constant 0 : index
    %29 = vector.load %arg5[%c0_11, %c0_12] : memref<384x128xbf16, #tpu.memory_space<vmem>>, vector<384x128xbf16>
    %c0_13 = arith.constant 0 : index
    %c0_14 = arith.constant 0 : index
    %30 = vector.load %arg6[%c0_13, %c0_14] : memref<1x128xf32, #tpu.memory_space<vmem>>, vector<1x128xf32>
    %c1_i32 = arith.constant 1 : i32
    %31 = tpu.dynamic_rotate %28 by %c1_i32 dim 0 : vector<48x128xf32>, i32 -> vector<48x128xf32>
    %cst_15 = arith.constant 0.000000e+00 : f32
    %32 = vector.shape_cast %16 : vector<48x1xi1> to vector<48x1xi1>
    %33 = vector.broadcast %32 : vector<48x1xi1> to vector<48x128xi1>
    %34 = vector.broadcast %cst_15 : f32 to vector<48x128xf32>
    %35 = arith.select %33, %31, %34 : vector<48x128xi1>, vector<48x128xf32>
    %c47_i32_16 = arith.constant 47 : i32
    %36 = tpu.dynamic_rotate %28 by %c47_i32_16 dim 0 : vector<48x128xf32>, i32 -> vector<48x128xf32>
    %cst_17 = arith.constant 0.000000e+00 : f32
    %37 = vector.shape_cast %18 : vector<48x1xi1> to vector<48x1xi1>
    %38 = vector.broadcast %37 : vector<48x1xi1> to vector<48x128xi1>
    %39 = vector.broadcast %cst_17 : f32 to vector<48x128xf32>
    %40 = arith.select %38, %36, %39 : vector<48x128xi1>, vector<48x128xf32>
    %41 = tpu.concatenate %35, %28, %40 in 1 : vector<48x128xf32>, vector<48x128xf32>, vector<48x128xf32> -> vector<48x384xf32>
    %42 = arith.truncf %41 : vector<48x384xf32> to vector<48x384xbf16>
    %cst_18 = arith.constant dense<0.000000e+00> : vector<48x128xf32>
    %43 = tpu.matmul %42, %29, %cst_18 {dimension_numbers = #tpu.dot_dimension_numbers<[1], [0], [0], [1], [0, 0, 1, 1], [], []>} : vector<48x384xbf16>, vector<384x128xbf16>, vector<48x128xf32> -> vector<48x128xf32>
    %44 = vector.broadcast %30 : vector<1x128xf32> to vector<48x128xf32>
    %45 = arith.addf %43, %44 : vector<48x128xf32>
    %46 = vector.extract_strided_slice %45 {offsets = [8, 0], sizes = [32, 128], strides = [1, 1]} : vector<48x128xf32> to vector<32x128xf32>
    %c0_19 = arith.constant 0 : index
    %c0_20 = arith.constant 0 : index
    %c0_21 = arith.constant 0 : index
    %47 = vector.load %arg7[%c0_19, %c0_20, %c0_21] : memref<1x32x128xf32, #tpu.memory_space<vmem>>, vector<1x32x128xf32>
    %48 = vector.shape_cast %47 : vector<1x32x128xf32> to vector<32x128xf32>
    %49 = vector.shape_cast %46 : vector<32x128xf32> to vector<1x32x128xf32>
    tpu.vector_store %arg7[%c0_19, %c0_20, %c0_21], %49 {strides = array<i32>} : memref<1x32x128xf32, #tpu.memory_space<vmem>>, vector<1x32x128xf32>,
    return
  }
  func.func @transform_0(%arg0: i32, %arg1: i32) -> (i32, i32, i32) {
    %c0_i32 = arith.constant 0 : i32
    %c0_i32_0 = arith.constant 0 : i32
    return %arg0, %arg1, %c0_i32 : i32, i32, i32
  }
  func.func @transform_1(%arg0: i32, %arg1: i32) -> (i32, i32, i32) {
    %c4_i32 = arith.constant 4 : i32
    %0 = arith.muli %arg1, %c4_i32 : i32
    %c1_i32 = arith.constant 1 : i32
    %1 = arith.subi %0, %c1_i32 : i32
    %c0_i32 = arith.constant 0 : i32
    %2 = arith.maxsi %1, %c0_i32 : i32
    %c0_i32_0 = arith.constant 0 : i32
    %c0_i32_1 = arith.constant 0 : i32
    return %arg0, %2, %c0_i32_0 : i32, i32, i32
  }
  func.func @transform_2(%arg0: i32, %arg1: i32) -> (i32, i32, i32) {
    %c1_i32 = arith.constant 1 : i32
    %0 = arith.addi %arg1, %c1_i32 : i32
    %c4_i32 = arith.constant 4 : i32
    %1 = arith.muli %0, %c4_i32 : i32
    %c3_i32 = arith.constant 3 : i32
    %2 = arith.minsi %1, %c3_i32 : i32
    %c0_i32 = arith.constant 0 : i32
    %c0_i32_0 = arith.constant 0 : i32
    return %arg0, %2, %c0_i32 : i32, i32, i32
  }
  func.func @transform_3(%arg0: i32, %arg1: i32) -> (i32, i32) {
    %c0_i32 = arith.constant 0 : i32
    %c0_i32_0 = arith.constant 0 : i32
    %c0_i32_1 = arith.constant 0 : i32
    return %c0_i32, %c0_i32_0 : i32, i32
  }
  func.func @transform_4(%arg0: i32, %arg1: i32) -> (i32, i32) {
    %c0_i32 = arith.constant 0 : i32
    %c0_i32_0 = arith.constant 0 : i32
    %c0_i32_1 = arith.constant 0 : i32
    return %c0_i32, %c0_i32_0 : i32, i32
  }
  func.func @transform_5(%arg0: i32, %arg1: i32) -> (i32, i32, i32) {
    %c0_i32 = arith.constant 0 : i32
    %c0_i32_0 = arith.constant 0 : i32
    return %arg0, %arg1, %c0_i32 : i32, i32, i32
  }
}

</mosaic_0001>

<llo_original>
// kernel: decoder_forward.5
$region0: #{decoder_forward.5}
  #allocation0 [shape = 'u32[]', space=smem, size = 0x4, offset = 0x4, fixed_abs, tag = 'smem constant byte address 0x4 - core index']
  #allocation1 [shape = 'u32[144,128]{1,0:T(1,128)}', space=vmem, size = 0x12000, scoped, tag = 'internal scratch']
  %s0 = inlined_call_operand.vmem [shape: bf16[2,32,128], index: 0, kind: input, shape index: {}, may-alias: {0,1,2}]
  %s1 = inlined_call_operand.vmem [shape: bf16[2,32,128], index: 1, kind: input, shape index: {}, may-alias: {0,1,2}]
  %s2 = inlined_call_operand.vmem [shape: bf16[2,32,128], index: 2, kind: input, shape index: {}, may-alias: {0,1,2}]
  %s3 = inlined_call_operand.vmem [shape: bf16[384,128], index: 3, kind: input, shape index: {}]
  %s4 = inlined_call_operand.vmem [shape: f32[1,128], index: 4, kind: input, shape index: {}]
  %s5 = inlined_call_operand.hbm [shape: f32[2,32,128], index: 5, kind: output, shape index: {}]
  %s6 = sld [smem:[#allocation0]]
  $region53: #{decoder_forward.5} parent=0
    _
  %s8 = ssub.s32 1, %s6
  %s9 = scalar_select 0, %s8, %s6
  $region1: #{decoder_forward.5} parent=0
    #allocation2 [shape = 'u8[32768]{0}', space=vmem, size = 0x8000, scoped, tag = 'output window, operand 0']
    #allocation3 [shape = 's32[2]{0}', space=sflag, size = 0x8, scoped, tag = 'scoped memory for decoder_forward.5']
    %10 = vsyncpa [#allocation3], 0
    %s11 = scalar_lea.sflag [#allocation3], 1
    %12 = vsyncpa %s11, 0
    loop: start=0, step=1, limit=4
    $region2: #{decoder_forward.5} parent=1 // loop_pre_header
      _
    $region3: #{decoder_forward.5} parent=1 // loop_header
      %s14 = sphi 0, %s18
      %p15 = scmp.ge.s32.totalorder %s14, 4
      %s21 = sphi 0, %s33
      %s22 = sphi 0, %s29
      %s23 = sphi 0, %s21
      %s24 = sphi 0, %s22
      %s25 = sphi 0, %s23
      %s26 = sphi 0, %s24
      %s38 = sphi 0, %s40
      %s41 = sphi 0, %s38
      %s42 = sphi 0, %s41
      %s58 = sphi 0, %s42
      %s74 = sphi 0, %s76
      %s77 = sphi 0, %s74
      %s78 = sphi 0, %s77
      %s94 = sphi 0, %s78
      %s110 = sphi 0, %s112
      %s113 = sphi 0, %s110
      %s114 = sphi 0, %s113
      %s130 = sphi 0, %s114
      %s134 = sphi 0, %s134
      %s136 = sphi 0, %s134
      %s137 = sphi 0, %s136
      %s151 = sphi 0, %s137
      %s155 = sphi 0, %s155
      %s157 = sphi 0, %s155
      %s158 = sphi 0, %s157
      %s172 = sphi 0, %s158
      %s180 = sphi 0, %s182
      %s183 = sphi 0, %s180
      %s184 = sphi 0, %s183
      %s200 = sphi 0, %s184
    $region4: #{decoder_forward.5} parent=1 // loop_header_branch
      %17 = sbr.rel (%p15) target = $region8
    $region5: #{decoder_forward.5} parent=1 // loop_body
      %s19 = ssub.s32 %s14, 1
      %s20 = ssub.s32 %s14, 2
      %s27 = sadd.s32 1, %s22
      %p28 = scmp.ge.s32.totalorder %s27, 1
      %s29 = scalar_select %p28, 0, %s27
      %s30 = sadd.s32 1, %s21
      %s31 = scalar_select %p28, %s30, %s21
      %p32 = scmp.ge.s32.totalorder %s31, 2
      %s33 = scalar_select %p32, 0, %s31
      %s34 = ssub.s32 %s21, %s33
      %s35 = ssub.s32 %s22, %s29
      %s36 = sor.u32 %s34, %s35
      %p37 = scmp.eq.s32.totalorder %s36, 0
      %s39 = sadd.s32 %s38, 1
      %s40 = scalar_select %p37, %s38, %s39
      %p43 = pneg %p37
      %p44 = scmp.eq.s32.totalorder %s14, 1
      %p45 = por %p43, %p44
      %p46 = scmp.ne.s32.totalorder %s38, %s41
      %p47 = scmp.eq.s32.totalorder %s14, 0
      %p48 = por %p46, %p47
      %p49 = scmp.ne.s32.totalorder %s38, %s41
      %p50 = scmp.eq.s32.totalorder %s19, 1
      %p51 = por %p49, %p50
      %p52 = scmp.ne.s32.totalorder %s41, %s42
      %p53 = scmp.eq.s32.totalorder %s19, 0
      %p54 = por %p52, %p53
      %p55 = scmp.ne.s32.totalorder %s41, %s42
      %p56 = scmp.eq.s32.totalorder %s20, 1
      %p57 = por %p55, %p56
      %p59 = scmp.ne.s32.totalorder %s42, %s58
      %p60 = scmp.eq.s32.totalorder %s20, 0
      %p61 = por %p59, %p60
      %s62 = smul.u32 %s22, 4
      %s63 = ssub.s32 %s62, 1
      %p64 = scmp.gt.s32.totalorder %s63, 0
      %s65 = scalar_select %p64, %s63, 0
      %s66 = smul.u32 %s29, 4
      %s67 = ssub.s32 %s66, 1
      %p68 = scmp.gt.s32.totalorder %s67, 0
      %s69 = scalar_select %p68, %s67, 0
      %s70 = ssub.s32 %s21, %s33
      %s71 = ssub.s32 %s65, %s69
      %s72 = sor.u32 %s70, %s71
      %p73 = scmp.eq.s32.totalorder %s72, 0
      %s75 = sadd.s32 %s74, 1
      %s76 = scalar_select %p73, %s74, %s75
      %p79 = pneg %p73
      %p80 = scmp.eq.s32.totalorder %s14, 1
      %p81 = por %p79, %p80
      %p82 = scmp.ne.s32.totalorder %s74, %s77
      %p83 = scmp.eq.s32.totalorder %s14, 0
      %p84 = por %p82, %p83
      %p85 = scmp.ne.s32.totalorder %s74, %s77
      %p86 = scmp.eq.s32.totalorder %s19, 1
      %p87 = por %p85, %p86
      %p88 = scmp.ne.s32.totalorder %s77, %s78
      %p89 = scmp.eq.s32.totalorder %s19, 0
      %p90 = por %p88, %p89
      %p91 = scmp.ne.s32.totalorder %s77, %s78
      %p92 = scmp.eq.s32.totalorder %s20, 1
      %p93 = por %p91, %p92
      %p95 = scmp.ne.s32.totalorder %s78, %s94
      %p96 = scmp.eq.s32.totalorder %s20, 0
      %p97 = por %p95, %p96
      %s98 = sadd.s32 %s22, 1
      %s99 = smul.u32 %s98, 4
      %p100 = scmp.lt.s32.totalorder %s99, 3
      %s101 = scalar_select %p100, %s99, 3
      %s102 = sadd.s32 %s29, 1
      %s103 = smul.u32 %s102, 4
      %p104 = scmp.lt.s32.totalorder %s103, 3
      %s105 = scalar_select %p104, %s103, 3
      %s106 = ssub.s32 %s21, %s33
      %s107 = ssub.s32 %s101, %s105
      %s108 = sor.u32 %s106, %s107
      %p109 = scmp.eq.s32.totalorder %s108, 0
      %s111 = sadd.s32 %s110, 1
      %s112 = scalar_select %p109, %s110, %s111
      %p115 = pneg %p109
      %p116 = scmp.eq.s32.totalorder %s14, 1
      %p117 = por %p115, %p116
      %p118 = scmp.ne.s32.totalorder %s110, %s113
      %p119 = scmp.eq.s32.totalorder %s14, 0
      %p120 = por %p118, %p119
      %p121 = scmp.ne.s32.totalorder %s110, %s113
      %p122 = scmp.eq.s32.totalorder %s19, 1
      %p123 = por %p121, %p122
      %p124 = scmp.ne.s32.totalorder %s113, %s114
      %p125 = scmp.eq.s32.totalorder %s19, 0
      %p126 = por %p124, %p125
      %p127 = scmp.ne.s32.totalorder %s113, %s114
      %p128 = scmp.eq.s32.totalorder %s20, 1
      %p129 = por %p127, %p128
      %p131 = scmp.ne.s32.totalorder %s114, %s130
      %p132 = scmp.eq.s32.totalorder %s20, 0
      %p133 = por %p131, %p132
      %s135 = sadd.s32 %s134, 1
      %p138 = scmp.eq.s32.totalorder %s14, 1
      %p139 = scmp.ne.s32.totalorder %s134, %s136
      %p140 = scmp.eq.s32.totalorder %s14, 0
      %p141 = por %p139, %p140
      %p142 = scmp.ne.s32.totalorder %s134, %s136
      %p143 = scmp.eq.s32.totalorder %s19, 1
      %p144 = por %p142, %p143
      %p145 = scmp.ne.s32.totalorder %s136, %s137
      %p146 = scmp.eq.s32.totalorder %s19, 0
      %p147 = por %p145, %p146
      %p148 = scmp.ne.s32.totalorder %s136, %s137
      %p149 = scmp.eq.s32.totalorder %s20, 1
      %p150 = por %p148, %p149
      %p152 = scmp.ne.s32.totalorder %s137, %s151
      %p153 = scmp.eq.s32.totalorder %s20, 0
      %p154 = por %p152, %p153
      %s156 = sadd.s32 %s155, 1
      %p159 = scmp.eq.s32.totalorder %s14, 1
      %p160 = scmp.ne.s32.totalorder %s155, %s157
      %p161 = scmp.eq.s32.totalorder %s14, 0
      %p162 = por %p160, %p161
      %p163 = scmp.ne.s32.totalorder %s155, %s157
      %p164 = scmp.eq.s32.totalorder %s19, 1
      %p165 = por %p163, %p164
      %p166 = scmp.ne.s32.totalorder %s157, %s158
      %p167 = scmp.eq.s32.totalorder %s19, 0
      %p168 = por %p166, %p167
      %p169 = scmp.ne.s32.totalorder %s157, %s158
      %p170 = scmp.eq.s32.totalorder %s20, 1
      %p171 = por %p169, %p170
      %p173 = scmp.ne.s32.totalorder %s158, %s172
      %p174 = scmp.eq.s32.totalorder %s20, 0
      %p175 = por %p173, %p174
      %s176 = ssub.s32 %s21, %s33
      %s177 = ssub.s32 %s22, %s29
      %s178 = sor.u32 %s176, %s177
      %p179 = scmp.eq.s32.totalorder %s178, 0
      %s181 = sadd.s32 %s180, 1
      %s182 = scalar_select %p179, %s180, %s181
      %p185 = pneg %p179
      %p186 = scmp.eq.s32.totalorder %s14, 1
      %p187 = por %p185, %p186
      %p188 = scmp.ne.s32.totalorder %s180, %s183
      %p189 = scmp.eq.s32.totalorder %s14, 0
      %p190 = por %p188, %p189
      %p191 = scmp.ne.s32.totalorder %s180, %s183
      %p192 = scmp.eq.s32.totalorder %s19, 1
      %p193 = por %p191, %p192
      %p194 = scmp.ne.s32.totalorder %s183, %s184
      %p195 = scmp.eq.s32.totalorder %s19, 0
      %p196 = por %p194, %p195
      %p197 = scmp.ne.s32.totalorder %s183, %s184
      %p198 = scmp.eq.s32.totalorder %s20, 1
      %p199 = por %p197, %p198
      %p201 = scmp.ne.s32.totalorder %s184, %s200
      %p202 = scmp.eq.s32.totalorder %s20, 0
      %p203 = por %p201, %p202
      %p204 = scmp.le.s32.totalorder 1, %s14
      %p205 = scmp.lt.s32.totalorder %s14, 3
      %p206 = pnand %p204, %p205
      %p207 = pneg %p206
      // Predicated region
      $region9: #{decoder_forward.5} parent=5 // pred_check
        _
      $region10: #{decoder_forward.5} parent=5 // pred_check_branch
        %209 = sbr.rel (%p206) target = $region12
      $region11: #{decoder_forward.5} parent=5 // pred_region
        %s210 = ssub.s32 %s14, 1
        // Predicated region
        $region13: #{decoder_forward.5} parent=11 // pred_check
          %p211 = pneg %p147
        $region14: #{decoder_forward.5} parent=11 // pred_check_branch
          %213 = sbr.rel (%p211) target = $region16
        $region15: #{decoder_forward.5} parent=11 // pred_region
          _
        $region16: #{decoder_forward.5} parent=11 // pred_fallthru
          _
        // Predicated region
        $region17: #{decoder_forward.5} parent=11 // pred_check
          %p214 = pneg %p168
        $region18: #{decoder_forward.5} parent=11 // pred_check_branch
          %216 = sbr.rel (%p214) target = $region20
        $region19: #{decoder_forward.5} parent=11 // pred_region
          _
        $region20: #{decoder_forward.5} parent=11 // pred_fallthru
          _
      $region12: #{decoder_forward.5} parent=5 // pred_fallthru
        _
      %p217 = scmp.lt.s32.totalorder %s14, 2
      // Predicated region
      $region21: #{decoder_forward.5} parent=5 // pred_check
        %p218 = pneg %p217
      $region22: #{decoder_forward.5} parent=5 // pred_check_branch
        %220 = sbr.rel (%p218) target = $region24
      $region23: #{decoder_forward.5} parent=5 // pred_region
        // Predicated region
        $region25: #{decoder_forward.5} parent=23 // pred_check
          %p221 = pneg %p48
        $region26: #{decoder_forward.5} parent=23 // pred_check_branch
          %223 = sbr.rel (%p221) target = $region28
        $region27: #{decoder_forward.5} parent=23 // pred_region
          %s224 = smul.u32 4, %s22
          %p225 = scmp.lt.s32.totalorder %s21, 1
          %s226 = scalar_select %p225, %s21, 1
          %p227 = scmp.lt.s32.totalorder %s224, 3
          %s228 = scalar_select %p227, %s224, 3
          %s229 = smul.addr %s226, 4
          %s230 = sadd.s32 %s228, %s229
          %s231 = smul.addr %s230, 4
          %s232 = scalar_lea.vmem %s0, %s231
          %s233 = smul.u32 4, %s22
        $region28: #{decoder_forward.5} parent=23 // pred_fallthru
          _
        // Predicated region
        $region29: #{decoder_forward.5} parent=23 // pred_check
          %p234 = pneg %p84
        $region30: #{decoder_forward.5} parent=23 // pred_check_branch
          %236 = sbr.rel (%p234) target = $region32
        $region31: #{decoder_forward.5} parent=23 // pred_region
          %s237 = smul.u32 %s22, 4
          %s238 = ssub.s32 %s237, 1
          %p239 = scmp.gt.s32.totalorder %s238, 0
          %s240 = scalar_select %p239, %s238, 0
          %p241 = scmp.lt.s32.totalorder %s21, 1
          %s242 = scalar_select %p241, %s21, 1
          %p243 = scmp.lt.s32.totalorder %s240, 3
          %s244 = scalar_select %p243, %s240, 3
          %s245 = smul.addr %s242, 4
          %s246 = sadd.s32 %s244, %s245
          %s247 = smul.addr %s246, 4
          %s248 = scalar_lea.vmem %s1, %s247
          %s249 = smul.u32 %s22, 4
          %s250 = ssub.s32 %s249, 1
          %p251 = scmp.gt.s32.totalorder %s250, 0
          %s252 = scalar_select %p251, %s250, 0
        $region32: #{decoder_forward.5} parent=23 // pred_fallthru
          _
        // Predicated region
        $region33: #{decoder_forward.5} parent=23 // pred_check
          %p253 = pneg %p120
        $region34: #{decoder_forward.5} parent=23 // pred_check_branch
          %255 = sbr.rel (%p253) target = $region36
        $region35: #{decoder_forward.5} parent=23 // pred_region
          %s256 = sadd.s32 %s22, 1
          %s257 = smul.u32 %s256, 4
          %p258 = scmp.lt.s32.totalorder %s257, 3
          %s259 = scalar_select %p258, %s257, 3
          %p260 = scmp.lt.s32.totalorder %s21, 1
          %s261 = scalar_select %p260, %s21, 1
          %p262 = scmp.lt.s32.totalorder %s259, 3
          %s263 = scalar_select %p262, %s259, 3
          %s264 = smul.addr %s261, 4
          %s265 = sadd.s32 %s263, %s264
          %s266 = smul.addr %s265, 4
          %s267 = scalar_lea.vmem %s2, %s266
          %s268 = sadd.s32 %s22, 1
          %s269 = smul.u32 %s268, 4
          %p270 = scmp.lt.s32.totalorder %s269, 3
          %s271 = scalar_select %p270, %s269, 3
        $region36: #{decoder_forward.5} parent=23 // pred_fallthru
          _
      $region24: #{decoder_forward.5} parent=5 // pred_fallthru
        _
      %p272 = scmp.le.s32.totalorder 1, %s14
      %p273 = scmp.lt.s32.totalorder %s14, 3
      %p274 = pnand %p272, %p273
      %p275 = pneg %p274
      // Predicated region
      $region37: #{decoder_forward.5} parent=5 // pred_check
        _
      $region38: #{decoder_forward.5} parent=5 // pred_check_branch
        %277 = sbr.rel (%p274) target = $region40
      $region39: #{decoder_forward.5} parent=5 // pred_region
        %s278 = ssub.s32 %s14, 1
        %s279 = smul.u32 4, %s24
        %p280 = scmp.lt.s32.totalorder %s23, 1
        %s281 = scalar_select %p280, %s23, 1
        %p282 = scmp.lt.s32.totalorder %s279, 3
        %s283 = scalar_select %p282, %s279, 3
        %s284 = smul.addr %s281, 4
        %s285 = sadd.s32 %s283, %s284
        %s286 = smul.addr %s285, 4
        %s287 = scalar_lea.vmem %s0, %s286
        %p288 = pneg %p54
        %p289 = pneg %p51
        %s290 = smul.u32 %s24, 4
        %s291 = ssub.s32 %s290, 1
        %p292 = scmp.gt.s32.totalorder %s291, 0
        %s293 = scalar_select %p292, %s291, 0
        %p294 = scmp.lt.s32.totalorder %s23, 1
        %s295 = scalar_select %p294, %s23, 1
        %p296 = scmp.lt.s32.totalorder %s293, 3
        %s297 = scalar_select %p296, %s293, 3
        %s298 = smul.addr %s295, 4
        %s299 = sadd.s32 %s297, %s298
        %s300 = smul.addr %s299, 4
        %s301 = scalar_lea.vmem %s1, %s300
        %p302 = pneg %p90
        %p303 = pneg %p87
        %s304 = sadd.s32 %s24, 1
        %s305 = smul.u32 %s304, 4
        %p306 = scmp.lt.s32.totalorder %s305, 3
        %s307 = scalar_select %p306, %s305, 3
        %p308 = scmp.lt.s32.totalorder %s23, 1
        %s309 = scalar_select %p308, %s23, 1
        %p310 = scmp.lt.s32.totalorder %s307, 3
        %s311 = scalar_select %p310, %s307, 3
        %s312 = smul.addr %s309, 4
        %s313 = sadd.s32 %s311, %s312
        %s314 = smul.addr %s313, 4
        %s315 = scalar_lea.vmem %s2, %s314
        %p316 = pneg %p126
        %p317 = pneg %p123
        %p318 = pneg %p147
        %p319 = pneg %p144
        %p320 = pneg %p168
        %p321 = pneg %p165
        %p322 = pneg %p196
        %p323 = pneg %p193
        %s324 = sand.u32 %s183, 1
        %s325 = scalar_lea.sflag [#allocation3], %s324
        %s326 = sand.u32 %s183, 1
        %s327 = smul.addr %s326, 32
        %s328 = scalar_lea.vmem [#allocation2], %s327
        %s329 = smul.u32 4, %s24
        %p330 = scmp.lt.s32.totalorder %s23, 1
        %s331 = scalar_select %p330, %s23, 1
        %p332 = scmp.lt.s32.totalorder %s329, 3
        %s333 = scalar_select %p332, %s329, 3
        %s334 = smul.addr %s331, 4
        %s335 = sadd.s32 %s333, %s334
        %s336 = smul.addr %s335, 4
        %s337 = scalar_lea.vmem %s0, %s336
        %s338 = smul.u32 4, %s24
        %s339 = smul.u32 %s24, 4
        %s340 = ssub.s32 %s339, 1
        %p341 = scmp.gt.s32.totalorder %s340, 0
        %s342 = scalar_select %p341, %s340, 0
        %p343 = scmp.lt.s32.totalorder %s23, 1
        %s344 = scalar_select %p343, %s23, 1
        %p345 = scmp.lt.s32.totalorder %s342, 3
        %s346 = scalar_select %p345, %s342, 3
        %s347 = smul.addr %s344, 4
        %s348 = sadd.s32 %s346, %s347
        %s349 = smul.addr %s348, 4
        %s350 = scalar_lea.vmem %s1, %s349
        %s351 = smul.u32 %s24, 4
        %s352 = ssub.s32 %s351, 1
        %p353 = scmp.gt.s32.totalorder %s352, 0
        %s354 = scalar_select %p353, %s352, 0
        %s355 = sadd.s32 %s24, 1
        %s356 = smul.u32 %s355, 4
        %p357 = scmp.lt.s32.totalorder %s356, 3
        %s358 = scalar_select %p357, %s356, 3
        %p359 = scmp.lt.s32.totalorder %s23, 1
        %s360 = scalar_select %p359, %s23, 1
        %p361 = scmp.lt.s32.totalorder %s358, 3
        %s362 = scalar_select %p361, %s358, 3
        %s363 = smul.addr %s360, 4
        %s364 = sadd.s32 %s362, %s363
        %s365 = smul.addr %s364, 4
        %s366 = scalar_lea.vmem %s2, %s365
        %s367 = sadd.s32 %s24, 1
        %s368 = smul.u32 %s367, 4
        %p369 = scmp.lt.s32.totalorder %s368, 3
        %s370 = scalar_select %p369, %s368, 3
        %s371 = smul.u32 4, %s24
        %v373 = vlaneseq
        %v374 = vshrl.u32 %v373, 7
        %v375 = vadd.s32 %v374, 8
        %v376 = vadd.s32 %v374, 16
        %v377 = vadd.s32 %v374, 24
        %v378 = vadd.s32 %v374, 32
        %v379 = vadd.s32 %v374, 40
        %vm380 = vcmp.lt.s32.totalorder %v374, 8
        %vm381 = vcmp.lt.s32.totalorder %v375, 8
        %vm382 = vcmp.lt.s32.totalorder %v376, 8
        %vm383 = vcmp.lt.s32.totalorder %v377, 8
        %vm384 = vcmp.lt.s32.totalorder %v378, 8
        %vm385 = vcmp.lt.s32.totalorder %v379, 8
        %p386 = scmp.eq.s32.totalorder %s24, 0
        %s387 = scalar_select %p386, 1, 0
        %v388 = vstv %s387
        %vm389 = vcmp.eq.s32.totalorder %v388, 1
        %vm390 = vmand %vm380, %vm389
        %vm391 = vmand %vm381, %vm389
        %vm392 = vmand %vm382, %vm389
        %vm393 = vmand %vm383, %vm389
        %vm394 = vmand %vm384, %vm389
        %vm395 = vmand %vm385, %vm389
        %vm396 = vcmp.ge.s32.totalorder %v374, 40
        %vm397 = vcmp.ge.s32.totalorder %v375, 40
        %vm398 = vcmp.ge.s32.totalorder %v376, 40
        %vm399 = vcmp.ge.s32.totalorder %v377, 40
        %vm400 = vcmp.ge.s32.totalorder %v378, 40
        %vm401 = vcmp.ge.s32.totalorder %v379, 40
        %vm402 = vmand %vm396, %vm389
        %vm403 = vmand %vm397, %vm389
        %vm404 = vmand %vm398, %vm389
        %vm405 = vmand %vm399, %vm389
        %vm406 = vmand %vm400, %vm389
        %vm407 = vmand %vm401, %vm389
        %vm408 = vmor %vm390, %vm402
        %vm409 = vmor %vm391, %vm403
        %vm410 = vmor %vm392, %vm404
        %vm411 = vmor %vm393, %vm405
        %vm412 = vmor %vm394, %vm406
        %vm413 = vmor %vm395, %vm407
        %v414 = vsel %vm408, 0.0, 1.0
        %v415 = vsel %vm409, 0.0, 1.0
        %v416 = vsel %vm410, 0.0, 1.0
        %v417 = vsel %vm411, 0.0, 1.0
        %v418 = vsel %vm412, 0.0, 1.0
        %v419 = vsel %vm413, 0.0, 1.0
        %vm420 = vcmp.gt.s32.totalorder %v374, 0
        %vm421 = vcmp.gt.s32.totalorder %v375, 0
        %vm422 = vcmp.gt.s32.totalorder %v376, 0
        %vm423 = vcmp.gt.s32.totalorder %v377, 0
        %vm424 = vcmp.gt.s32.totalorder %v378, 0
        %vm425 = vcmp.gt.s32.totalorder %v379, 0
        %vm426 = vcmp.lt.s32.totalorder %v374, 47
        %vm427 = vcmp.lt.s32.totalorder %v375, 47
        %vm428 = vcmp.lt.s32.totalorder %v376, 47
        %vm429 = vcmp.lt.s32.totalorder %v377, 47
        %vm430 = vcmp.lt.s32.totalorder %v378, 47
        %vm431 = vcmp.lt.s32.totalorder %v379, 47
        %v432 = vld [vmem:[%s350] sm:$0xf]
        %v433 = vld [vmem:[%s337] sm:$0xf]
        %v434 = vld [vmem:[%s337 + $0x4] sm:$0xf]
        %v435 = vld [vmem:[%s337 + $0x8] sm:$0xf]
        %v436 = vld [vmem:[%s337 + $0xc] sm:$0xf]
        %v437 = vld [vmem:[%s366] sm:$0xf]
        %v442 = vunpack.c.l.b16 %v433
        %v443 = vunpack.c.l.b16 %v434
        %v444 = vunpack.c.l.b16 %v435
        %v445 = vunpack.c.l.b16 %v436
        %v446 = vpack.c.b16 %v442, %v442
        %v447 = vpack.c.b16 %v444, %v443
        %v448 = vpack.c.b16 %v445, %v445
        %v451 = vunpack.c.l.b16 %v437
        %v452 = vpack.c.b16 %v451, %v451
        %vm453 = vcmask 1043456
        %v456 = vsel %vm453, %v432, %v446
        %v460 = vsel %vm453, %v448, %v452
        %v462 = vunpack.c.l.bf16 %v456
        %v463 = vunpack.c.h.bf16 %v456
        %v464 = vunpack.c.l.bf16 %v447
        %v465 = vunpack.c.h.bf16 %v447
        %v466 = vunpack.c.l.bf16 %v460
        %v467 = vunpack.c.h.bf16 %v460
        %v468 = vmul.f32 %v462, %v414
        %v469 = vmul.f32 %v463, %v415
        %v470 = vmul.f32 %v464, %v416
        %v471 = vmul.f32 %v465, %v417
        %v472 = vmul.f32 %v466, %v418
        %v473 = vmul.f32 %v467, %v419
        %v474 = vld [vmem:[%s3] sm:$0xf]
        %v475 = vld [vmem:[%s3 + $0x4] sm:$0xf]
        %v476 = vld [vmem:[%s3 + $0x8] sm:$0xf]
        %v477 = vld [vmem:[%s3 + $0xc] sm:$0xf]
        %v478 = vld [vmem:[%s3 + $0x10] sm:$0xf]
        %v479 = vld [vmem:[%s3 + $0x14] sm:$0xf]
        %v480 = vld [vmem:[%s3 + $0x18] sm:$0xf]
        %v481 = vld [vmem:[%s3 + $0x1c] sm:$0xf]
        %v482 = vld [vmem:[%s3 + $0x20] sm:$0xf]
        %v483 = vld [vmem:[%s3 + $0x24] sm:$0xf]
        %v484 = vld [vmem:[%s3 + $0x28] sm:$0xf]
        %v485 = vld [vmem:[%s3 + $0x2c] sm:$0xf]
        %v486 = vld [vmem:[%s3 + $0x30] sm:$0xf]
        %v487 = vld [vmem:[%s3 + $0x34] sm:$0xf]
        %v488 = vld [vmem:[%s3 + $0x38] sm:$0xf]
        %v489 = vld [vmem:[%s3 + $0x3c] sm:$0xf]
        %v490 = vld [vmem:[%s3 + $0x40] sm:$0xf]
        %v491 = vld [vmem:[%s3 + $0x44] sm:$0xf]
        %v492 = vld [vmem:[%s3 + $0x48] sm:$0xf]
        %v493 = vld [vmem:[%s3 + $0x4c] sm:$0xf]
        %v494 = vld [vmem:[%s3 + $0x50] sm:$0xf]
        %v495 = vld [vmem:[%s3 + $0x54] sm:$0xf]
        %v496 = vld [vmem:[%s3 + $0x58] sm:$0xf]
        %v497 = vld [vmem:[%s3 + $0x5c] sm:$0xf]
        %v498 = vld [vmem:[%s3 + $0x60] sm:$0xf]
        %v499 = vld [vmem:[%s3 + $0x64] sm:$0xf]
        %v500 = vld [vmem:[%s3 + $0x68] sm:$0xf]
        %v501 = vld [vmem:[%s3 + $0x6c] sm:$0xf]
        %v502 = vld [vmem:[%s3 + $0x70] sm:$0xf]
        %v503 = vld [vmem:[%s3 + $0x74] sm:$0xf]
        %v504 = vld [vmem:[%s3 + $0x78] sm:$0xf]
        %v505 = vld [vmem:[%s3 + $0x7c] sm:$0xf]
        %v506 = vld [vmem:[%s3 + $0x80] sm:$0xf]
        %v507 = vld [vmem:[%s3 + $0x84] sm:$0xf]
        %v508 = vld [vmem:[%s3 + $0x88] sm:$0xf]
        %v509 = vld [vmem:[%s3 + $0x8c] sm:$0xf]
        %v510 = vld [vmem:[%s3 + $0x90] sm:$0xf]
        %v511 = vld [vmem:[%s3 + $0x94] sm:$0xf]
        %v512 = vld [vmem:[%s3 + $0x98] sm:$0xf]
        %v513 = vld [vmem:[%s3 + $0x9c] sm:$0xf]
        %v514 = vld [vmem:[%s3 + $0xa0] sm:$0xf]
        %v515 = vld [vmem:[%s3 + $0xa4] sm:$0xf]
        %v516 = vld [vmem:[%s3 + $0xa8] sm:$0xf]
        %v517 = vld [vmem:[%s3 + $0xac] sm:$0xf]
        %v518 = vld [vmem:[%s3 + $0xb0] sm:$0xf]
        %v519 = vld [vmem:[%s3 + $0xb4] sm:$0xf]
        %v520 = vld [vmem:[%s3 + $0xb8] sm:$0xf]
        %v521 = vld [vmem:[%s3 + $0xbc] sm:$0xf]
        %v522 = vld [vmem:[%s4] sm:$0x1]
        %v523 = vrot.slane %v468, 7
        %v524 = vrot.slane %v469, 7
        %v525 = vrot.slane %v470, 7
        %v526 = vrot.slane %v471, 7
        %v527 = vrot.slane %v472, 7
        %v528 = vrot.slane %v473, 7
        %vm529 = vcmp.lt.s32.totalorder %v374, 1
        %v530 = vsel %vm529, %v527, %v528
        %v531 = vsel %vm529, %v526, %v527
        %v532 = vsel %vm529, %v525, %v526
        %v533 = vsel %vm529, %v524, %v525
        %v534 = vsel %vm529, %v523, %v524
        %v535 = vsel %vm529, %v528, %v523
        %v536 = vsel %vm420, 1, 0
        %v537 = vsel %vm421, 1, 0
        %v538 = vsel %vm422, 1, 0
        %v539 = vsel %vm423, 1, 0
        %v540 = vsel %vm424, 1, 0
        %v541 = vsel %vm425, 1, 0
        %vm542 = vcmp.eq.s32.totalorder %v536, 1
        %vm543 = vcmp.eq.s32.totalorder %v537, 1
        %vm544 = vcmp.eq.s32.totalorder %v538, 1
        %vm545 = vcmp.eq.s32.totalorder %v539, 1
        %vm546 = vcmp.eq.s32.totalorder %v540, 1
        %vm547 = vcmp.eq.s32.totalorder %v541, 1
        %v548 = vsel %vm542, %v535, 0.0
        %v549 = vsel %vm543, %v534, 0.0
        %v550 = vsel %vm544, %v533, 0.0
        %v551 = vsel %vm545, %v532, 0.0
        %v552 = vsel %vm546, %v531, 0.0
        %v553 = vsel %vm547, %v530, 0.0
        %v554 = vrot.slane %v468, 1
        %v555 = vrot.slane %v469, 1
        %v556 = vrot.slane %v470, 1
        %v557 = vrot.slane %v471, 1
        %v558 = vrot.slane %v472, 1
        %v559 = vrot.slane %v473, 1
        %vm560 = vcmp.lt.s32.totalorder %v374, 7
        %v561 = vsel %vm560, %v558, %v559
        %v562 = vsel %vm560, %v557, %v558
        %v563 = vsel %vm560, %v556, %v557
        %v564 = vsel %vm560, %v555, %v556
        %v565 = vsel %vm560, %v554, %v555
        %v566 = vsel %vm560, %v559, %v554
        %v567 = vsel %vm426, 1, 0
        %v568 = vsel %vm427, 1, 0
        %v569 = vsel %vm428, 1, 0
        %v570 = vsel %vm429, 1, 0
        %v571 = vsel %vm430, 1, 0
        %v572 = vsel %vm431, 1, 0
        %vm573 = vcmp.eq.s32.totalorder %v567, 1
        %vm574 = vcmp.eq.s32.totalorder %v568, 1
        %vm575 = vcmp.eq.s32.totalorder %v569, 1
        %vm576 = vcmp.eq.s32.totalorder %v570, 1
        %vm577 = vcmp.eq.s32.totalorder %v571, 1
        %vm578 = vcmp.eq.s32.totalorder %v572, 1
        %v579 = vsel %vm573, %v565, 0.0
        %v580 = vsel %vm574, %v564, 0.0
        %v581 = vsel %vm575, %v563, 0.0
        %v582 = vsel %vm576, %v562, 0.0
        %v583 = vsel %vm577, %v561, 0.0
        %v584 = vsel %vm578, %v566, 0.0
        %v585 = vpack.c.bf16 %v549, %v548
        %v586 = vpack.c.bf16 %v469, %v468
        %v587 = vpack.c.bf16 %v580, %v579
        %v588 = vpack.c.bf16 %v551, %v550
        %v589 = vpack.c.bf16 %v471, %v470
        %v590 = vpack.c.bf16 %v582, %v581
        %v591 = vpack.c.bf16 %v553, %v552
        %v592 = vpack.c.bf16 %v473, %v472
        %v593 = vpack.c.bf16 %v584, %v583
        %v595 = vlaneseq
        %v596 = vshrl.u32 %v595, 7
        %v597 = vsub.s32 0, %v596
        %v598 = vrot.slane %v522, %v597
        %v648 = vunpack.c.l.b16 %v474
        %v649 = vunpack.c.l.b16 %v475
        %v650 = vunpack.c.l.b16 %v476
        %v651 = vunpack.c.l.b16 %v477
        %v652 = vunpack.c.l.b16 %v478
        %v653 = vunpack.c.l.b16 %v479
        %v654 = vunpack.c.l.b16 %v480
        %v655 = vunpack.c.l.b16 %v481
        %v656 = vunpack.c.l.b16 %v482
        %v657 = vunpack.c.l.b16 %v483
        %v658 = vunpack.c.l.b16 %v484
        %v659 = vunpack.c.l.b16 %v485
        %v660 = vunpack.c.l.b16 %v486
        %v661 = vunpack.c.l.b16 %v487
        %v662 = vunpack.c.l.b16 %v488
        %v663 = vunpack.c.l.b16 %v489
        %v664 = vunpack.c.l.b16 %v490
        %v665 = vunpack.c.l.b16 %v491
        %v666 = vunpack.c.l.b16 %v492
        %v667 = vunpack.c.l.b16 %v493
        %v668 = vunpack.c.l.b16 %v494
        %v669 = vunpack.c.l.b16 %v495
        %v670 = vunpack.c.l.b16 %v496
        %v671 = vunpack.c.l.b16 %v497
        %v672 = vunpack.c.l.b16 %v498
        %v673 = vunpack.c.l.b16 %v499
        %v674 = vunpack.c.l.b16 %v500
        %v675 = vunpack.c.l.b16 %v501
        %v676 = vunpack.c.l.b16 %v502
        %v677 = vunpack.c.l.b16 %v503
        %v678 = vunpack.c.l.b16 %v504
        %v679 = vunpack.c.l.b16 %v505
        %v680 = vunpack.c.l.b16 %v506
        %v681 = vunpack.c.l.b16 %v507
        %v682 = vunpack.c.l.b16 %v508
        %v683 = vunpack.c.l.b16 %v509
        %v684 = vunpack.c.l.b16 %v510
        %v685 = vunpack.c.l.b16 %v511
        %v686 = vunpack.c.l.b16 %v512
        %v687 = vunpack.c.l.b16 %v513
        %v688 = vunpack.c.l.b16 %v514
        %v689 = vunpack.c.l.b16 %v515
        %v690 = vunpack.c.l.b16 %v516
        %v691 = vunpack.c.l.b16 %v517
        %v692 = vunpack.c.l.b16 %v518
        %v693 = vunpack.c.l.b16 %v519
        %v694 = vunpack.c.l.b16 %v520
        %v695 = vunpack.c.l.b16 %v521
        %v696 = vpack.c.b16 %v649, %v648
        %v697 = vpack.c.b16 %v651, %v650
        %v698 = vpack.c.b16 %v653, %v652
        %v699 = vpack.c.b16 %v655, %v654
        %v700 = vpack.c.b16 %v657, %v656
        %v701 = vpack.c.b16 %v659, %v658
        %v702 = vpack.c.b16 %v661, %v660
        %v703 = vpack.c.b16 %v663, %v662
        %v704 = vpack.c.b16 %v665, %v664
        %v705 = vpack.c.b16 %v667, %v666
        %v706 = vpack.c.b16 %v669, %v668
        %v707 = vpack.c.b16 %v671, %v670
        %v708 = vpack.c.b16 %v673, %v672
        %v709 = vpack.c.b16 %v675, %v674
        %v710 = vpack.c.b16 %v677, %v676
        %v711 = vpack.c.b16 %v679, %v678
        %v712 = vpack.c.b16 %v681, %v680
        %v713 = vpack.c.b16 %v683, %v682
        %v714 = vpack.c.b16 %v685, %v684
        %v715 = vpack.c.b16 %v687, %v686
        %v716 = vpack.c.b16 %v689, %v688
        %v717 = vpack.c.b16 %v691, %v690
        %v718 = vpack.c.b16 %v693, %v692
        %v719 = vpack.c.b16 %v695, %v694
        %744 = vmatprep.subr.bf16.mxu0 0
        %745 = vmatpush1.bf16.msra.mxu0 %v696
        %746 = vmatprep.subr.bf16.mxu0 0
        %747 = vmatpush1.bf16.msra.mxu0 %v697
        %748 = vmatprep.subr.bf16.mxu0 0
        %749 = vmatpush1.bf16.msra.mxu0 %v698
        %750 = vmatprep.subr.bf16.mxu0 0
        %751 = vmatpush1.bf16.msra.mxu0 %v699
        %752 = vmatprep.subr.bf16.mxu0 0
        %753 = vmatpush1.bf16.msra.mxu0 %v700
        %754 = vmatprep.subr.bf16.mxu0 0
        %755 = vmatpush1.bf16.msra.mxu0 %v701
        %756 = vmatprep.subr.bf16.mxu0 0
        %757 = vmatpush1.bf16.msra.mxu0 %v702
        %758 = vmatprep.subr.bf16.mxu0 0
        %759 = vmatpush1.bf16.msra.mxu0 %v703
        %760 = vmatprep.subr.bf16.mxu0 0
        %761 = vmatpush1.bf16.msra.mxu0 %v704
        %762 = vmatprep.subr.bf16.mxu0 0
        %763 = vmatpush1.bf16.msra.mxu0 %v705
        %764 = vmatprep.subr.bf16.mxu0 0
        %765 = vmatpush1.bf16.msra.mxu0 %v706
        %766 = vmatprep.subr.bf16.mxu0 0
        %767 = vmatpush1.bf16.msra.mxu0 %v707
        %768 = vmatprep.subr.bf16.mxu0 0
        %769 = vmatpush1.bf16.msra.mxu0 %v708
        %770 = vmatprep.subr.bf16.mxu0 0
        %771 = vmatpush1.bf16.msra.mxu0 %v709
        %772 = vmatprep.subr.bf16.mxu0 0
        %773 = vmatpush1.bf16.msra.mxu0 %v710
        %774 = vmatprep.subr.bf16.mxu0 0
        %775 = vmatpush1.bf16.msra.mxu0 %v711
        %776 = vmatprep.mubr.bf16.mxu0 %v586
        %777 = vmatmul.mubr.bf16.gmra.mrb[0].mxu0 %v585
        %v778 = vpop.f32.mrb[0].mxu0
        %v779 = vpop.f32.mrb[0].mxu0
        %v780 = vpop.f32.mrb[0].mxu0
        %v781 = vadd.f32 %v598, %v780
        %v782 = vpop.f32.mrb[0].mxu0
        %783 = vmatprep.mubr.bf16.mxu0 %v589
        %784 = vmatmul.mubr.bf16.gmra.mrb[0].mxu0 %v588
        %v785 = vpop.f32.mrb[0].mxu0
        %v786 = vadd.f32 %v598, %v785
        %v787 = vpop.f32.mrb[0].mxu0
        %v788 = vpop.f32.mrb[0].mxu0
        %v789 = vadd.f32 %v598, %v788
        %v790 = vpop.f32.mrb[0].mxu0
        %791 = vmatprep.mubr.bf16.mxu0 %v592
        %792 = vmatmul.mubr.bf16.gmra.mrb[0].mxu0 %v591
        %v793 = vpop.f32.mrb[0].mxu0
        %v794 = vadd.f32 %v598, %v793
        %v795 = vpop.f32.mrb[0].mxu0
        %v796 = vpop.f32.mrb[0].mxu0
        %v797 = vpop.f32.mrb[0].mxu0
        %798 = vdwg.mxu0
        %799 = vmatprep.subr.bf16.mxu0 0
        %800 = vmatpush1.bf16.msra.mxu0 %v712
        %801 = vmatprep.subr.bf16.mxu0 0
        %802 = vmatpush1.bf16.msra.mxu0 %v713
        %803 = vmatprep.subr.bf16.mxu0 0
        %804 = vmatpush1.bf16.msra.mxu0 %v714
        %805 = vmatprep.subr.bf16.mxu0 0
        %806 = vmatpush1.bf16.msra.mxu0 %v715
        %807 = vmatprep.subr.bf16.mxu0 0
        %808 = vmatpush1.bf16.msra.mxu0 %v716
        %809 = vmatprep.subr.bf16.mxu0 0
        %810 = vmatpush1.bf16.msra.mxu0 %v717
        %811 = vmatprep.subr.bf16.mxu0 0
        %812 = vmatpush1.bf16.msra.mxu0 %v718
        %813 = vmatprep.subr.bf16.mxu0 0
        %814 = vmatpush1.bf16.msra.mxu0 %v719
        %815 = vmatprep.subr.bf16.mxu0 0
        %816 = vmatpush1.bf16.msra.mxu0 0
        %817 = vmatprep.subr.bf16.mxu0 0
        %818 = vmatpush1.bf16.msra.mxu0 0
        %819 = vmatprep.subr.bf16.mxu0 0
        %820 = vmatpush1.bf16.msra.mxu0 0
        %821 = vmatprep.subr.bf16.mxu0 0
        %822 = vmatpush1.bf16.msra.mxu0 0
        %823 = vmatprep.subr.bf16.mxu0 0
        %824 = vmatpush1.bf16.msra.mxu0 0
        %825 = vmatprep.subr.bf16.mxu0 0
        %826 = vmatpush1.bf16.msra.mxu0 0
        %827 = vmatprep.subr.bf16.mxu0 0
        %828 = vmatpush1.bf16.msra.mxu0 0
        %829 = vmatprep.subr.bf16.mxu0 0
        %830 = vmatpush1.bf16.msra.mxu0 0
        %831 = vmatprep.mubr.bf16.mxu0 0
        %832 = vmatmul.mubr.bf16.gmra.mrb[0].mxu0 %v587
        %v833 = vpop.f32.mrb[0].mxu0
        %v834 = vpop.f32.mrb[0].mxu0
        %v835 = vpop.f32.mrb[0].mxu0
        %v836 = vadd.f32 %v781, %v835
        %v837 = vpop.f32.mrb[0].mxu0
        %838 = vmatprep.mubr.bf16.mxu0 0
        %839 = vmatmul.mubr.bf16.gmra.mrb[0].mxu0 %v590
        %v840 = vpop.f32.mrb[0].mxu0
        %v841 = vadd.f32 %v786, %v840
        %v842 = vpop.f32.mrb[0].mxu0
        %v843 = vpop.f32.mrb[0].mxu0
        %v844 = vadd.f32 %v789, %v843
        %v845 = vpop.f32.mrb[0].mxu0
        %846 = vmatprep.mubr.bf16.mxu0 0
        %847 = vmatmul.mubr.bf16.gmra.mrb[0].mxu0 %v593
        %v848 = vpop.f32.mrb[0].mxu0
        %v849 = vadd.f32 %v794, %v848
        %v850 = vpop.f32.mrb[0].mxu0
        %v851 = vpop.f32.mrb[0].mxu0
        %v852 = vpop.f32.mrb[0].mxu0
        %853 = vdwg.mxu0
        %854 = vst [vmem:[%s328] sm:$0xff] %v836
        %855 = vst [vmem:[%s328 + $0x8] sm:$0xff] %v841
        %856 = vst [vmem:[%s328 + $0x10] sm:$0xff] %v844
        %857 = vst [vmem:[%s328 + $0x18] sm:$0xff] %v849
        %s858 = sand.u32 %s183, 1
        %s859 = scalar_lea.sflag [#allocation3], %s858
        %s860 = sand.u32 %s183, 1
        %s861 = smul.addr %s860, 32
        %s862 = scalar_lea.vmem [#allocation2], %s861
        // Predicated region
        $region41: #{decoder_forward.5} parent=39 // pred_check
          %p863 = pneg %p193
        $region42: #{decoder_forward.5} parent=39 // pred_check_branch
          %865 = sbr.rel (%p863) target = $region44
        $region43: #{decoder_forward.5} parent=39 // pred_region
          %s866 = smul.u32 4, %s24
          %s868 = ssub.s32 512, 512
          %869 = vsyncadd %s859, %s868
          %s870 = smul.addr %s23, 4
          %s871 = sadd.s32 %s866, %s870
          %s872 = smul.addr %s871, 128
          %s873 = scalar_lea.hbm %s5, %s872
          %s874 = sshll.u32 %s862, 4
          %s875 = int_to_ptr.vmem [resolvable:$true] %s874
          %880 = dma.vmem_to_hbm [thread:$0]  %s875, 512, %s873, %s859, 128, 128, 8
        $region44: #{decoder_forward.5} parent=39 // pred_fallthru
          _
      $region40: #{decoder_forward.5} parent=5 // pred_fallthru
        _
      %p881 = scmp.le.s32.totalorder 2, %s14
      // Predicated region
      $region45: #{decoder_forward.5} parent=5 // pred_check
        %p882 = pneg %p881
      $region46: #{decoder_forward.5} parent=5 // pred_check_branch
        %884 = sbr.rel (%p882) target = $region48
      $region47: #{decoder_forward.5} parent=5 // pred_region
        %s885 = ssub.s32 %s14, 2
        // Predicated region
        $region49: #{decoder_forward.5} parent=47 // pred_check
          %p886 = pneg %p199
        $region50: #{decoder_forward.5} parent=47 // pred_check_branch
          %888 = sbr.rel (%p886) target = $region52
        $region51: #{decoder_forward.5} parent=47 // pred_region
          %s889 = sand.u32 %s184, 1
          %s890 = scalar_lea.sflag [#allocation3], %s889
          %s891 = sand.u32 %s184, 1
          %s892 = smul.addr %s891, 32
          %s893 = scalar_lea.vmem [#allocation2], %s892
          %894 = dma.done %s890, 512
        $region52: #{decoder_forward.5} parent=47 // pred_fallthru
          _
      $region48: #{decoder_forward.5} parent=5 // pred_fallthru
        _
    $region6: #{decoder_forward.5} parent=1 // loop_footer
      %s18 = sadd.s32 1, %s14
    $region7: #{decoder_forward.5} parent=1 // loop_footer_branch
      %13 = sbr.rel target = $region3
    $region8: #{decoder_forward.5} parent=1 // loop_exit
      _
    %895 = vsyncpa [#allocation3], 1
    %s896 = scalar_lea.sflag [#allocation3], 1
    %897 = vsyncpa %s896, 1

// kernel: decoder_forward.4
$region0: #{decoder_forward.4}
  #allocation0 [shape = 'u32[]', space=smem, size = 0x4, offset = 0x4, fixed_abs, tag = 'smem constant byte address 0x4 - core index']
  #allocation1 [shape = 'u32[144,128]{1,0:T(1,128)}', space=vmem, size = 0x12000, scoped, tag = 'internal scratch']
  %s0 = inlined_call_operand.vmem [shape: bf16[2,16,128], index: 0, kind: input, shape index: {}, may-alias: {0,1,2}]
  %s1 = inlined_call_operand.vmem [shape: bf16[2,16,128], index: 1, kind: input, shape index: {}, may-alias: {0,1,2}]
  %s2 = inlined_call_operand.vmem [shape: bf16[2,16,128], index: 2, kind: input, shape index: {}, may-alias: {0,1,2}]
  %s3 = inlined_call_operand.vmem [shape: bf16[384,128], index: 3, kind: input, shape index: {}]
  %s4 = inlined_call_operand.vmem [shape: f32[1,128], index: 4, kind: input, shape index: {}]
  %s5 = inlined_call_operand.vmem [shape: bf16[384,128], index: 5, kind: input, shape index: {}]
  %s6 = inlined_call_operand.vmem [shape: f32[1,128], index: 6, kind: input, shape index: {}]
  %s7 = inlined_call_operand.vmem [shape: bf16[128,128], index: 7, kind: input, shape index: {}]
  %s8 = inlined_call_operand.vmem [shape: f32[1,128], index: 8, kind: input, shape index: {}]
  %s9 = inlined_call_operand.vmem [shape: bf16[384,256], index: 9, kind: input, shape index: {}]
  %s10 = inlined_call_operand.vmem [shape: f32[1,256], index: 10, kind: input, shape index: {}]
  %s11 = inlined_call_operand.vmem [shape: bf16[2,16,256], index: 11, kind: output, shape index: {}]
  %s12 = sld [smem:[#allocation0]]
  $region77: #{decoder_forward.4} parent=0
    _
  %s14 = ssub.s32 1, %s12
  %s15 = scalar_select 0, %s14, %s12
  loop: start=0, step=1, limit=4
  $region2: #{decoder_forward.4} parent=0 // loop_pre_header
    _
  $region3: #{decoder_forward.4} parent=0 // loop_header
    %s17 = sphi 0, %s21
    %p18 = scmp.ge.s32.totalorder %s17, 4
    %s24 = sphi 0, %s36
    %s25 = sphi 0, %s32
    %s26 = sphi 0, %s24
    %s27 = sphi 0, %s25
    %s28 = sphi 0, %s26
    %s29 = sphi 0, %s27
    %s41 = sphi 0, %s43
    %s44 = sphi 0, %s41
    %s45 = sphi 0, %s44
    %s61 = sphi 0, %s45
    %s77 = sphi 0, %s79
    %s80 = sphi 0, %s77
    %s81 = sphi 0, %s80
    %s97 = sphi 0, %s81
    %s113 = sphi 0, %s115
    %s116 = sphi 0, %s113
    %s117 = sphi 0, %s116
    %s133 = sphi 0, %s117
    %s137 = sphi 0, %s137
    %s139 = sphi 0, %s137
    %s140 = sphi 0, %s139
    %s154 = sphi 0, %s140
    %s158 = sphi 0, %s158
    %s160 = sphi 0, %s158
    %s161 = sphi 0, %s160
    %s175 = sphi 0, %s161
    %s179 = sphi 0, %s179
    %s181 = sphi 0, %s179
    %s182 = sphi 0, %s181
    %s196 = sphi 0, %s182
    %s200 = sphi 0, %s200
    %s202 = sphi 0, %s200
    %s203 = sphi 0, %s202
    %s217 = sphi 0, %s203
    %s221 = sphi 0, %s221
    %s223 = sphi 0, %s221
    %s224 = sphi 0, %s223
    %s238 = sphi 0, %s224
    %s242 = sphi 0, %s242
    %s244 = sphi 0, %s242
    %s245 = sphi 0, %s244
    %s259 = sphi 0, %s245
    %s263 = sphi 0, %s263
    %s265 = sphi 0, %s263
    %s266 = sphi 0, %s265
    %s280 = sphi 0, %s266
    %s284 = sphi 0, %s284
    %s286 = sphi 0, %s284
    %s287 = sphi 0, %s286
    %s301 = sphi 0, %s287
    %s309 = sphi 0, %s311
    %s312 = sphi 0, %s309
    %s313 = sphi 0, %s312
    %s329 = sphi 0, %s313
  $region4: #{decoder_forward.4} parent=0 // loop_header_branch
    %20 = sbr.rel (%p18) target = $region8
  $region5: #{decoder_forward.4} parent=0 // loop_body
    %s22 = ssub.s32 %s17, 1
    %s23 = ssub.s32 %s17, 2
    %s30 = sadd.s32 1, %s25
    %p31 = scmp.ge.s32.totalorder %s30, 1
    %s32 = scalar_select %p31, 0, %s30
    %s33 = sadd.s32 1, %s24
    %s34 = scalar_select %p31, %s33, %s24
    %p35 = scmp.ge.s32.totalorder %s34, 2
    %s36 = scalar_select %p35, 0, %s34
    %s37 = ssub.s32 %s24, %s36
    %s38 = ssub.s32 %s25, %s32
    %s39 = sor.u32 %s37, %s38
    %p40 = scmp.eq.s32.totalorder %s39, 0
    %s42 = sadd.s32 %s41, 1
    %s43 = scalar_select %p40, %s41, %s42
    %p46 = pneg %p40
    %p47 = scmp.eq.s32.totalorder %s17, 1
    %p48 = por %p46, %p47
    %p49 = scmp.ne.s32.totalorder %s41, %s44
    %p50 = scmp.eq.s32.totalorder %s17, 0
    %p51 = por %p49, %p50
    %p52 = scmp.ne.s32.totalorder %s41, %s44
    %p53 = scmp.eq.s32.totalorder %s22, 1
    %p54 = por %p52, %p53
    %p55 = scmp.ne.s32.totalorder %s44, %s45
    %p56 = scmp.eq.s32.totalorder %s22, 0
    %p57 = por %p55, %p56
    %p58 = scmp.ne.s32.totalorder %s44, %s45
    %p59 = scmp.eq.s32.totalorder %s23, 1
    %p60 = por %p58, %p59
    %p62 = scmp.ne.s32.totalorder %s45, %s61
    %p63 = scmp.eq.s32.totalorder %s23, 0
    %p64 = por %p62, %p63
    %s65 = smul.u32 %s25, 2
    %s66 = ssub.s32 %s65, 1
    %p67 = scmp.gt.s32.totalorder %s66, 0
    %s68 = scalar_select %p67, %s66, 0
    %s69 = smul.u32 %s32, 2
    %s70 = ssub.s32 %s69, 1
    %p71 = scmp.gt.s32.totalorder %s70, 0
    %s72 = scalar_select %p71, %s70, 0
    %s73 = ssub.s32 %s24, %s36
    %s74 = ssub.s32 %s68, %s72
    %s75 = sor.u32 %s73, %s74
    %p76 = scmp.eq.s32.totalorder %s75, 0
    %s78 = sadd.s32 %s77, 1
    %s79 = scalar_select %p76, %s77, %s78
    %p82 = pneg %p76
    %p83 = scmp.eq.s32.totalorder %s17, 1
    %p84 = por %p82, %p83
    %p85 = scmp.ne.s32.totalorder %s77, %s80
    %p86 = scmp.eq.s32.totalorder %s17, 0
    %p87 = por %p85, %p86
    %p88 = scmp.ne.s32.totalorder %s77, %s80
    %p89 = scmp.eq.s32.totalorder %s22, 1
    %p90 = por %p88, %p89
    %p91 = scmp.ne.s32.totalorder %s80, %s81
    %p92 = scmp.eq.s32.totalorder %s22, 0
    %p93 = por %p91, %p92
    %p94 = scmp.ne.s32.totalorder %s80, %s81
    %p95 = scmp.eq.s32.totalorder %s23, 1
    %p96 = por %p94, %p95
    %p98 = scmp.ne.s32.totalorder %s81, %s97
    %p99 = scmp.eq.s32.totalorder %s23, 0
    %p100 = por %p98, %p99
    %s101 = sadd.s32 %s25, 1
    %s102 = smul.u32 %s101, 2
    %p103 = scmp.lt.s32.totalorder %s102, 1
    %s104 = scalar_select %p103, %s102, 1
    %s105 = sadd.s32 %s32, 1
    %s106 = smul.u32 %s105, 2
    %p107 = scmp.lt.s32.totalorder %s106, 1
    %s108 = scalar_select %p107, %s106, 1
    %s109 = ssub.s32 %s24, %s36
    %s110 = ssub.s32 %s104, %s108
    %s111 = sor.u32 %s109, %s110
    %p112 = scmp.eq.s32.totalorder %s111, 0
    %s114 = sadd.s32 %s113, 1
    %s115 = scalar_select %p112, %s113, %s114
    %p118 = pneg %p112
    %p119 = scmp.eq.s32.totalorder %s17, 1
    %p120 = por %p118, %p119
    %p121 = scmp.ne.s32.totalorder %s113, %s116
    %p122 = scmp.eq.s32.totalorder %s17, 0
    %p123 = por %p121, %p122
    %p124 = scmp.ne.s32.totalorder %s113, %s116
    %p125 = scmp.eq.s32.totalorder %s22, 1
    %p126 = por %p124, %p125
    %p127 = scmp.ne.s32.totalorder %s116, %s117
    %p128 = scmp.eq.s32.totalorder %s22, 0
    %p129 = por %p127, %p128
    %p130 = scmp.ne.s32.totalorder %s116, %s117
    %p131 = scmp.eq.s32.totalorder %s23, 1
    %p132 = por %p130, %p131
    %p134 = scmp.ne.s32.totalorder %s117, %s133
    %p135 = scmp.eq.s32.totalorder %s23, 0
    %p136 = por %p134, %p135
    %s138 = sadd.s32 %s137, 1
    %p141 = scmp.eq.s32.totalorder %s17, 1
    %p142 = scmp.ne.s32.totalorder %s137, %s139
    %p143 = scmp.eq.s32.totalorder %s17, 0
    %p144 = por %p142, %p143
    %p145 = scmp.ne.s32.totalorder %s137, %s139
    %p146 = scmp.eq.s32.totalorder %s22, 1
    %p147 = por %p145, %p146
    %p148 = scmp.ne.s32.totalorder %s139, %s140
    %p149 = scmp.eq.s32.totalorder %s22, 0
    %p150 = por %p148, %p149
    %p151 = scmp.ne.s32.totalorder %s139, %s140
    %p152 = scmp.eq.s32.totalorder %s23, 1
    %p153 = por %p151, %p152
    %p155 = scmp.ne.s32.totalorder %s140, %s154
    %p156 = scmp.eq.s32.totalorder %s23, 0
    %p157 = por %p155, %p156
    %s159 = sadd.s32 %s158, 1
    %p162 = scmp.eq.s32.totalorder %s17, 1
    %p163 = scmp.ne.s32.totalorder %s158, %s160
    %p164 = scmp.eq.s32.totalorder %s17, 0
    %p165 = por %p163, %p164
    %p166 = scmp.ne.s32.totalorder %s158, %s160
    %p167 = scmp.eq.s32.totalorder %s22, 1
    %p168 = por %p166, %p167
    %p169 = scmp.ne.s32.totalorder %s160, %s161
    %p170 = scmp.eq.s32.totalorder %s22, 0
    %p171 = por %p169, %p170
    %p172 = scmp.ne.s32.totalorder %s160, %s161
    %p173 = scmp.eq.s32.totalorder %s23, 1
    %p174 = por %p172, %p173
    %p176 = scmp.ne.s32.totalorder %s161, %s175
    %p177 = scmp.eq.s32.totalorder %s23, 0
    %p178 = por %p176, %p177
    %s180 = sadd.s32 %s179, 1
    %p183 = scmp.eq.s32.totalorder %s17, 1
    %p184 = scmp.ne.s32.totalorder %s179, %s181
    %p185 = scmp.eq.s32.totalorder %s17, 0
    %p186 = por %p184, %p185
    %p187 = scmp.ne.s32.totalorder %s179, %s181
    %p188 = scmp.eq.s32.totalorder %s22, 1
    %p189 = por %p187, %p188
    %p190 = scmp.ne.s32.totalorder %s181, %s182
    %p191 = scmp.eq.s32.totalorder %s22, 0
    %p192 = por %p190, %p191
    %p193 = scmp.ne.s32.totalorder %s181, %s182
    %p194 = scmp.eq.s32.totalorder %s23, 1
    %p195 = por %p193, %p194
    %p197 = scmp.ne.s32.totalorder %s182, %s196
    %p198 = scmp.eq.s32.totalorder %s23, 0
    %p199 = por %p197, %p198
    %s201 = sadd.s32 %s200, 1
    %p204 = scmp.eq.s32.totalorder %s17, 1
    %p205 = scmp.ne.s32.totalorder %s200, %s202
    %p206 = scmp.eq.s32.totalorder %s17, 0
    %p207 = por %p205, %p206
    %p208 = scmp.ne.s32.totalorder %s200, %s202
    %p209 = scmp.eq.s32.totalorder %s22, 1
    %p210 = por %p208, %p209
    %p211 = scmp.ne.s32.totalorder %s202, %s203
    %p212 = scmp.eq.s32.totalorder %s22, 0
    %p213 = por %p211, %p212
    %p214 = scmp.ne.s32.totalorder %s202, %s203
    %p215 = scmp.eq.s32.totalorder %s23, 1
    %p216 = por %p214, %p215
    %p218 = scmp.ne.s32.totalorder %s203, %s217
    %p219 = scmp.eq.s32.totalorder %s23, 0
    %p220 = por %p218, %p219
    %s222 = sadd.s32 %s221, 1
    %p225 = scmp.eq.s32.totalorder %s17, 1
    %p226 = scmp.ne.s32.totalorder %s221, %s223
    %p227 = scmp.eq.s32.totalorder %s17, 0
    %p228 = por %p226, %p227
    %p229 = scmp.ne.s32.totalorder %s221, %s223
    %p230 = scmp.eq.s32.totalorder %s22, 1
    %p231 = por %p229, %p230
    %p232 = scmp.ne.s32.totalorder %s223, %s224
    %p233 = scmp.eq.s32.totalorder %s22, 0
    %p234 = por %p232, %p233
    %p235 = scmp.ne.s32.totalorder %s223, %s224
    %p236 = scmp.eq.s32.totalorder %s23, 1
    %p237 = por %p235, %p236
    %p239 = scmp.ne.s32.totalorder %s224, %s238
    %p240 = scmp.eq.s32.totalorder %s23, 0
    %p241 = por %p239, %p240
    %s243 = sadd.s32 %s242, 1
    %p246 = scmp.eq.s32.totalorder %s17, 1
    %p247 = scmp.ne.s32.totalorder %s242, %s244
    %p248 = scmp.eq.s32.totalorder %s17, 0
    %p249 = por %p247, %p248
    %p250 = scmp.ne.s32.totalorder %s242, %s244
    %p251 = scmp.eq.s32.totalorder %s22, 1
    %p252 = por %p250, %p251
    %p253 = scmp.ne.s32.totalorder %s244, %s245
    %p254 = scmp.eq.s32.totalorder %s22, 0
    %p255 = por %p253, %p254
    %p256 = scmp.ne.s32.totalorder %s244, %s245
    %p257 = scmp.eq.s32.totalorder %s23, 1
    %p258 = por %p256, %p257
    %p260 = scmp.ne.s32.totalorder %s245, %s259
    %p261 = scmp.eq.s32.totalorder %s23, 0
    %p262 = por %p260, %p261
    %s264 = sadd.s32 %s263, 1
    %p267 = scmp.eq.s32.totalorder %s17, 1
    %p268 = scmp.ne.s32.totalorder %s263, %s265
    %p269 = scmp.eq.s32.totalorder %s17, 0
    %p270 = por %p268, %p269
    %p271 = scmp.ne.s32.totalorder %s263, %s265
    %p272 = scmp.eq.s32.totalorder %s22, 1
    %p273 = por %p271, %p272
    %p274 = scmp.ne.s32.totalorder %s265, %s266
    %p275 = scmp.eq.s32.totalorder %s22, 0
    %p276 = por %p274, %p275
    %p277 = scmp.ne.s32.totalorder %s265, %s266
    %p278 = scmp.eq.s32.totalorder %s23, 1
    %p279 = por %p277, %p278
    %p281 = scmp.ne.s32.totalorder %s266, %s280
    %p282 = scmp.eq.s32.totalorder %s23, 0
    %p283 = por %p281, %p282
    %s285 = sadd.s32 %s284, 1
    %p288 = scmp.eq.s32.totalorder %s17, 1
    %p289 = scmp.ne.s32.totalorder %s284, %s286
    %p290 = scmp.eq.s32.totalorder %s17, 0
    %p291 = por %p289, %p290
    %p292 = scmp.ne.s32.totalorder %s284, %s286
    %p293 = scmp.eq.s32.totalorder %s22, 1
    %p294 = por %p292, %p293
    %p295 = scmp.ne.s32.totalorder %s286, %s287
    %p296 = scmp.eq.s32.totalorder %s22, 0
    %p297 = por %p295, %p296
    %p298 = scmp.ne.s32.totalorder %s286, %s287
    %p299 = scmp.eq.s32.totalorder %s23, 1
    %p300 = por %p298, %p299
    %p302 = scmp.ne.s32.totalorder %s287, %s301
    %p303 = scmp.eq.s32.totalorder %s23, 0
    %p304 = por %p302, %p303
    %s305 = ssub.s32 %s24, %s36
    %s306 = ssub.s32 %s25, %s32
    %s307 = sor.u32 %s305, %s306
    %p308 = scmp.eq.s32.totalorder %s307, 0
    %s310 = sadd.s32 %s309, 1
    %s311 = scalar_select %p308, %s309, %s310
    %p314 = pneg %p308
    %p315 = scmp.eq.s32.totalorder %s17, 1
    %p316 = por %p314, %p315
    %p317 = scmp.ne.s32.totalorder %s309, %s312
    %p318 = scmp.eq.s32.totalorder %s17, 0
    %p319 = por %p317, %p318
    %p320 = scmp.ne.s32.totalorder %s309, %s312
    %p321 = scmp.eq.s32.totalorder %s22, 1
    %p322 = por %p320, %p321
    %p323 = scmp.ne.s32.totalorder %s312, %s313
    %p324 = scmp.eq.s32.totalorder %s22, 0
    %p325 = por %p323, %p324
    %p326 = scmp.ne.s32.totalorder %s312, %s313
    %p327 = scmp.eq.s32.totalorder %s23, 1
    %p328 = por %p326, %p327
    %p330 = scmp.ne.s32.totalorder %s313, %s329
    %p331 = scmp.eq.s32.totalorder %s23, 0
    %p332 = por %p330, %p331
    %p333 = scmp.le.s32.totalorder 1, %s17
    %p334 = scmp.lt.s32.totalorder %s17, 3
    %p335 = pnand %p333, %p334
    %p336 = pneg %p335
    // Predicated region
    $region9: #{decoder_forward.4} parent=5 // pred_check
      _
    $region10: #{decoder_forward.4} parent=5 // pred_check_branch
      %338 = sbr.rel (%p335) target = $region12
    $region11: #{decoder_forward.4} parent=5 // pred_region
      %s339 = ssub.s32 %s17, 1
      // Predicated region
      $region13: #{decoder_forward.4} parent=11 // pred_check
        %p340 = pneg %p150
      $region14: #{decoder_forward.4} parent=11 // pred_check_branch
        %342 = sbr.rel (%p340) target = $region16
      $region15: #{decoder_forward.4} parent=11 // pred_region
        _
      $region16: #{decoder_forward.4} parent=11 // pred_fallthru
        _
      // Predicated region
      $region17: #{decoder_forward.4} parent=11 // pred_check
        %p343 = pneg %p171
      $region18: #{decoder_forward.4} parent=11 // pred_check_branch
        %345 = sbr.rel (%p343) target = $region20
      $region19: #{decoder_forward.4} parent=11 // pred_region
        _
      $region20: #{decoder_forward.4} parent=11 // pred_fallthru
        _
      // Predicated region
      $region21: #{decoder_forward.4} parent=11 // pred_check
        %p346 = pneg %p192
      $region22: #{decoder_forward.4} parent=11 // pred_check_branch
        %348 = sbr.rel (%p346) target = $region24
      $region23: #{decoder_forward.4} parent=11 // pred_region
        _
      $region24: #{decoder_forward.4} parent=11 // pred_fallthru
        _
      // Predicated region
      $region25: #{decoder_forward.4} parent=11 // pred_check
        %p349 = pneg %p213
      $region26: #{decoder_forward.4} parent=11 // pred_check_branch
        %351 = sbr.rel (%p349) target = $region28
      $region27: #{decoder_forward.4} parent=11 // pred_region
        _
      $region28: #{decoder_forward.4} parent=11 // pred_fallthru
        _
      // Predicated region
      $region29: #{decoder_forward.4} parent=11 // pred_check
        %p352 = pneg %p234
      $region30: #{decoder_forward.4} parent=11 // pred_check_branch
        %354 = sbr.rel (%p352) target = $region32
      $region31: #{decoder_forward.4} parent=11 // pred_region
        _
      $region32: #{decoder_forward.4} parent=11 // pred_fallthru
        _
      // Predicated region
      $region33: #{decoder_forward.4} parent=11 // pred_check
        %p355 = pneg %p255
      $region34: #{decoder_forward.4} parent=11 // pred_check_branch
        %357 = sbr.rel (%p355) target = $region36
      $region35: #{decoder_forward.4} parent=11 // pred_region
        _
      $region36: #{decoder_forward.4} parent=11 // pred_fallthru
        _
      // Predicated region
      $region37: #{decoder_forward.4} parent=11 // pred_check
        %p358 = pneg %p276
      $region38: #{decoder_forward.4} parent=11 // pred_check_branch
        %360 = sbr.rel (%p358) target = $region40
      $region39: #{decoder_forward.4} parent=11 // pred_region
        _
      $region40: #{decoder_forward.4} parent=11 // pred_fallthru
        _
      // Predicated region
      $region41: #{decoder_forward.4} parent=11 // pred_check
        %p361 = pneg %p297
      $region42: #{decoder_forward.4} parent=11 // pred_check_branch
        %363 = sbr.rel (%p361) target = $region44
      $region43: #{decoder_forward.4} parent=11 // pred_region
        _
      $region44: #{decoder_forward.4} parent=11 // pred_fallthru
        _
    $region12: #{decoder_forward.4} parent=5 // pred_fallthru
      _
    %p364 = scmp.lt.s32.totalorder %s17, 2
    // Predicated region
    $region45: #{decoder_forward.4} parent=5 // pred_check
      %p365 = pneg %p364
    $region46: #{decoder_forward.4} parent=5 // pred_check_branch
      %367 = sbr.rel (%p365) target = $region48
    $region47: #{decoder_forward.4} parent=5 // pred_region
      // Predicated region
      $region49: #{decoder_forward.4} parent=47 // pred_check
        %p368 = pneg %p51
      $region50: #{decoder_forward.4} parent=47 // pred_check_branch
        %370 = sbr.rel (%p368) target = $region52
      $region51: #{decoder_forward.4} parent=47 // pred_region
        %s371 = smul.u32 2, %s25
        %p372 = scmp.lt.s32.totalorder %s24, 1
        %s373 = scalar_select %p372, %s24, 1
        %p374 = scmp.lt.s32.totalorder %s371, 1
        %s375 = scalar_select %p374, %s371, 1
        %s376 = smul.addr %s373, 2
        %s377 = sadd.s32 %s375, %s376
        %s378 = smul.addr %s377, 4
        %s379 = scalar_lea.vmem %s0, %s378
        %s380 = smul.u32 2, %s25
      $region52: #{decoder_forward.4} parent=47 // pred_fallthru
        _
      // Predicated region
      $region53: #{decoder_forward.4} parent=47 // pred_check
        %p381 = pneg %p87
      $region54: #{decoder_forward.4} parent=47 // pred_check_branch
        %383 = sbr.rel (%p381) target = $region56
      $region55: #{decoder_forward.4} parent=47 // pred_region
        %s384 = smul.u32 %s25, 2
        %s385 = ssub.s32 %s384, 1
        %p386 = scmp.gt.s32.totalorder %s385, 0
        %s387 = scalar_select %p386, %s385, 0
        %p388 = scmp.lt.s32.totalorder %s24, 1
        %s389 = scalar_select %p388, %s24, 1
        %p390 = scmp.lt.s32.totalorder %s387, 1
        %s391 = scalar_select %p390, %s387, 1
        %s392 = smul.addr %s389, 2
        %s393 = sadd.s32 %s391, %s392
        %s394 = smul.addr %s393, 4
        %s395 = scalar_lea.vmem %s1, %s394
        %s396 = smul.u32 %s25, 2
        %s397 = ssub.s32 %s396, 1
        %p398 = scmp.gt.s32.totalorder %s397, 0
        %s399 = scalar_select %p398, %s397, 0
      $region56: #{decoder_forward.4} parent=47 // pred_fallthru
        _
      // Predicated region
      $region57: #{decoder_forward.4} parent=47 // pred_check
        %p400 = pneg %p123
      $region58: #{decoder_forward.4} parent=47 // pred_check_branch
        %402 = sbr.rel (%p400) target = $region60
      $region59: #{decoder_forward.4} parent=47 // pred_region
        %s403 = sadd.s32 %s25, 1
        %s404 = smul.u32 %s403, 2
        %p405 = scmp.lt.s32.totalorder %s404, 1
        %s406 = scalar_select %p405, %s404, 1
        %p407 = scmp.lt.s32.totalorder %s24, 1
        %s408 = scalar_select %p407, %s24, 1
        %p409 = scmp.lt.s32.totalorder %s406, 1
        %s410 = scalar_select %p409, %s406, 1
        %s411 = smul.addr %s408, 2
        %s412 = sadd.s32 %s410, %s411
        %s413 = smul.addr %s412, 4
        %s414 = scalar_lea.vmem %s2, %s413
        %s415 = sadd.s32 %s25, 1
        %s416 = smul.u32 %s415, 2
        %p417 = scmp.lt.s32.totalorder %s416, 1
        %s418 = scalar_select %p417, %s416, 1
      $region60: #{decoder_forward.4} parent=47 // pred_fallthru
        _
    $region48: #{decoder_forward.4} parent=5 // pred_fallthru
      _
    %p419 = scmp.le.s32.totalorder 1, %s17
    %p420 = scmp.lt.s32.totalorder %s17, 3
    %p421 = pnand %p419, %p420
    %p422 = pneg %p421
    // Predicated region
    $region61: #{decoder_forward.4} parent=5 // pred_check
      _
    $region62: #{decoder_forward.4} parent=5 // pred_check_branch
      %424 = sbr.rel (%p421) target = $region64
    $region63: #{decoder_forward.4} parent=5 // pred_region
      %s425 = ssub.s32 %s17, 1
      %s426 = smul.u32 2, %s27
      %p427 = scmp.lt.s32.totalorder %s26, 1
      %s428 = scalar_select %p427, %s26, 1
      %p429 = scmp.lt.s32.totalorder %s426, 1
      %s430 = scalar_select %p429, %s426, 1
      %s431 = smul.addr %s428, 2
      %s432 = sadd.s32 %s430, %s431
      %s433 = smul.addr %s432, 4
      %s434 = scalar_lea.vmem %s0, %s433
      %p435 = pneg %p57
      %p436 = pneg %p54
      %s437 = smul.u32 %s27, 2
      %s438 = ssub.s32 %s437, 1
      %p439 = scmp.gt.s32.totalorder %s438, 0
      %s440 = scalar_select %p439, %s438, 0
      %p441 = scmp.lt.s32.totalorder %s26, 1
      %s442 = scalar_select %p441, %s26, 1
      %p443 = scmp.lt.s32.totalorder %s440, 1
      %s444 = scalar_select %p443, %s440, 1
      %s445 = smul.addr %s442, 2
      %s446 = sadd.s32 %s444, %s445
      %s447 = smul.addr %s446, 4
      %s448 = scalar_lea.vmem %s1, %s447
      %p449 = pneg %p93
      %p450 = pneg %p90
      %s451 = sadd.s32 %s27, 1
      %s452 = smul.u32 %s451, 2
      %p453 = scmp.lt.s32.totalorder %s452, 1
      %s454 = scalar_select %p453, %s452, 1
      %p455 = scmp.lt.s32.totalorder %s26, 1
      %s456 = scalar_select %p455, %s26, 1
      %p457 = scmp.lt.s32.totalorder %s454, 1
      %s458 = scalar_select %p457, %s454, 1
      %s459 = smul.addr %s456, 2
      %s460 = sadd.s32 %s458, %s459
      %s461 = smul.addr %s460, 4
      %s462 = scalar_lea.vmem %s2, %s461
      %p463 = pneg %p129
      %p464 = pneg %p126
      %p465 = pneg %p150
      %p466 = pneg %p147
      %p467 = pneg %p171
      %p468 = pneg %p168
      %p469 = pneg %p192
      %p470 = pneg %p189
      %p471 = pneg %p213
      %p472 = pneg %p210
      %p473 = pneg %p234
      %p474 = pneg %p231
      %p475 = pneg %p255
      %p476 = pneg %p252
      %p477 = pneg %p276
      %p478 = pneg %p273
      %p479 = pneg %p297
      %p480 = pneg %p294
      %p481 = pneg %p325
      %p482 = pneg %p322
      %s483 = smul.u32 2, %s27
      %p484 = scmp.lt.s32.totalorder %s26, 1
      %s485 = scalar_select %p484, %s26, 1
      %p486 = scmp.lt.s32.totalorder %s483, 1
      %s487 = scalar_select %p486, %s483, 1
      %s488 = smul.addr %s487, 2
      %s489 = smul.addr %s485, 4
      %s490 = sadd.s32 %s488, %s489
      %s491 = smul.addr %s490, 4
      %s492 = scalar_lea.vmem %s11, %s491
      %s493 = smul.u32 2, %s27
      %p494 = scmp.lt.s32.totalorder %s26, 1
      %s495 = scalar_select %p494, %s26, 1
      %p496 = scmp.lt.s32.totalorder %s493, 1
      %s497 = scalar_select %p496, %s493, 1
      %s498 = smul.addr %s495, 2
      %s499 = sadd.s32 %s497, %s498
      %s500 = smul.addr %s499, 4
      %s501 = scalar_lea.vmem %s0, %s500
      %s502 = smul.u32 2, %s27
      %s503 = smul.u32 %s27, 2
      %s504 = ssub.s32 %s503, 1
      %p505 = scmp.gt.s32.totalorder %s504, 0
      %s506 = scalar_select %p505, %s504, 0
      %p507 = scmp.lt.s32.totalorder %s26, 1
      %s508 = scalar_select %p507, %s26, 1
      %p509 = scmp.lt.s32.totalorder %s506, 1
      %s510 = scalar_select %p509, %s506, 1
      %s511 = smul.addr %s508, 2
      %s512 = sadd.s32 %s510, %s511
      %s513 = smul.addr %s512, 4
      %s514 = scalar_lea.vmem %s1, %s513
      %s515 = smul.u32 %s27, 2
      %s516 = ssub.s32 %s515, 1
      %p517 = scmp.gt.s32.totalorder %s516, 0
      %s518 = scalar_select %p517, %s516, 0
      %s519 = sadd.s32 %s27, 1
      %s520 = smul.u32 %s519, 2
      %p521 = scmp.lt.s32.totalorder %s520, 1
      %s522 = scalar_select %p521, %s520, 1
      %p523 = scmp.lt.s32.totalorder %s26, 1
      %s524 = scalar_select %p523, %s26, 1
      %p525 = scmp.lt.s32.totalorder %s522, 1
      %s526 = scalar_select %p525, %s522, 1
      %s527 = smul.addr %s524, 2
      %s528 = sadd.s32 %s526, %s527
      %s529 = smul.addr %s528, 4
      %s530 = scalar_lea.vmem %s2, %s529
      %s531 = sadd.s32 %s27, 1
      %s532 = smul.u32 %s531, 2
      %p533 = scmp.lt.s32.totalorder %s532, 1
      %s534 = scalar_select %p533, %s532, 1
      %s535 = smul.u32 2, %s27
      %p536 = scmp.lt.s32.totalorder %s26, 1
      %s537 = scalar_select %p536, %s26, 1
      %p538 = scmp.lt.s32.totalorder %s535, 1
      %s539 = scalar_select %p538, %s535, 1
      %s540 = smul.addr %s539, 2
      %s541 = smul.addr %s537, 4
      %s542 = sadd.s32 %s540, %s541
      %s543 = smul.addr %s542, 4
      %s544 = scalar_lea.vmem %s11, %s543
      %s545 = smul.u32 2, %s27
      %v547 = vlaneseq
      %v548 = vshrl.u32 %v547, 7
      %v549 = vadd.s32 %v548, 8
      %v550 = vadd.s32 %v548, 16
      %v551 = vadd.s32 %v548, 24
      %vm552 = vcmp.lt.s32.totalorder %v548, 8
      %vm553 = vcmp.lt.s32.totalorder %v549, 8
      %vm554 = vcmp.lt.s32.totalorder %v550, 8
      %vm555 = vcmp.lt.s32.totalorder %v551, 8
      %p556 = scmp.eq.s32.totalorder %s27, 0
      %s557 = scalar_select %p556, 1, 0
      %v558 = vstv %s557
      %vm559 = vcmp.eq.s32.totalorder %v558, 1
      %vm560 = vmand %vm552, %vm559
      %vm561 = vmand %vm553, %vm559
      %vm562 = vmand %vm554, %vm559
      %vm563 = vmand %vm555, %vm559
      %vm564 = vcmp.ge.s32.totalorder %v548, 24
      %vm565 = vcmp.ge.s32.totalorder %v549, 24
      %vm566 = vcmp.ge.s32.totalorder %v550, 24
      %vm567 = vcmp.ge.s32.totalorder %v551, 24
      %vm568 = vmand %vm564, %vm559
      %vm569 = vmand %vm565, %vm559
      %vm570 = vmand %vm566, %vm559
      %vm571 = vmand %vm567, %vm559
      %vm572 = vmor %vm560, %vm568
      %vm573 = vmor %vm561, %vm569
      %vm574 = vmor %vm562, %vm570
      %vm575 = vmor %vm563, %vm571
      %v576 = vsel %vm572, 0.0, 1.0
      %v577 = vsel %vm573, 0.0, 1.0
      %v578 = vsel %vm574, 0.0, 1.0
      %v579 = vsel %vm575, 0.0, 1.0
      %vm580 = vcmp.gt.s32.totalorder %v548, 0
      %vm581 = vcmp.gt.s32.totalorder %v549, 0
      %vm582 = vcmp.gt.s32.totalorder %v550, 0
      %vm583 = vcmp.gt.s32.totalorder %v551, 0
      %vm584 = vcmp.lt.s32.totalorder %v548, 31
      %vm585 = vcmp.lt.s32.totalorder %v549, 31
      %vm586 = vcmp.lt.s32.totalorder %v550, 31
      %vm587 = vcmp.lt.s32.totalorder %v551, 31
      %v588 = vld [vmem:[%s514] sm:$0xf]
      %v589 = vld [vmem:[%s501] sm:$0xf]
      %v590 = vld [vmem:[%s501 + $0x4] sm:$0xf]
      %v591 = vld [vmem:[%s530] sm:$0xf]
      %v594 = vunpack.c.l.b16 %v589
      %v595 = vunpack.c.l.b16 %v590
      %v596 = vpack.c.b16 %v594, %v594
      %v597 = vpack.c.b16 %v595, %v595
      %v599 = vunpack.c.l.b16 %v591
      %v600 = vpack.c.b16 %v599, %v599
      %vm601 = vcmask 1043456
      %v604 = vsel %vm601, %v588, %v596
      %v608 = vsel %vm601, %v597, %v600
      %v610 = vunpack.c.l.bf16 %v604
      %v611 = vunpack.c.h.bf16 %v604
      %v612 = vunpack.c.l.bf16 %v608
      %v613 = vunpack.c.h.bf16 %v608
      %v614 = vmul.f32 %v610, %v576
      %v615 = vmul.f32 %v611, %v577
      %v616 = vmul.f32 %v612, %v578
      %v617 = vmul.f32 %v613, %v579
      %v618 = vld [vmem:[%s3] sm:$0xf]
      %v619 = vld [vmem:[%s3 + $0x4] sm:$0xf]
      %v620 = vld [vmem:[%s3 + $0x8] sm:$0xf]
      %v621 = vld [vmem:[%s3 + $0xc] sm:$0xf]
      %v622 = vld [vmem:[%s3 + $0x10] sm:$0xf]
      %v623 = vld [vmem:[%s3 + $0x14] sm:$0xf]
      %v624 = vld [vmem:[%s3 + $0x18] sm:$0xf]
      %v625 = vld [vmem:[%s3 + $0x1c] sm:$0xf]
      %v626 = vld [vmem:[%s3 + $0x20] sm:$0xf]
      %v627 = vld [vmem:[%s3 + $0x24] sm:$0xf]
      %v628 = vld [vmem:[%s3 + $0x28] sm:$0xf]
      %v629 = vld [vmem:[%s3 + $0x2c] sm:$0xf]
      %v630 = vld [vmem:[%s3 + $0x30] sm:$0xf]
      %v631 = vld [vmem:[%s3 + $0x34] sm:$0xf]
      %v632 = vld [vmem:[%s3 + $0x38] sm:$0xf]
      %v633 = vld [vmem:[%s3 + $0x3c] sm:$0xf]
      %v634 = vld [vmem:[%s3 + $0x40] sm:$0xf]
      %v635 = vld [vmem:[%s3 + $0x44] sm:$0xf]
      %v636 = vld [vmem:[%s3 + $0x48] sm:$0xf]
      %v637 = vld [vmem:[%s3 + $0x4c] sm:$0xf]
      %v638 = vld [vmem:[%s3 + $0x50] sm:$0xf]
      %v639 = vld [vmem:[%s3 + $0x54] sm:$0xf]
      %v640 = vld [vmem:[%s3 + $0x58] sm:$0xf]
      %v641 = vld [vmem:[%s3 + $0x5c] sm:$0xf]
      %v642 = vld [vmem:[%s3 + $0x60] sm:$0xf]
      %v643 = vld [vmem:[%s3 + $0x64] sm:$0xf]
      %v644 = vld [vmem:[%s3 + $0x68] sm:$0xf]
      %v645 = vld [vmem:[%s3 + $0x6c] sm:$0xf]
      %v646 = vld [vmem:[%s3 + $0x70] sm:$0xf]
      %v647 = vld [vmem:[%s3 + $0x74] sm:$0xf]
      %v648 = vld [vmem:[%s3 + $0x78] sm:$0xf]
      %v649 = vld [vmem:[%s3 + $0x7c] sm:$0xf]
      %v650 = vld [vmem:[%s3 + $0x80] sm:$0xf]
      %v651 = vld [vmem:[%s3 + $0x84] sm:$0xf]
      %v652 = vld [vmem:[%s3 + $0x88] sm:$0xf]
      %v653 = vld [vmem:[%s3 + $0x8c] sm:$0xf]
      %v654 = vld [vmem:[%s3 + $0x90] sm:$0xf]
      %v655 = vld [vmem:[%s3 + $0x94] sm:$0xf]
      %v656 = vld [vmem:[%s3 + $0x98] sm:$0xf]
      %v657 = vld [vmem:[%s3 + $0x9c] sm:$0xf]
      %v658 = vld [vmem:[%s3 + $0xa0] sm:$0xf]
      %v659 = vld [vmem:[%s3 + $0xa4] sm:$0xf]
      %v660 = vld [vmem:[%s3 + $0xa8] sm:$0xf]
      %v661 = vld [vmem:[%s3 + $0xac] sm:$0xf]
      %v662 = vld [vmem:[%s3 + $0xb0] sm:$0xf]
      %v663 = vld [vmem:[%s3 + $0xb4] sm:$0xf]
      %v664 = vld [vmem:[%s3 + $0xb8] sm:$0xf]
      %v665 = vld [vmem:[%s3 + $0xbc] sm:$0xf]
      %v666 = vld [vmem:[%s4] sm:$0x1]
      %v667 = vrot.slane %v614, 7
      %v668 = vrot.slane %v615, 7
      %v669 = vrot.slane %v616, 7
      %v670 = vrot.slane %v617, 7
      %vm671 = vcmp.lt.s32.totalorder %v548, 1
      %v672 = vsel %vm671, %v669, %v670
      %v673 = vsel %vm671, %v668, %v669
      %v674 = vsel %vm671, %v667, %v668
      %v675 = vsel %vm671, %v670, %v667
      %v676 = vsel %vm580, 1, 0
      %v677 = vsel %vm581, 1, 0
      %v678 = vsel %vm582, 1, 0
      %v679 = vsel %vm583, 1, 0
      %vm680 = vcmp.eq.s32.totalorder %v676, 1
      %vm681 = vcmp.eq.s32.totalorder %v677, 1
      %vm682 = vcmp.eq.s32.totalorder %v678, 1
      %vm683 = vcmp.eq.s32.totalorder %v679, 1
      %v684 = vsel %vm680, %v675, 0.0
      %v685 = vsel %vm681, %v674, 0.0
      %v686 = vsel %vm682, %v673, 0.0
      %v687 = vsel %vm683, %v672, 0.0
      %v688 = vrot.slane %v614, 1
      %v689 = vrot.slane %v615, 1
      %v690 = vrot.slane %v616, 1
      %v691 = vrot.slane %v617, 1
      %vm692 = vcmp.lt.s32.totalorder %v548, 7
      %v693 = vsel %vm692, %v690, %v691
      %v694 = vsel %vm692, %v689, %v690
      %v695 = vsel %vm692, %v688, %v689
      %v696 = vsel %vm692, %v691, %v688
      %v697 = vsel %vm584, 1, 0
      %v698 = vsel %vm585, 1, 0
      %v699 = vsel %vm586, 1, 0
      %v700 = vsel %vm587, 1, 0
      %vm701 = vcmp.eq.s32.totalorder %v697, 1
      %vm702 = vcmp.eq.s32.totalorder %v698, 1
      %vm703 = vcmp.eq.s32.totalorder %v699, 1
      %vm704 = vcmp.eq.s32.totalorder %v700, 1
      %v705 = vsel %vm701, %v695, 0.0
      %v706 = vsel %vm702, %v694, 0.0
      %v707 = vsel %vm703, %v693, 0.0
      %v708 = vsel %vm704, %v696, 0.0
      %v709 = vpack.c.bf16 %v685, %v684
      %v710 = vpack.c.bf16 %v615, %v614
      %v711 = vpack.c.bf16 %v706, %v705
      %v712 = vpack.c.bf16 %v687, %v686
      %v713 = vpack.c.bf16 %v617, %v616
      %v714 = vpack.c.bf16 %v708, %v707
      %v716 = vlaneseq
      %v717 = vshrl.u32 %v716, 7
      %v718 = vsub.s32 0, %v717
      %v719 = vrot.slane %v666, %v718
      %v769 = vunpack.c.l.b16 %v618
      %v770 = vunpack.c.l.b16 %v619
      %v771 = vunpack.c.l.b16 %v620
      %v772 = vunpack.c.l.b16 %v621
      %v773 = vunpack.c.l.b16 %v622
      %v774 = vunpack.c.l.b16 %v623
      %v775 = vunpack.c.l.b16 %v624
      %v776 = vunpack.c.l.b16 %v625
      %v777 = vunpack.c.l.b16 %v626
      %v778 = vunpack.c.l.b16 %v627
      %v779 = vunpack.c.l.b16 %v628
      %v780 = vunpack.c.l.b16 %v629
      %v781 = vunpack.c.l.b16 %v630
      %v782 = vunpack.c.l.b16 %v631
      %v783 = vunpack.c.l.b16 %v632
      %v784 = vunpack.c.l.b16 %v633
      %v785 = vunpack.c.l.b16 %v634
      %v786 = vunpack.c.l.b16 %v635
      %v787 = vunpack.c.l.b16 %v636
      %v788 = vunpack.c.l.b16 %v637
      %v789 = vunpack.c.l.b16 %v638
      %v790 = vunpack.c.l.b16 %v639
      %v791 = vunpack.c.l.b16 %v640
      %v792 = vunpack.c.l.b16 %v641
      %v793 = vunpack.c.l.b16 %v642
      %v794 = vunpack.c.l.b16 %v643
      %v795 = vunpack.c.l.b16 %v644
      %v796 = vunpack.c.l.b16 %v645
      %v797 = vunpack.c.l.b16 %v646
      %v798 = vunpack.c.l.b16 %v647
      %v799 = vunpack.c.l.b16 %v648
      %v800 = vunpack.c.l.b16 %v649
      %v801 = vunpack.c.l.b16 %v650
      %v802 = vunpack.c.l.b16 %v651
      %v803 = vunpack.c.l.b16 %v652
      %v804 = vunpack.c.l.b16 %v653
      %v805 = vunpack.c.l.b16 %v654
      %v806 = vunpack.c.l.b16 %v655
      %v807 = vunpack.c.l.b16 %v656
      %v808 = vunpack.c.l.b16 %v657
      %v809 = vunpack.c.l.b16 %v658
      %v810 = vunpack.c.l.b16 %v659
      %v811 = vunpack.c.l.b16 %v660
      %v812 = vunpack.c.l.b16 %v661
      %v813 = vunpack.c.l.b16 %v662
      %v814 = vunpack.c.l.b16 %v663
      %v815 = vunpack.c.l.b16 %v664
      %v816 = vunpack.c.l.b16 %v665
      %v817 = vpack.c.b16 %v770, %v769
      %v818 = vpack.c.b16 %v772, %v771
      %v819 = vpack.c.b16 %v774, %v773
      %v820 = vpack.c.b16 %v776, %v775
      %v821 = vpack.c.b16 %v778, %v777
      %v822 = vpack.c.b16 %v780, %v779
      %v823 = vpack.c.b16 %v782, %v781
      %v824 = vpack.c.b16 %v784, %v783
      %v825 = vpack.c.b16 %v786, %v785
      %v826 = vpack.c.b16 %v788, %v787
      %v827 = vpack.c.b16 %v790, %v789
      %v828 = vpack.c.b16 %v792, %v791
      %v829 = vpack.c.b16 %v794, %v793
      %v830 = vpack.c.b16 %v796, %v795
      %v831 = vpack.c.b16 %v798, %v797
      %v832 = vpack.c.b16 %v800, %v799
      %v833 = vpack.c.b16 %v802, %v801
      %v834 = vpack.c.b16 %v804, %v803
      %v835 = vpack.c.b16 %v806, %v805
      %v836 = vpack.c.b16 %v808, %v807
      %v837 = vpack.c.b16 %v810, %v809
      %v838 = vpack.c.b16 %v812, %v811
      %v839 = vpack.c.b16 %v814, %v813
      %v840 = vpack.c.b16 %v816, %v815
      %865 = vmatprep.subr.bf16.mxu0 0
      %866 = vmatpush1.bf16.msra.mxu0 %v817
      %867 = vmatprep.subr.bf16.mxu0 0
      %868 = vmatpush1.bf16.msra.mxu0 %v818
      %869 = vmatprep.subr.bf16.mxu0 0
      %870 = vmatpush1.bf16.msra.mxu0 %v819
      %871 = vmatprep.subr.bf16.mxu0 0
      %872 = vmatpush1.bf16.msra.mxu0 %v820
      %873 = vmatprep.subr.bf16.mxu0 0
      %874 = vmatpush1.bf16.msra.mxu0 %v821
      %875 = vmatprep.subr.bf16.mxu0 0
      %876 = vmatpush1.bf16.msra.mxu0 %v822
      %877 = vmatprep.subr.bf16.mxu0 0
      %878 = vmatpush1.bf16.msra.mxu0 %v823
      %879 = vmatprep.subr.bf16.mxu0 0
      %880 = vmatpush1.bf16.msra.mxu0 %v824
      %881 = vmatprep.subr.bf16.mxu0 0
      %882 = vmatpush1.bf16.msra.mxu0 %v825
      %883 = vmatprep.subr.bf16.mxu0 0
      %884 = vmatpush1.bf16.msra.mxu0 %v826
      %885 = vmatprep.subr.bf16.mxu0 0
      %886 = vmatpush1.bf16.msra.mxu0 %v827
      %887 = vmatprep.subr.bf16.mxu0 0
      %888 = vmatpush1.bf16.msra.mxu0 %v828
      %889 = vmatprep.subr.bf16.mxu0 0
      %890 = vmatpush1.bf16.msra.mxu0 %v829
      %891 = vmatprep.subr.bf16.mxu0 0
      %892 = vmatpush1.bf16.msra.mxu0 %v830
      %893 = vmatprep.subr.bf16.mxu0 0
      %894 = vmatpush1.bf16.msra.mxu0 %v831
      %895 = vmatprep.subr.bf16.mxu0 0
      %896 = vmatpush1.bf16.msra.mxu0 %v832
      %897 = vmatprep.mubr.bf16.mxu0 %v710
      %898 = vmatmul.mubr.bf16.gmra.mrb[0].mxu0 %v709
      %v899 = vpop.f32.mrb[0].mxu0
      %v900 = vadd.f32 %v719, %v899
      %v901 = vpop.f32.mrb[0].mxu0
      %v902 = vpop.f32.mrb[0].mxu0
      %v903 = vadd.f32 %v719, %v902
      %v904 = vpop.f32.mrb[0].mxu0
      %905 = vmatprep.mubr.bf16.mxu0 %v713
      %906 = vmatmul.mubr.bf16.gmra.mrb[0].mxu0 %v712
      %v907 = vpop.f32.mrb[0].mxu0
      %v908 = vadd.f32 %v719, %v907
      %v909 = vpop.f32.mrb[0].mxu0
      %v910 = vpop.f32.mrb[0].mxu0
      %v911 = vadd.f32 %v719, %v910
      %v912 = vpop.f32.mrb[0].mxu0
      %913 = vdwg.mxu0
      %914 = vmatprep.subr.bf16.mxu0 0
      %915 = vmatpush1.bf16.msra.mxu0 %v833
      %916 = vmatprep.subr.bf16.mxu0 0
      %917 = vmatpush1.bf16.msra.mxu0 %v834
      %918 = vmatprep.subr.bf16.mxu0 0
      %919 = vmatpush1.bf16.msra.mxu0 %v835
      %920 = vmatprep.subr.bf16.mxu0 0
      %921 = vmatpush1.bf16.msra.mxu0 %v836
      %922 = vmatprep.subr.bf16.mxu0 0
      %923 = vmatpush1.bf16.msra.mxu0 %v837
      %924 = vmatprep.subr.bf16.mxu0 0
      %925 = vmatpush1.bf16.msra.mxu0 %v838
      %926 = vmatprep.subr.bf16.mxu0 0
      %927 = vmatpush1.bf16.msra.mxu0 %v839
      %928 = vmatprep.subr.bf16.mxu0 0
      %929 = vmatpush1.bf16.msra.mxu0 %v840
      %930 = vmatprep.subr.bf16.mxu0 0
      %931 = vmatpush1.bf16.msra.mxu0 0
      %932 = vmatprep.subr.bf16.mxu0 0
      %933 = vmatpush1.bf16.msra.mxu0 0
      %934 = vmatprep.subr.bf16.mxu0 0
      %935 = vmatpush1.bf16.msra.mxu0 0
      %936 = vmatprep.subr.bf16.mxu0 0
      %937 = vmatpush1.bf16.msra.mxu0 0
      %938 = vmatprep.subr.bf16.mxu0 0
      %939 = vmatpush1.bf16.msra.mxu0 0
      %940 = vmatprep.subr.bf16.mxu0 0
      %941 = vmatpush1.bf16.msra.mxu0 0
      %942 = vmatprep.subr.bf16.mxu0 0
      %943 = vmatpush1.bf16.msra.mxu0 0
      %944 = vmatprep.subr.bf16.mxu0 0
      %945 = vmatpush1.bf16.msra.mxu0 0
      %946 = vmatprep.mubr.bf16.mxu0 0
      %947 = vmatmul.mubr.bf16.gmra.mrb[0].mxu0 %v711
      %v948 = vpop.f32.mrb[0].mxu0
      %v949 = vadd.f32 %v900, %v948
      %v950 = vpop.f32.mrb[0].mxu0
      %v951 = vpop.f32.mrb[0].mxu0
      %v952 = vadd.f32 %v903, %v951
      %v953 = vpop.f32.mrb[0].mxu0
      %954 = vmatprep.mubr.bf16.mxu0 0
      %955 = vmatmul.mubr.bf16.gmra.mrb[0].mxu0 %v714
      %v956 = vpop.f32.mrb[0].mxu0
      %v957 = vadd.f32 %v908, %v956
      %v958 = vpop.f32.mrb[0].mxu0
      %v959 = vpop.f32.mrb[0].mxu0
      %v960 = vadd.f32 %v911, %v959
      %v961 = vpop.f32.mrb[0].mxu0
      %962 = vdwg.mxu0
      %v963 = vmul.f32 %v949, %v576
      %v964 = vmul.f32 %v952, %v577
      %v965 = vmul.f32 %v957, %v578
      %v966 = vmul.f32 %v960, %v579
      %v967 = vmax.f32 %v963, 0.0
      %v968 = vmax.f32 %v964, 0.0
      %v969 = vmax.f32 %v965, 0.0
      %v970 = vmax.f32 %v966, 0.0
      %v971 = vld [vmem:[%s5] sm:$0xf]
      %v972 = vld [vmem:[%s5 + $0x4] sm:$0xf]
      %v973 = vld [vmem:[%s5 + $0x8] sm:$0xf]
      %v974 = vld [vmem:[%s5 + $0xc] sm:$0xf]
      %v975 = vld [vmem:[%s5 + $0x10] sm:$0xf]
      %v976 = vld [vmem:[%s5 + $0x14] sm:$0xf]
      %v977 = vld [vmem:[%s5 + $0x18] sm:$0xf]
      %v978 = vld [vmem:[%s5 + $0x1c] sm:$0xf]
      %v979 = vld [vmem:[%s5 + $0x20] sm:$0xf]
      %v980 = vld [vmem:[%s5 + $0x24] sm:$0xf]
      %v981 = vld [vmem:[%s5 + $0x28] sm:$0xf]
      %v982 = vld [vmem:[%s5 + $0x2c] sm:$0xf]
      %v983 = vld [vmem:[%s5 + $0x30] sm:$0xf]
      %v984 = vld [vmem:[%s5 + $0x34] sm:$0xf]
      %v985 = vld [vmem:[%s5 + $0x38] sm:$0xf]
      %v986 = vld [vmem:[%s5 + $0x3c] sm:$0xf]
      %v987 = vld [vmem:[%s5 + $0x40] sm:$0xf]
      %v988 = vld [vmem:[%s5 + $0x44] sm:$0xf]
      %v989 = vld [vmem:[%s5 + $0x48] sm:$0xf]
      %v990 = vld [vmem:[%s5 + $0x4c] sm:$0xf]
      %v991 = vld [vmem:[%s5 + $0x50] sm:$0xf]
      %v992 = vld [vmem:[%s5 + $0x54] sm:$0xf]
      %v993 = vld [vmem:[%s5 + $0x58] sm:$0xf]
      %v994 = vld [vmem:[%s5 + $0x5c] sm:$0xf]
      %v995 = vld [vmem:[%s5 + $0x60] sm:$0xf]
      %v996 = vld [vmem:[%s5 + $0x64] sm:$0xf]
      %v997 = vld [vmem:[%s5 + $0x68] sm:$0xf]
      %v998 = vld [vmem:[%s5 + $0x6c] sm:$0xf]
      %v999 = vld [vmem:[%s5 + $0x70] sm:$0xf]
      %v1000 = vld [vmem:[%s5 + $0x74] sm:$0xf]
      %v1001 = vld [vmem:[%s5 + $0x78] sm:$0xf]
      %v1002 = vld [vmem:[%s5 + $0x7c] sm:$0xf]
      %v1003 = vld [vmem:[%s5 + $0x80] sm:$0xf]
      %v1004 = vld [vmem:[%s5 + $0x84] sm:$0xf]
      %v1005 = vld [vmem:[%s5 + $0x88] sm:$0xf]
      %v1006 = vld [vmem:[%s5 + $0x8c] sm:$0xf]
      %v1007 = vld [vmem:[%s5 + $0x90] sm:$0xf]
      %v1008 = vld [vmem:[%s5 + $0x94] sm:$0xf]
      %v1009 = vld [vmem:[%s5 + $0x98] sm:$0xf]
      %v1010 = vld [vmem:[%s5 + $0x9c] sm:$0xf]
      %v1011 = vld [vmem:[%s5 + $0xa0] sm:$0xf]
      %v1012 = vld [vmem:[%s5 + $0xa4] sm:$0xf]
      %v1013 = vld [vmem:[%s5 + $0xa8] sm:$0xf]
      %v1014 = vld [vmem:[%s5 + $0xac] sm:$0xf]
      %v1015 = vld [vmem:[%s5 + $0xb0] sm:$0xf]
      %v1016 = vld [vmem:[%s5 + $0xb4] sm:$0xf]
      %v1017 = vld [vmem:[%s5 + $0xb8] sm:$0xf]
      %v1018 = vld [vmem:[%s5 + $0xbc] sm:$0xf]
      %v1019 = vld [vmem:[%s6] sm:$0x1]
      %v1020 = vrot.slane %v967, 7
      %v1021 = vrot.slane %v968, 7
      %v1022 = vrot.slane %v969, 7
      %v1023 = vrot.slane %v970, 7
      %v1024 = vsel %vm671, %v1022, %v1023
      %v1025 = vsel %vm671, %v1021, %v1022
      %v1026 = vsel %vm671, %v1020, %v1021
      %v1027 = vsel %vm671, %v1023, %v1020
      %v1028 = vsel %vm680, %v1027, 0.0
      %v1029 = vsel %vm681, %v1026, 0.0
      %v1030 = vsel %vm682, %v1025, 0.0
      %v1031 = vsel %vm683, %v1024, 0.0
      %v1032 = vrot.slane %v967, 1
      %v1033 = vrot.slane %v968, 1
      %v1034 = vrot.slane %v969, 1
      %v1035 = vrot.slane %v970, 1
      %v1036 = vsel %vm692, %v1034, %v1035
      %v1037 = vsel %vm692, %v1033, %v1034
      %v1038 = vsel %vm692, %v1032, %v1033
      %v1039 = vsel %vm692, %v1035, %v1032
      %v1040 = vsel %vm701, %v1038, 0.0
      %v1041 = vsel %vm702, %v1037, 0.0
      %v1042 = vsel %vm703, %v1036, 0.0
      %v1043 = vsel %vm704, %v1039, 0.0
      %v1044 = vpack.c.bf16 %v1029, %v1028
      %v1045 = vpack.c.bf16 %v968, %v967
      %v1046 = vpack.c.bf16 %v1041, %v1040
      %v1047 = vpack.c.bf16 %v1031, %v1030
      %v1048 = vpack.c.bf16 %v970, %v969
      %v1049 = vpack.c.bf16 %v1043, %v1042
      %v1051 = vlaneseq
      %v1052 = vshrl.u32 %v1051, 7
      %v1053 = vsub.s32 0, %v1052
      %v1054 = vrot.slane %v1019, %v1053
      %v1104 = vunpack.c.l.b16 %v971
      %v1105 = vunpack.c.l.b16 %v972
      %v1106 = vunpack.c.l.b16 %v973
      %v1107 = vunpack.c.l.b16 %v974
      %v1108 = vunpack.c.l.b16 %v975
      %v1109 = vunpack.c.l.b16 %v976
      %v1110 = vunpack.c.l.b16 %v977
      %v1111 = vunpack.c.l.b16 %v978
      %v1112 = vunpack.c.l.b16 %v979
      %v1113 = vunpack.c.l.b16 %v980
      %v1114 = vunpack.c.l.b16 %v981
      %v1115 = vunpack.c.l.b16 %v982
      %v1116 = vunpack.c.l.b16 %v983
      %v1117 = vunpack.c.l.b16 %v984
      %v1118 = vunpack.c.l.b16 %v985
      %v1119 = vunpack.c.l.b16 %v986
      %v1120 = vunpack.c.l.b16 %v987
      %v1121 = vunpack.c.l.b16 %v988
      %v1122 = vunpack.c.l.b16 %v989
      %v1123 = vunpack.c.l.b16 %v990
      %v1124 = vunpack.c.l.b16 %v991
      %v1125 = vunpack.c.l.b16 %v992
      %v1126 = vunpack.c.l.b16 %v993
      %v1127 = vunpack.c.l.b16 %v994
      %v1128 = vunpack.c.l.b16 %v995
      %v1129 = vunpack.c.l.b16 %v996
      %v1130 = vunpack.c.l.b16 %v997
      %v1131 = vunpack.c.l.b16 %v998
      %v1132 = vunpack.c.l.b16 %v999
      %v1133 = vunpack.c.l.b16 %v1000
      %v1134 = vunpack.c.l.b16 %v1001
      %v1135 = vunpack.c.l.b16 %v1002
      %v1136 = vunpack.c.l.b16 %v1003
      %v1137 = vunpack.c.l.b16 %v1004
      %v1138 = vunpack.c.l.b16 %v1005
      %v1139 = vunpack.c.l.b16 %v1006
      %v1140 = vunpack.c.l.b16 %v1007
      %v1141 = vunpack.c.l.b16 %v1008
      %v1142 = vunpack.c.l.b16 %v1009
      %v1143 = vunpack.c.l.b16 %v1010
      %v1144 = vunpack.c.l.b16 %v1011
      %v1145 = vunpack.c.l.b16 %v1012
      %v1146 = vunpack.c.l.b16 %v1013
      %v1147 = vunpack.c.l.b16 %v1014
      %v1148 = vunpack.c.l.b16 %v1015
      %v1149 = vunpack.c.l.b16 %v1016
      %v1150 = vunpack.c.l.b16 %v1017
      %v1151 = vunpack.c.l.b16 %v1018
      %v1152 = vpack.c.b16 %v1105, %v1104
      %v1153 = vpack.c.b16 %v1107, %v1106
      %v1154 = vpack.c.b16 %v1109, %v1108
      %v1155 = vpack.c.b16 %v1111, %v1110
      %v1156 = vpack.c.b16 %v1113, %v1112
      %v1157 = vpack.c.b16 %v1115, %v1114
      %v1158 = vpack.c.b16 %v1117, %v1116
      %v1159 = vpack.c.b16 %v1119, %v1118
      %v1160 = vpack.c.b16 %v1121, %v1120
      %v1161 = vpack.c.b16 %v1123, %v1122
      %v1162 = vpack.c.b16 %v1125, %v1124
      %v1163 = vpack.c.b16 %v1127, %v1126
      %v1164 = vpack.c.b16 %v1129, %v1128
      %v1165 = vpack.c.b16 %v1131, %v1130
      %v1166 = vpack.c.b16 %v1133, %v1132
      %v1167 = vpack.c.b16 %v1135, %v1134
      %v1168 = vpack.c.b16 %v1137, %v1136
      %v1169 = vpack.c.b16 %v1139, %v1138
      %v1170 = vpack.c.b16 %v1141, %v1140
      %v1171 = vpack.c.b16 %v1143, %v1142
      %v1172 = vpack.c.b16 %v1145, %v1144
      %v1173 = vpack.c.b16 %v1147, %v1146
      %v1174 = vpack.c.b16 %v1149, %v1148
      %v1175 = vpack.c.b16 %v1151, %v1150
      %1200 = vmatprep.subr.bf16.mxu0 0
      %1201 = vmatpush1.bf16.msra.mxu0 %v1152
      %1202 = vmatprep.subr.bf16.mxu0 0
      %1203 = vmatpush1.bf16.msra.mxu0 %v1153
      %1204 = vmatprep.subr.bf16.mxu0 0
      %1205 = vmatpush1.bf16.msra.mxu0 %v1154
      %1206 = vmatprep.subr.bf16.mxu0 0
      %1207 = vmatpush1.bf16.msra.mxu0 %v1155
      %1208 = vmatprep.subr.bf16.mxu0 0
      %1209 = vmatpush1.bf16.msra.mxu0 %v1156
      %1210 = vmatprep.subr.bf16.mxu0 0
      %1211 = vmatpush1.bf16.msra.mxu0 %v1157
      %1212 = vmatprep.subr.bf16.mxu0 0
      %1213 = vmatpush1.bf16.msra.mxu0 %v1158
      %1214 = vmatprep.subr.bf16.mxu0 0
      %1215 = vmatpush1.bf16.msra.mxu0 %v1159
      %1216 = vmatprep.subr.bf16.mxu0 0
      %1217 = vmatpush1.bf16.msra.mxu0 %v1160
      %1218 = vmatprep.subr.bf16.mxu0 0
      %1219 = vmatpush1.bf16.msra.mxu0 %v1161
      %1220 = vmatprep.subr.bf16.mxu0 0
      %1221 = vmatpush1.bf16.msra.mxu0 %v1162
      %1222 = vmatprep.subr.bf16.mxu0 0
      %1223 = vmatpush1.bf16.msra.mxu0 %v1163
      %1224 = vmatprep.subr.bf16.mxu0 0
      %1225 = vmatpush1.bf16.msra.mxu0 %v1164
      %1226 = vmatprep.subr.bf16.mxu0 0
      %1227 = vmatpush1.bf16.msra.mxu0 %v1165
      %1228 = vmatprep.subr.bf16.mxu0 0
      %1229 = vmatpush1.bf16.msra.mxu0 %v1166
      %1230 = vmatprep.subr.bf16.mxu0 0
      %1231 = vmatpush1.bf16.msra.mxu0 %v1167
      %1232 = vmatprep.mubr.bf16.mxu0 %v1045
      %1233 = vmatmul.mubr.bf16.gmra.mrb[0].mxu0 %v1044
      %v1234 = vpop.f32.mrb[0].mxu0
      %v1235 = vadd.f32 %v1054, %v1234
      %v1236 = vpop.f32.mrb[0].mxu0
      %v1237 = vpop.f32.mrb[0].mxu0
      %v1238 = vadd.f32 %v1054, %v1237
      %v1239 = vpop.f32.mrb[0].mxu0
      %1240 = vmatprep.mubr.bf16.mxu0 %v1048
      %1241 = vmatmul.mubr.bf16.gmra.mrb[0].mxu0 %v1047
      %v1242 = vpop.f32.mrb[0].mxu0
      %v1243 = vadd.f32 %v1054, %v1242
      %v1244 = vpop.f32.mrb[0].mxu0
      %v1245 = vpop.f32.mrb[0].mxu0
      %v1246 = vadd.f32 %v1054, %v1245
      %v1247 = vpop.f32.mrb[0].mxu0
      %1248 = vdwg.mxu0
      %1249 = vmatprep.subr.bf16.mxu0 0
      %1250 = vmatpush1.bf16.msra.mxu0 %v1168
      %1251 = vmatprep.subr.bf16.mxu0 0
      %1252 = vmatpush1.bf16.msra.mxu0 %v1169
      %1253 = vmatprep.subr.bf16.mxu0 0
      %1254 = vmatpush1.bf16.msra.mxu0 %v1170
      %1255 = vmatprep.subr.bf16.mxu0 0
      %1256 = vmatpush1.bf16.msra.mxu0 %v1171
      %1257 = vmatprep.subr.bf16.mxu0 0
      %1258 = vmatpush1.bf16.msra.mxu0 %v1172
      %1259 = vmatprep.subr.bf16.mxu0 0
      %1260 = vmatpush1.bf16.msra.mxu0 %v1173
      %1261 = vmatprep.subr.bf16.mxu0 0
      %1262 = vmatpush1.bf16.msra.mxu0 %v1174
      %1263 = vmatprep.subr.bf16.mxu0 0
      %1264 = vmatpush1.bf16.msra.mxu0 %v1175
      %1265 = vmatprep.subr.bf16.mxu0 0
      %1266 = vmatpush1.bf16.msra.mxu0 0
      %1267 = vmatprep.subr.bf16.mxu0 0
      %1268 = vmatpush1.bf16.msra.mxu0 0
      %1269 = vmatprep.subr.bf16.mxu0 0
      %1270 = vmatpush1.bf16.msra.mxu0 0
      %1271 = vmatprep.subr.bf16.mxu0 0
      %1272 = vmatpush1.bf16.msra.mxu0 0
      %1273 = vmatprep.subr.bf16.mxu0 0
      %1274 = vmatpush1.bf16.msra.mxu0 0
      %1275 = vmatprep.subr.bf16.mxu0 0
      %1276 = vmatpush1.bf16.msra.mxu0 0
      %1277 = vmatprep.subr.bf16.mxu0 0
      %1278 = vmatpush1.bf16.msra.mxu0 0
      %1279 = vmatprep.subr.bf16.mxu0 0
      %1280 = vmatpush1.bf16.msra.mxu0 0
      %1281 = vmatprep.mubr.bf16.mxu0 0
      %1282 = vmatmul.mubr.bf16.gmra.mrb[0].mxu0 %v1046
      %v1283 = vpop.f32.mrb[0].mxu0
      %v1284 = vadd.f32 %v1235, %v1283
      %v1285 = vpop.f32.mrb[0].mxu0
      %v1286 = vpop.f32.mrb[0].mxu0
      %v1287 = vadd.f32 %v1238, %v1286
      %v1288 = vpop.f32.mrb[0].mxu0
      %1289 = vmatprep.mubr.bf16.mxu0 0
      %1290 = vmatmul.mubr.bf16.gmra.mrb[0].mxu0 %v1049
      %v1291 = vpop.f32.mrb[0].mxu0
      %v1292 = vadd.f32 %v1243, %v1291
      %v1293 = vpop.f32.mrb[0].mxu0
      %v1294 = vpop.f32.mrb[0].mxu0
      %v1295 = vadd.f32 %v1246, %v1294
      %v1296 = vpop.f32.mrb[0].mxu0
      %1297 = vdwg.mxu0
      %v1298 = vmax.f32 %v1284, 0.0
      %v1299 = vmax.f32 %v1287, 0.0
      %v1300 = vmax.f32 %v1292, 0.0
      %v1301 = vmax.f32 %v1295, 0.0
      %v1302 = vpack.c.bf16 %v1299, %v1298
      %v1303 = vpack.c.bf16 %v1301, %v1300
      %v1304 = vld [vmem:[%s7] sm:$0xf]
      %v1305 = vld [vmem:[%s7 + $0x4] sm:$0xf]
      %v1306 = vld [vmem:[%s7 + $0x8] sm:$0xf]
      %v1307 = vld [vmem:[%s7 + $0xc] sm:$0xf]
      %v1308 = vld [vmem:[%s7 + $0x10] sm:$0xf]
      %v1309 = vld [vmem:[%s7 + $0x14] sm:$0xf]
      %v1310 = vld [vmem:[%s7 + $0x18] sm:$0xf]
      %v1311 = vld [vmem:[%s7 + $0x1c] sm:$0xf]
      %v1312 = vld [vmem:[%s7 + $0x20] sm:$0xf]
      %v1313 = vld [vmem:[%s7 + $0x24] sm:$0xf]
      %v1314 = vld [vmem:[%s7 + $0x28] sm:$0xf]
      %v1315 = vld [vmem:[%s7 + $0x2c] sm:$0xf]
      %v1316 = vld [vmem:[%s7 + $0x30] sm:$0xf]
      %v1317 = vld [vmem:[%s7 + $0x34] sm:$0xf]
      %v1318 = vld [vmem:[%s7 + $0x38] sm:$0xf]
      %v1319 = vld [vmem:[%s7 + $0x3c] sm:$0xf]
      %v1320 = vld [vmem:[%s8] sm:$0x1]
      %v1322 = vlaneseq
      %v1323 = vshrl.u32 %v1322, 7
      %v1324 = vsub.s32 0, %v1323
      %v1325 = vrot.slane %v1320, %v1324
      %v1343 = vunpack.c.l.b16 %v1304
      %v1344 = vunpack.c.l.b16 %v1305
      %v1345 = vunpack.c.l.b16 %v1306
      %v1346 = vunpack.c.l.b16 %v1307
      %v1347 = vunpack.c.l.b16 %v1308
      %v1348 = vunpack.c.l.b16 %v1309
      %v1349 = vunpack.c.l.b16 %v1310
      %v1350 = vunpack.c.l.b16 %v1311
      %v1351 = vunpack.c.l.b16 %v1312
      %v1352 = vunpack.c.l.b16 %v1313
      %v1353 = vunpack.c.l.b16 %v1314
      %v1354 = vunpack.c.l.b16 %v1315
      %v1355 = vunpack.c.l.b16 %v1316
      %v1356 = vunpack.c.l.b16 %v1317
      %v1357 = vunpack.c.l.b16 %v1318
      %v1358 = vunpack.c.l.b16 %v1319
      %v1359 = vpack.c.b16 %v1344, %v1343
      %v1360 = vpack.c.b16 %v1346, %v1345
      %v1361 = vpack.c.b16 %v1348, %v1347
      %v1362 = vpack.c.b16 %v1350, %v1349
      %v1363 = vpack.c.b16 %v1352, %v1351
      %v1364 = vpack.c.b16 %v1354, %v1353
      %v1365 = vpack.c.b16 %v1356, %v1355
      %v1366 = vpack.c.b16 %v1358, %v1357
      %1375 = vmatprep.subr.bf16.mxu0 0
      %1376 = vmatpush1.bf16.msra.mxu0 %v1359
      %1377 = vmatprep.subr.bf16.mxu0 0
      %1378 = vmatpush1.bf16.msra.mxu0 %v1360
      %1379 = vmatprep.subr.bf16.mxu0 0
      %1380 = vmatpush1.bf16.msra.mxu0 %v1361
      %1381 = vmatprep.subr.bf16.mxu0 0
      %1382 = vmatpush1.bf16.msra.mxu0 %v1362
      %1383 = vmatprep.subr.bf16.mxu0 0
      %1384 = vmatpush1.bf16.msra.mxu0 %v1363
      %1385 = vmatprep.subr.bf16.mxu0 0
      %1386 = vmatpush1.bf16.msra.mxu0 %v1364
      %1387 = vmatprep.subr.bf16.mxu0 0
      %1388 = vmatpush1.bf16.msra.mxu0 %v1365
      %1389 = vmatprep.subr.bf16.mxu0 0
      %1390 = vmatpush1.bf16.msra.mxu0 %v1366
      %1391 = vmatprep.subr.bf16.mxu0 0
      %1392 = vmatpush1.bf16.msra.mxu0 0
      %1393 = vmatprep.subr.bf16.mxu0 0
      %1394 = vmatpush1.bf16.msra.mxu0 0
      %1395 = vmatprep.subr.bf16.mxu0 0
      %1396 = vmatpush1.bf16.msra.mxu0 0
      %1397 = vmatprep.subr.bf16.mxu0 0
      %1398 = vmatpush1.bf16.msra.mxu0 0
      %1399 = vmatprep.subr.bf16.mxu0 0
      %1400 = vmatpush1.bf16.msra.mxu0 0
      %1401 = vmatprep.subr.bf16.mxu0 0
      %1402 = vmatpush1.bf16.msra.mxu0 0
      %1403 = vmatprep.subr.bf16.mxu0 0
      %1404 = vmatpush1.bf16.msra.mxu0 0
      %1405 = vmatprep.subr.bf16.mxu0 0
      %1406 = vmatpush1.bf16.msra.mxu0 0
      %1407 = vmatprep.mubr.bf16.mxu0 0
      %1408 = vmatmul.mubr.bf16.gmra.mrb[0].mxu0 %v1302
      %v1409 = vpop.f32.mrb[0].mxu0
      %v1410 = vadd.f32 %v1325, %v1409
      %v1411 = vpop.f32.mrb[0].mxu0
      %v1412 = vpop.f32.mrb[0].mxu0
      %v1413 = vadd.f32 %v1325, %v1412
      %v1414 = vpop.f32.mrb[0].mxu0
      %1415 = vmatprep.mubr.bf16.mxu0 0
      %1416 = vmatmul.mubr.bf16.gmra.mrb[0].mxu0 %v1303
      %v1417 = vpop.f32.mrb[0].mxu0
      %v1418 = vadd.f32 %v1325, %v1417
      %v1419 = vpop.f32.mrb[0].mxu0
      %v1420 = vpop.f32.mrb[0].mxu0
      %v1421 = vadd.f32 %v1325, %v1420
      %v1422 = vpop.f32.mrb[0].mxu0
      %1423 = vdwg.mxu0
      %v1424 = vadd.f32 %v963, %v1410
      %v1425 = vadd.f32 %v964, %v1413
      %v1426 = vadd.f32 %v965, %v1418
      %v1427 = vadd.f32 %v966, %v1421
      %v1428 = vmul.f32 %v1424, %v576
      %v1429 = vmul.f32 %v1425, %v577
      %v1430 = vmul.f32 %v1426, %v578
      %v1431 = vmul.f32 %v1427, %v579
      %v1432 = vld [vmem:[%s9] sm:$0xff]
      %v1433 = vld [vmem:[%s9 + $0x8] sm:$0xff]
      %v1434 = vld [vmem:[%s9 + $0x10] sm:$0xff]
      %v1435 = vld [vmem:[%s9 + $0x18] sm:$0xff]
      %v1436 = vld [vmem:[%s9 + $0x20] sm:$0xff]
      %v1437 = vld [vmem:[%s9 + $0x28] sm:$0xff]
      %v1438 = vld [vmem:[%s9 + $0x30] sm:$0xff]
      %v1439 = vld [vmem:[%s9 + $0x38] sm:$0xff]
      %v1440 = vld [vmem:[%s9 + $0x40] sm:$0xff]
      %v1441 = vld [vmem:[%s9 + $0x48] sm:$0xff]
      %v1442 = vld [vmem:[%s9 + $0x50] sm:$0xff]
      %v1443 = vld [vmem:[%s9 + $0x58] sm:$0xff]
      %v1444 = vld [vmem:[%s9 + $0x60] sm:$0xff]
      %v1445 = vld [vmem:[%s9 + $0x68] sm:$0xff]
      %v1446 = vld [vmem:[%s9 + $0x70] sm:$0xff]
      %v1447 = vld [vmem:[%s9 + $0x78] sm:$0xff]
      %v1448 = vld [vmem:[%s9 + $0x80] sm:$0xff]
      %v1449 = vld [vmem:[%s9 + $0x88] sm:$0xff]
      %v1450 = vld [vmem:[%s9 + $0x90] sm:$0xff]
      %v1451 = vld [vmem:[%s9 + $0x98] sm:$0xff]
      %v1452 = vld [vmem:[%s9 + $0xa0] sm:$0xff]
      %v1453 = vld [vmem:[%s9 + $0xa8] sm:$0xff]
      %v1454 = vld [vmem:[%s9 + $0xb0] sm:$0xff]
      %v1455 = vld [vmem:[%s9 + $0xb8] sm:$0xff]
      %v1456 = vld [vmem:[%s9 + $0xc0] sm:$0xff]
      %v1457 = vld [vmem:[%s9 + $0xc8] sm:$0xff]
      %v1458 = vld [vmem:[%s9 + $0xd0] sm:$0xff]
      %v1459 = vld [vmem:[%s9 + $0xd8] sm:$0xff]
      %v1460 = vld [vmem:[%s9 + $0xe0] sm:$0xff]
      %v1461 = vld [vmem:[%s9 + $0xe8] sm:$0xff]
      %v1462 = vld [vmem:[%s9 + $0xf0] sm:$0xff]
      %v1463 = vld [vmem:[%s9 + $0xf8] sm:$0xff]
      %v1464 = vld [vmem:[%s9 + $0x100] sm:$0xff]
      %v1465 = vld [vmem:[%s9 + $0x108] sm:$0xff]
      %v1466 = vld [vmem:[%s9 + $0x110] sm:$0xff]
      %v1467 = vld [vmem:[%s9 + $0x118] sm:$0xff]
      %v1468 = vld [vmem:[%s9 + $0x120] sm:$0xff]
      %v1469 = vld [vmem:[%s9 + $0x128] sm:$0xff]
      %v1470 = vld [vmem:[%s9 + $0x130] sm:$0xff]
      %v1471 = vld [vmem:[%s9 + $0x138] sm:$0xff]
      %v1472 = vld [vmem:[%s9 + $0x140] sm:$0xff]
      %v1473 = vld [vmem:[%s9 + $0x148] sm:$0xff]
      %v1474 = vld [vmem:[%s9 + $0x150] sm:$0xff]
      %v1475 = vld [vmem:[%s9 + $0x158] sm:$0xff]
      %v1476 = vld [vmem:[%s9 + $0x160] sm:$0xff]
      %v1477 = vld [vmem:[%s9 + $0x168] sm:$0xff]
      %v1478 = vld [vmem:[%s9 + $0x170] sm:$0xff]
      %v1479 = vld [vmem:[%s9 + $0x178] sm:$0xff]
      %v1480 = vld [vmem:[%s10] sm:$0x3]
      %v1481 = vrot.slane %v1428, 7
      %v1482 = vrot.slane %v1429, 7
      %v1483 = vrot.slane %v1430, 7
      %v1484 = vrot.slane %v1431, 7
      %v1485 = vsel %vm671, %v1483, %v1484
      %v1486 = vsel %vm671, %v1482, %v1483
      %v1487 = vsel %vm671, %v1481, %v1482
      %v1488 = vsel %vm671, %v1484, %v1481
      %v1489 = vsel %vm680, %v1488, 0.0
      %v1490 = vsel %vm681, %v1487, 0.0
      %v1491 = vsel %vm682, %v1486, 0.0
      %v1492 = vsel %vm683, %v1485, 0.0
      %v1493 = vrot.slane %v1428, 1
      %v1494 = vrot.slane %v1429, 1
      %v1495 = vrot.slane %v1430, 1
      %v1496 = vrot.slane %v1431, 1
      %v1497 = vsel %vm692, %v1495, %v1496
      %v1498 = vsel %vm692, %v1494, %v1495
      %v1499 = vsel %vm692, %v1493, %v1494
      %v1500 = vsel %vm692, %v1496, %v1493
      %v1501 = vsel %vm701, %v1499, 0.0
      %v1502 = vsel %vm702, %v1498, 0.0
      %v1503 = vsel %vm703, %v1497, 0.0
      %v1504 = vsel %vm704, %v1500, 0.0
      %v1505 = vpack.c.bf16 %v1490, %v1489
      %v1506 = vpack.c.bf16 %v1429, %v1428
      %v1507 = vpack.c.bf16 %v1502, %v1501
      %v1508 = vpack.c.bf16 %v1492, %v1491
      %v1509 = vpack.c.bf16 %v1431, %v1430
      %v1510 = vpack.c.bf16 %v1504, %v1503
      %v1512 = vlaneseq
      %v1513 = vshrl.u32 %v1512, 7
      %v1514 = vsub.s32 0, %v1513
      %v1515 = vrot.slane %v1480, %v1514
      %v1516 = vlaneseq
      %v1517 = vshrl.u32 %v1516, 7
      %v1518 = vsub.s32 1, %v1517
      %v1519 = vrot.slane %v1480, %v1518
      %v1570 = vunpack.c.l.b16 %v1432
      %v1571 = vunpack.c.h.b16 %v1432
      %v1572 = vunpack.c.l.b16 %v1433
      %v1573 = vunpack.c.h.b16 %v1433
      %v1574 = vunpack.c.l.b16 %v1434
      %v1575 = vunpack.c.h.b16 %v1434
      %v1576 = vunpack.c.l.b16 %v1435
      %v1577 = vunpack.c.h.b16 %v1435
      %v1578 = vunpack.c.l.b16 %v1436
      %v1579 = vunpack.c.h.b16 %v1436
      %v1580 = vunpack.c.l.b16 %v1437
      %v1581 = vunpack.c.h.b16 %v1437
      %v1582 = vunpack.c.l.b16 %v1438
      %v1583 = vunpack.c.h.b16 %v1438
      %v1584 = vunpack.c.l.b16 %v1439
      %v1585 = vunpack.c.h.b16 %v1439
      %v1586 = vunpack.c.l.b16 %v1440
      %v1587 = vunpack.c.h.b16 %v1440
      %v1588 = vunpack.c.l.b16 %v1441
      %v1589 = vunpack.c.h.b16 %v1441
      %v1590 = vunpack.c.l.b16 %v1442
      %v1591 = vunpack.c.h.b16 %v1442
      %v1592 = vunpack.c.l.b16 %v1443
      %v1593 = vunpack.c.h.b16 %v1443
      %v1594 = vunpack.c.l.b16 %v1444
      %v1595 = vunpack.c.h.b16 %v1444
      %v1596 = vunpack.c.l.b16 %v1445
      %v1597 = vunpack.c.h.b16 %v1445
      %v1598 = vunpack.c.l.b16 %v1446
      %v1599 = vunpack.c.h.b16 %v1446
      %v1600 = vunpack.c.l.b16 %v1447
      %v1601 = vunpack.c.h.b16 %v1447
      %v1602 = vunpack.c.l.b16 %v1448
      %v1603 = vunpack.c.h.b16 %v1448
      %v1604 = vunpack.c.l.b16 %v1449
      %v1605 = vunpack.c.h.b16 %v1449
      %v1606 = vunpack.c.l.b16 %v1450
      %v1607 = vunpack.c.h.b16 %v1450
      %v1608 = vunpack.c.l.b16 %v1451
      %v1609 = vunpack.c.h.b16 %v1451
      %v1610 = vunpack.c.l.b16 %v1452
      %v1611 = vunpack.c.h.b16 %v1452
      %v1612 = vunpack.c.l.b16 %v1453
      %v1613 = vunpack.c.h.b16 %v1453
      %v1614 = vunpack.c.l.b16 %v1454
      %v1615 = vunpack.c.h.b16 %v1454
      %v1616 = vunpack.c.l.b16 %v1455
      %v1617 = vunpack.c.h.b16 %v1455
      %v1618 = vunpack.c.l.b16 %v1456
      %v1619 = vunpack.c.h.b16 %v1456
      %v1620 = vunpack.c.l.b16 %v1457
      %v1621 = vunpack.c.h.b16 %v1457
      %v1622 = vunpack.c.l.b16 %v1458
      %v1623 = vunpack.c.h.b16 %v1458
      %v1624 = vunpack.c.l.b16 %v1459
      %v1625 = vunpack.c.h.b16 %v1459
      %v1626 = vunpack.c.l.b16 %v1460
      %v1627 = vunpack.c.h.b16 %v1460
      %v1628 = vunpack.c.l.b16 %v1461
      %v1629 = vunpack.c.h.b16 %v1461
      %v1630 = vunpack.c.l.b16 %v1462
      %v1631 = vunpack.c.h.b16 %v1462
      %v1632 = vunpack.c.l.b16 %v1463
      %v1633 = vunpack.c.h.b16 %v1463
      %v1634 = vunpack.c.l.b16 %v1464
      %v1635 = vunpack.c.h.b16 %v1464
      %v1636 = vunpack.c.l.b16 %v1465
      %v1637 = vunpack.c.h.b16 %v1465
      %v1638 = vunpack.c.l.b16 %v1466
      %v1639 = vunpack.c.h.b16 %v1466
      %v1640 = vunpack.c.l.b16 %v1467
      %v1641 = vunpack.c.h.b16 %v1467
      %v1642 = vunpack.c.l.b16 %v1468
      %v1643 = vunpack.c.h.b16 %v1468
      %v1644 = vunpack.c.l.b16 %v1469
      %v1645 = vunpack.c.h.b16 %v1469
      %v1646 = vunpack.c.l.b16 %v1470
      %v1647 = vunpack.c.h.b16 %v1470
      %v1648 = vunpack.c.l.b16 %v1471
      %v1649 = vunpack.c.h.b16 %v1471
      %v1650 = vunpack.c.l.b16 %v1472
      %v1651 = vunpack.c.h.b16 %v1472
      %v1652 = vunpack.c.l.b16 %v1473
      %v1653 = vunpack.c.h.b16 %v1473
      %v1654 = vunpack.c.l.b16 %v1474
      %v1655 = vunpack.c.h.b16 %v1474
      %v1656 = vunpack.c.l.b16 %v1475
      %v1657 = vunpack.c.h.b16 %v1475
      %v1658 = vunpack.c.l.b16 %v1476
      %v1659 = vunpack.c.h.b16 %v1476
      %v1660 = vunpack.c.l.b16 %v1477
      %v1661 = vunpack.c.h.b16 %v1477
      %v1662 = vunpack.c.l.b16 %v1478
      %v1663 = vunpack.c.h.b16 %v1478
      %v1664 = vunpack.c.l.b16 %v1479
      %v1665 = vunpack.c.h.b16 %v1479
      %v1666 = vpack.c.b16 %v1572, %v1570
      %v1667 = vpack.c.b16 %v1573, %v1571
      %v1668 = vpack.c.b16 %v1576, %v1574
      %v1669 = vpack.c.b16 %v1577, %v1575
      %v1670 = vpack.c.b16 %v1580, %v1578
      %v1671 = vpack.c.b16 %v1581, %v1579
      %v1672 = vpack.c.b16 %v1584, %v1582
      %v1673 = vpack.c.b16 %v1585, %v1583
      %v1674 = vpack.c.b16 %v1588, %v1586
      %v1675 = vpack.c.b16 %v1589, %v1587
      %v1676 = vpack.c.b16 %v1592, %v1590
      %v1677 = vpack.c.b16 %v1593, %v1591
      %v1678 = vpack.c.b16 %v1596, %v1594
      %v1679 = vpack.c.b16 %v1597, %v1595
      %v1680 = vpack.c.b16 %v1600, %v1598
      %v1681 = vpack.c.b16 %v1601, %v1599
      %v1682 = vpack.c.b16 %v1604, %v1602
      %v1683 = vpack.c.b16 %v1605, %v1603
      %v1684 = vpack.c.b16 %v1608, %v1606
      %v1685 = vpack.c.b16 %v1609, %v1607
      %v1686 = vpack.c.b16 %v1612, %v1610
      %v1687 = vpack.c.b16 %v1613, %v1611
      %v1688 = vpack.c.b16 %v1616, %v1614
      %v1689 = vpack.c.b16 %v1617, %v1615
      %v1690 = vpack.c.b16 %v1620, %v1618
      %v1691 = vpack.c.b16 %v1621, %v1619
      %v1692 = vpack.c.b16 %v1624, %v1622
      %v1693 = vpack.c.b16 %v1625, %v1623
      %v1694 = vpack.c.b16 %v1628, %v1626
      %v1695 = vpack.c.b16 %v1629, %v1627
      %v1696 = vpack.c.b16 %v1632, %v1630
      %v1697 = vpack.c.b16 %v1633, %v1631
      %v1698 = vpack.c.b16 %v1636, %v1634
      %v1699 = vpack.c.b16 %v1637, %v1635
      %v1700 = vpack.c.b16 %v1640, %v1638
      %v1701 = vpack.c.b16 %v1641, %v1639
      %v1702 = vpack.c.b16 %v1644, %v1642
      %v1703 = vpack.c.b16 %v1645, %v1643
      %v1704 = vpack.c.b16 %v1648, %v1646
      %v1705 = vpack.c.b16 %v1649, %v1647
      %v1706 = vpack.c.b16 %v1652, %v1650
      %v1707 = vpack.c.b16 %v1653, %v1651
      %v1708 = vpack.c.b16 %v1656, %v1654
      %v1709 = vpack.c.b16 %v1657, %v1655
      %v1710 = vpack.c.b16 %v1660, %v1658
      %v1711 = vpack.c.b16 %v1661, %v1659
      %v1712 = vpack.c.b16 %v1664, %v1662
      %v1713 = vpack.c.b16 %v1665, %v1663
      %1762 = vmatprep.subr.bf16.mxu0 %v1667
      %1763 = vmatpush1.bf16.msra.mxu0 %v1666
      %1764 = vmatprep.subr.bf16.mxu0 %v1669
      %1765 = vmatpush1.bf16.msra.mxu0 %v1668
      %1766 = vmatprep.subr.bf16.mxu0 %v1671
      %1767 = vmatpush1.bf16.msra.mxu0 %v1670
      %1768 = vmatprep.subr.bf16.mxu0 %v1673
      %1769 = vmatpush1.bf16.msra.mxu0 %v1672
      %1770 = vmatprep.subr.bf16.mxu0 %v1675
      %1771 = vmatpush1.bf16.msra.mxu0 %v1674
      %1772 = vmatprep.subr.bf16.mxu0 %v1677
      %1773 = vmatpush1.bf16.msra.mxu0 %v1676
      %1774 = vmatprep.subr.bf16.mxu0 %v1679
      %1775 = vmatpush1.bf16.msra.mxu0 %v1678
      %1776 = vmatprep.subr.bf16.mxu0 %v1681
      %1777 = vmatpush1.bf16.msra.mxu0 %v1680
      %1778 = vmatprep.subr.bf16.mxu0 %v1683
      %1779 = vmatpush1.bf16.msra.mxu0 %v1682
      %1780 = vmatprep.subr.bf16.mxu0 %v1685
      %1781 = vmatpush1.bf16.msra.mxu0 %v1684
      %1782 = vmatprep.subr.bf16.mxu0 %v1687
      %1783 = vmatpush1.bf16.msra.mxu0 %v1686
      %1784 = vmatprep.subr.bf16.mxu0 %v1689
      %1785 = vmatpush1.bf16.msra.mxu0 %v1688
      %1786 = vmatprep.subr.bf16.mxu0 %v1691
      %1787 = vmatpush1.bf16.msra.mxu0 %v1690
      %1788 = vmatprep.subr.bf16.mxu0 %v1693
      %1789 = vmatpush1.bf16.msra.mxu0 %v1692
      %1790 = vmatprep.subr.bf16.mxu0 %v1695
      %1791 = vmatpush1.bf16.msra.mxu0 %v1694
      %1792 = vmatprep.subr.bf16.mxu0 %v1697
      %1793 = vmatpush1.bf16.msra.mxu0 %v1696
      %1794 = vmatprep.mubr.bf16.mxu0 %v1506
      %1795 = vmatmul.mubr.bf16.gmra.mrb[0].mxu0 %v1505
      %v1796 = vpop.f32.mrb[0].mxu0
      %v1797 = vpop.f32.mrb[0].mxu0
      %v1798 = vpop.f32.mrb[0].mxu0
      %v1799 = vadd.f32 %v1515, %v1798
      %v1800 = vpop.f32.mrb[0].mxu0
      %v1801 = vadd.f32 %v1519, %v1800
      %1802 = vmatprep.mubr.bf16.mxu0 %v1509
      %1803 = vmatmul.mubr.bf16.gmra.mrb[0].mxu0 %v1508
      %v1804 = vpop.f32.mrb[0].mxu0
      %v1805 = vadd.f32 %v1515, %v1804
      %v1806 = vpop.f32.mrb[0].mxu0
      %v1807 = vadd.f32 %v1519, %v1806
      %v1808 = vpop.f32.mrb[0].mxu0
      %v1809 = vpop.f32.mrb[0].mxu0
      %1810 = vdwg.mxu0
      %1811 = vmatprep.subr.bf16.mxu0 %v1699
      %1812 = vmatpush1.bf16.msra.mxu0 %v1698
      %1813 = vmatprep.subr.bf16.mxu0 %v1701
      %1814 = vmatpush1.bf16.msra.mxu0 %v1700
      %1815 = vmatprep.subr.bf16.mxu0 %v1703
      %1816 = vmatpush1.bf16.msra.mxu0 %v1702
      %1817 = vmatprep.subr.bf16.mxu0 %v1705
      %1818 = vmatpush1.bf16.msra.mxu0 %v1704
      %1819 = vmatprep.subr.bf16.mxu0 %v1707
      %1820 = vmatpush1.bf16.msra.mxu0 %v1706
      %1821 = vmatprep.subr.bf16.mxu0 %v1709
      %1822 = vmatpush1.bf16.msra.mxu0 %v1708
      %1823 = vmatprep.subr.bf16.mxu0 %v1711
      %1824 = vmatpush1.bf16.msra.mxu0 %v1710
      %1825 = vmatprep.subr.bf16.mxu0 %v1713
      %1826 = vmatpush1.bf16.msra.mxu0 %v1712
      %1827 = vmatprep.subr.bf16.mxu0 0
      %1828 = vmatpush1.bf16.msra.mxu0 0
      %1829 = vmatprep.subr.bf16.mxu0 0
      %1830 = vmatpush1.bf16.msra.mxu0 0
      %1831 = vmatprep.subr.bf16.mxu0 0
      %1832 = vmatpush1.bf16.msra.mxu0 0
      %1833 = vmatprep.subr.bf16.mxu0 0
      %1834 = vmatpush1.bf16.msra.mxu0 0
      %1835 = vmatprep.subr.bf16.mxu0 0
      %1836 = vmatpush1.bf16.msra.mxu0 0
      %1837 = vmatprep.subr.bf16.mxu0 0
      %1838 = vmatpush1.bf16.msra.mxu0 0
      %1839 = vmatprep.subr.bf16.mxu0 0
      %1840 = vmatpush1.bf16.msra.mxu0 0
      %1841 = vmatprep.subr.bf16.mxu0 0
      %1842 = vmatpush1.bf16.msra.mxu0 0
      %1843 = vmatprep.mubr.bf16.mxu0 0
      %1844 = vmatmul.mubr.bf16.gmra.mrb[0].mxu0 %v1507
      %v1845 = vpop.f32.mrb[0].mxu0
      %v1846 = vpop.f32.mrb[0].mxu0
      %v1847 = vpop.f32.mrb[0].mxu0
      %v1848 = vadd.f32 %v1799, %v1847
      %v1849 = vpop.f32.mrb[0].mxu0
      %v1850 = vadd.f32 %v1801, %v1849
      %1851 = vmatprep.mubr.bf16.mxu0 0
      %1852 = vmatmul.mubr.bf16.gmra.mrb[0].mxu0 %v1510
      %v1853 = vpop.f32.mrb[0].mxu0
      %v1854 = vadd.f32 %v1805, %v1853
      %v1855 = vpop.f32.mrb[0].mxu0
      %v1856 = vadd.f32 %v1807, %v1855
      %v1857 = vpop.f32.mrb[0].mxu0
      %v1858 = vpop.f32.mrb[0].mxu0
      %1859 = vdwg.mxu0
      %v1860 = vpack.c.bf16 %v1854, %v1848
      %v1861 = vpack.c.bf16 %v1856, %v1850
      %v1864 = vunpack.c.l.b16 %v1860
      %v1865 = vunpack.c.l.b16 %v1861
      %v1866 = vunpack.c.h.b16 %v1860
      %v1867 = vunpack.c.h.b16 %v1861
      %v1868 = vpack.c.b16 %v1865, %v1864
      %v1869 = vpack.c.b16 %v1867, %v1866
      %1872 = vst [vmem:[%s544] sm:$0xff] %v1868
      %1873 = vst [vmem:[%s544 + $0x8] sm:$0xff] %v1869
      %s1874 = smul.u32 2, %s27
      %p1875 = scmp.lt.s32.totalorder %s26, 1
      %s1876 = scalar_select %p1875, %s26, 1
      %p1877 = scmp.lt.s32.totalorder %s1874, 1
      %s1878 = scalar_select %p1877, %s1874, 1
      %s1879 = smul.addr %s1878, 2
      %s1880 = smul.addr %s1876, 4
      %s1881 = sadd.s32 %s1879, %s1880
      %s1882 = smul.addr %s1881, 4
      %s1883 = scalar_lea.vmem %s11, %s1882
      // Predicated region
      $region65: #{decoder_forward.4} parent=63 // pred_check
        %p1884 = pneg %p322
      $region66: #{decoder_forward.4} parent=63 // pred_check_branch
        %1886 = sbr.rel (%p1884) target = $region68
      $region67: #{decoder_forward.4} parent=63 // pred_region
        %s1887 = smul.u32 2, %s27
      $region68: #{decoder_forward.4} parent=63 // pred_fallthru
        _
    $region64: #{decoder_forward.4} parent=5 // pred_fallthru
      _
    %p1888 = scmp.le.s32.totalorder 2, %s17
    // Predicated region
    $region69: #{decoder_forward.4} parent=5 // pred_check
      %p1889 = pneg %p1888
    $region70: #{decoder_forward.4} parent=5 // pred_check_branch
      %1891 = sbr.rel (%p1889) target = $region72
    $region71: #{decoder_forward.4} parent=5 // pred_region
      %s1892 = ssub.s32 %s17, 2
      // Predicated region
      $region73: #{decoder_forward.4} parent=71 // pred_check
        %p1893 = pneg %p328
      $region74: #{decoder_forward.4} parent=71 // pred_check_branch
        %1895 = sbr.rel (%p1893) target = $region76
      $region75: #{decoder_forward.4} parent=71 // pred_region
        %s1896 = smul.u32 2, %s29
        %p1897 = scmp.lt.s32.totalorder %s28, 1
        %s1898 = scalar_select %p1897, %s28, 1
        %p1899 = scmp.lt.s32.totalorder %s1896, 1
        %s1900 = scalar_select %p1899, %s1896, 1
        %s1901 = smul.addr %s1900, 2
        %s1902 = smul.addr %s1898, 4
        %s1903 = sadd.s32 %s1901, %s1902
        %s1904 = smul.addr %s1903, 4
        %s1905 = scalar_lea.vmem %s11, %s1904
      $region76: #{decoder_forward.4} parent=71 // pred_fallthru
        _
    $region72: #{decoder_forward.4} parent=5 // pred_fallthru
      _
  $region6: #{decoder_forward.4} parent=0 // loop_footer
    %s21 = sadd.s32 1, %s17
  $region7: #{decoder_forward.4} parent=0 // loop_footer_branch
    %16 = sbr.rel target = $region3
  $region8: #{decoder_forward.4} parent=0 // loop_exit
    _

// kernel: decoder_forward.3
$region0: #{decoder_forward.3}
  #allocation0 [shape = 'u32[]', space=smem, size = 0x4, offset = 0x4, fixed_abs, tag = 'smem constant byte address 0x4 - core index']
  #allocation1 [shape = 'u32[144,128]{1,0:T(1,128)}', space=vmem, size = 0x12000, scoped, tag = 'internal scratch']
  %s0 = inlined_call_operand.vmem [shape: f32[2,8,128], index: 0, kind: input, shape index: {}, may-alias: {0,1,2}]
  %s1 = inlined_call_operand.vmem [shape: f32[2,8,128], index: 1, kind: input, shape index: {}, may-alias: {0,1,2}]
  %s2 = inlined_call_operand.vmem [shape: f32[2,8,128], index: 2, kind: input, shape index: {}, may-alias: {0,1,2}]
  %s3 = inlined_call_operand.hbm [shape: bf16[384,128], index: 3, kind: input, shape index: {}]
  %s4 = inlined_call_operand.vmem [shape: f32[1,128], index: 4, kind: input, shape index: {}]
  %s5 = inlined_call_operand.hbm [shape: bf16[384,128], index: 5, kind: input, shape index: {}]
  %s6 = inlined_call_operand.vmem [shape: f32[1,128], index: 6, kind: input, shape index: {}]
  %s7 = inlined_call_operand.hbm [shape: bf16[128,128], index: 7, kind: input, shape index: {}]
  %s8 = inlined_call_operand.vmem [shape: f32[1,128], index: 8, kind: input, shape index: {}]
  %s9 = inlined_call_operand.hbm [shape: bf16[384,256], index: 9, kind: input, shape index: {}]
  %s10 = inlined_call_operand.vmem [shape: f32[1,256], index: 10, kind: input, shape index: {}]
  %s11 = inlined_call_operand.vmem [shape: bf16[2,8,256], index: 11, kind: output, shape index: {}]
  %s12 = sld [smem:[#allocation0]]
  $region93: #{decoder_forward.3} parent=0
    _
  %s14 = ssub.s32 1, %s12
  %s15 = scalar_select 0, %s14, %s12
  $region1: #{decoder_forward.3} parent=0
    #allocation2 [shape = 'u8[98304]{0}', space=vmem, size = 0x18000, scoped, tag = 'input window, operand 3, single buffered']
    #allocation3 [shape = 's32[2]{0}', space=sflag, size = 0x8, scoped, tag = 'scoped memory for decoder_forward.3']
    #allocation4 [shape = 'u8[98304]{0}', space=vmem, size = 0x18000, scoped, tag = 'input window, operand 5, single buffered']
    #allocation5 [shape = 's32[1]{0}', space=sflag, size = 0x4, scoped, tag = 'scoped memory for decoder_forward.3']
    #allocation6 [shape = 'u8[32768]{0}', space=vmem, size = 0x8000, scoped, tag = 'input window, operand 7, single buffered']
    #allocation7 [shape = 'u8[196608]{0}', space=vmem, size = 0x30000, scoped, tag = 'input window, operand 9, single buffered']
    #allocation8 [shape = 's32[1]{0}', space=sflag, size = 0x4, scoped, tag = 'scoped memory for decoder_forward.3']
    %16 = vsyncpa [#allocation3], 0
    %17 = vsyncpa [#allocation5], 0
    %18 = vsyncpa [#allocation8], 0
    loop: start=0, step=1, limit=4
    $region2: #{decoder_forward.3} parent=1 // loop_pre_header
      _
    $region3: #{decoder_forward.3} parent=1 // loop_header
      %s20 = sphi 0, %s24
      %p21 = scmp.ge.s32.totalorder %s20, 4
      %s27 = sphi 0, %s39
      %s28 = sphi 0, %s35
      %s29 = sphi 0, %s27
      %s30 = sphi 0, %s28
      %s31 = sphi 0, %s29
      %s32 = sphi 0, %s30
      %s44 = sphi 0, %s46
      %s47 = sphi 0, %s44
      %s48 = sphi 0, %s47
      %s64 = sphi 0, %s48
      %s78 = sphi 0, %s80
      %s81 = sphi 0, %s78
      %s82 = sphi 0, %s81
      %s98 = sphi 0, %s82
      %s112 = sphi 0, %s114
      %s115 = sphi 0, %s112
      %s116 = sphi 0, %s115
      %s132 = sphi 0, %s116
      %s136 = sphi 0, %s136
      %s138 = sphi 0, %s136
      %s139 = sphi 0, %s138
      %s153 = sphi 0, %s139
      %s157 = sphi 0, %s157
      %s159 = sphi 0, %s157
      %s160 = sphi 0, %s159
      %s174 = sphi 0, %s160
      %s178 = sphi 0, %s178
      %s180 = sphi 0, %s178
      %s181 = sphi 0, %s180
      %s195 = sphi 0, %s181
      %s199 = sphi 0, %s199
      %s201 = sphi 0, %s199
      %s202 = sphi 0, %s201
      %s216 = sphi 0, %s202
      %s220 = sphi 0, %s220
      %s222 = sphi 0, %s220
      %s223 = sphi 0, %s222
      %s237 = sphi 0, %s223
      %s241 = sphi 0, %s241
      %s243 = sphi 0, %s241
      %s244 = sphi 0, %s243
      %s258 = sphi 0, %s244
      %s262 = sphi 0, %s262
      %s264 = sphi 0, %s262
      %s265 = sphi 0, %s264
      %s279 = sphi 0, %s265
      %s283 = sphi 0, %s283
      %s285 = sphi 0, %s283
      %s286 = sphi 0, %s285
      %s300 = sphi 0, %s286
      %s308 = sphi 0, %s310
      %s311 = sphi 0, %s308
      %s312 = sphi 0, %s311
      %s328 = sphi 0, %s312
    $region4: #{decoder_forward.3} parent=1 // loop_header_branch
      %23 = sbr.rel (%p21) target = $region8
    $region5: #{decoder_forward.3} parent=1 // loop_body
      %s25 = ssub.s32 %s20, 1
      %s26 = ssub.s32 %s20, 2
      %s33 = sadd.s32 1, %s28
      %p34 = scmp.ge.s32.totalorder %s33, 1
      %s35 = scalar_select %p34, 0, %s33
      %s36 = sadd.s32 1, %s27
      %s37 = scalar_select %p34, %s36, %s27
      %p38 = scmp.ge.s32.totalorder %s37, 2
      %s39 = scalar_select %p38, 0, %s37
      %s40 = ssub.s32 %s27, %s39
      %s41 = ssub.s32 %s28, %s35
      %s42 = sor.u32 %s40, %s41
      %p43 = scmp.eq.s32.totalorder %s42, 0
      %s45 = sadd.s32 %s44, 1
      %s46 = scalar_select %p43, %s44, %s45
      %p49 = pneg %p43
      %p50 = scmp.eq.s32.totalorder %s20, 1
      %p51 = por %p49, %p50
      %p52 = scmp.ne.s32.totalorder %s44, %s47
      %p53 = scmp.eq.s32.totalorder %s20, 0
      %p54 = por %p52, %p53
      %p55 = scmp.ne.s32.totalorder %s44, %s47
      %p56 = scmp.eq.s32.totalorder %s25, 1
      %p57 = por %p55, %p56
      %p58 = scmp.ne.s32.totalorder %s47, %s48
      %p59 = scmp.eq.s32.totalorder %s25, 0
      %p60 = por %p58, %p59
      %p61 = scmp.ne.s32.totalorder %s47, %s48
      %p62 = scmp.eq.s32.totalorder %s26, 1
      %p63 = por %p61, %p62
      %p65 = scmp.ne.s32.totalorder %s48, %s64
      %p66 = scmp.eq.s32.totalorder %s26, 0
      %p67 = por %p65, %p66
      %s68 = ssub.s32 %s28, 1
      %p69 = scmp.gt.s32.totalorder %s68, 0
      %s70 = scalar_select %p69, %s68, 0
      %s71 = ssub.s32 %s35, 1
      %p72 = scmp.gt.s32.totalorder %s71, 0
      %s73 = scalar_select %p72, %s71, 0
      %s74 = ssub.s32 %s27, %s39
      %s75 = ssub.s32 %s70, %s73
      %s76 = sor.u32 %s74, %s75
      %p77 = scmp.eq.s32.totalorder %s76, 0
      %s79 = sadd.s32 %s78, 1
      %s80 = scalar_select %p77, %s78, %s79
      %p83 = pneg %p77
      %p84 = scmp.eq.s32.totalorder %s20, 1
      %p85 = por %p83, %p84
      %p86 = scmp.ne.s32.totalorder %s78, %s81
      %p87 = scmp.eq.s32.totalorder %s20, 0
      %p88 = por %p86, %p87
      %p89 = scmp.ne.s32.totalorder %s78, %s81
      %p90 = scmp.eq.s32.totalorder %s25, 1
      %p91 = por %p89, %p90
      %p92 = scmp.ne.s32.totalorder %s81, %s82
      %p93 = scmp.eq.s32.totalorder %s25, 0
      %p94 = por %p92, %p93
      %p95 = scmp.ne.s32.totalorder %s81, %s82
      %p96 = scmp.eq.s32.totalorder %s26, 1
      %p97 = por %p95, %p96
      %p99 = scmp.ne.s32.totalorder %s82, %s98
      %p100 = scmp.eq.s32.totalorder %s26, 0
      %p101 = por %p99, %p100
      %s102 = sadd.s32 %s28, 1
      %p103 = scmp.lt.s32.totalorder %s102, 0
      %s104 = scalar_select %p103, %s102, 0
      %s105 = sadd.s32 %s35, 1
      %p106 = scmp.lt.s32.totalorder %s105, 0
      %s107 = scalar_select %p106, %s105, 0
      %s108 = ssub.s32 %s27, %s39
      %s109 = ssub.s32 %s104, %s107
      %s110 = sor.u32 %s108, %s109
      %p111 = scmp.eq.s32.totalorder %s110, 0
      %s113 = sadd.s32 %s112, 1
      %s114 = scalar_select %p111, %s112, %s113
      %p117 = pneg %p111
      %p118 = scmp.eq.s32.totalorder %s20, 1
      %p119 = por %p117, %p118
      %p120 = scmp.ne.s32.totalorder %s112, %s115
      %p121 = scmp.eq.s32.totalorder %s20, 0
      %p122 = por %p120, %p121
      %p123 = scmp.ne.s32.totalorder %s112, %s115
      %p124 = scmp.eq.s32.totalorder %s25, 1
      %p125 = por %p123, %p124
      %p126 = scmp.ne.s32.totalorder %s115, %s116
      %p127 = scmp.eq.s32.totalorder %s25, 0
      %p128 = por %p126, %p127
      %p129 = scmp.ne.s32.totalorder %s115, %s116
      %p130 = scmp.eq.s32.totalorder %s26, 1
      %p131 = por %p129, %p130
      %p133 = scmp.ne.s32.totalorder %s116, %s132
      %p134 = scmp.eq.s32.totalorder %s26, 0
      %p135 = por %p133, %p134
      %s137 = sadd.s32 %s136, 1
      %p140 = scmp.eq.s32.totalorder %s20, 1
      %p141 = scmp.ne.s32.totalorder %s136, %s138
      %p142 = scmp.eq.s32.totalorder %s20, 0
      %p143 = por %p141, %p142
      %p144 = scmp.ne.s32.totalorder %s136, %s138
      %p145 = scmp.eq.s32.totalorder %s25, 1
      %p146 = por %p144, %p145
      %p147 = scmp.ne.s32.totalorder %s138, %s139
      %p148 = scmp.eq.s32.totalorder %s25, 0
      %p149 = por %p147, %p148
      %p150 = scmp.ne.s32.totalorder %s138, %s139
      %p151 = scmp.eq.s32.totalorder %s26, 1
      %p152 = por %p150, %p151
      %p154 = scmp.ne.s32.totalorder %s139, %s153
      %p155 = scmp.eq.s32.totalorder %s26, 0
      %p156 = por %p154, %p155
      %s158 = sadd.s32 %s157, 1
      %p161 = scmp.eq.s32.totalorder %s20, 1
      %p162 = scmp.ne.s32.totalorder %s157, %s159
      %p163 = scmp.eq.s32.totalorder %s20, 0
      %p164 = por %p162, %p163
      %p165 = scmp.ne.s32.totalorder %s157, %s159
      %p166 = scmp.eq.s32.totalorder %s25, 1
      %p167 = por %p165, %p166
      %p168 = scmp.ne.s32.totalorder %s159, %s160
      %p169 = scmp.eq.s32.totalorder %s25, 0
      %p170 = por %p168, %p169
      %p171 = scmp.ne.s32.totalorder %s159, %s160
      %p172 = scmp.eq.s32.totalorder %s26, 1
      %p173 = por %p171, %p172
      %p175 = scmp.ne.s32.totalorder %s160, %s174
      %p176 = scmp.eq.s32.totalorder %s26, 0
      %p177 = por %p175, %p176
      %s179 = sadd.s32 %s178, 1
      %p182 = scmp.eq.s32.totalorder %s20, 1
      %p183 = scmp.ne.s32.totalorder %s178, %s180
      %p184 = scmp.eq.s32.totalorder %s20, 0
      %p185 = por %p183, %p184
      %p186 = scmp.ne.s32.totalorder %s178, %s180
      %p187 = scmp.eq.s32.totalorder %s25, 1
      %p188 = por %p186, %p187
      %p189 = scmp.ne.s32.totalorder %s180, %s181
      %p190 = scmp.eq.s32.totalorder %s25, 0
      %p191 = por %p189, %p190
      %p192 = scmp.ne.s32.totalorder %s180, %s181
      %p193 = scmp.eq.s32.totalorder %s26, 1
      %p194 = por %p192, %p193
      %p196 = scmp.ne.s32.totalorder %s181, %s195
      %p197 = scmp.eq.s32.totalorder %s26, 0
      %p198 = por %p196, %p197
      %s200 = sadd.s32 %s199, 1
      %p203 = scmp.eq.s32.totalorder %s20, 1
      %p204 = scmp.ne.s32.totalorder %s199, %s201
      %p205 = scmp.eq.s32.totalorder %s20, 0
      %p206 = por %p204, %p205
      %p207 = scmp.ne.s32.totalorder %s199, %s201
      %p208 = scmp.eq.s32.totalorder %s25, 1
      %p209 = por %p207, %p208
      %p210 = scmp.ne.s32.totalorder %s201, %s202
      %p211 = scmp.eq.s32.totalorder %s25, 0
      %p212 = por %p210, %p211
      %p213 = scmp.ne.s32.totalorder %s201, %s202
      %p214 = scmp.eq.s32.totalorder %s26, 1
      %p215 = por %p213, %p214
      %p217 = scmp.ne.s32.totalorder %s202, %s216
      %p218 = scmp.eq.s32.totalorder %s26, 0
      %p219 = por %p217, %p218
      %s221 = sadd.s32 %s220, 1
      %p224 = scmp.eq.s32.totalorder %s20, 1
      %p225 = scmp.ne.s32.totalorder %s220, %s222
      %p226 = scmp.eq.s32.totalorder %s20, 0
      %p227 = por %p225, %p226
      %p228 = scmp.ne.s32.totalorder %s220, %s222
      %p229 = scmp.eq.s32.totalorder %s25, 1
      %p230 = por %p228, %p229
      %p231 = scmp.ne.s32.totalorder %s222, %s223
      %p232 = scmp.eq.s32.totalorder %s25, 0
      %p233 = por %p231, %p232
      %p234 = scmp.ne.s32.totalorder %s222, %s223
      %p235 = scmp.eq.s32.totalorder %s26, 1
      %p236 = por %p234, %p235
      %p238 = scmp.ne.s32.totalorder %s223, %s237
      %p239 = scmp.eq.s32.totalorder %s26, 0
      %p240 = por %p238, %p239
      %s242 = sadd.s32 %s241, 1
      %p245 = scmp.eq.s32.totalorder %s20, 1
      %p246 = scmp.ne.s32.totalorder %s241, %s243
      %p247 = scmp.eq.s32.totalorder %s20, 0
      %p248 = por %p246, %p247
      %p249 = scmp.ne.s32.totalorder %s241, %s243
      %p250 = scmp.eq.s32.totalorder %s25, 1
      %p251 = por %p249, %p250
      %p252 = scmp.ne.s32.totalorder %s243, %s244
      %p253 = scmp.eq.s32.totalorder %s25, 0
      %p254 = por %p252, %p253
      %p255 = scmp.ne.s32.totalorder %s243, %s244
      %p256 = scmp.eq.s32.totalorder %s26, 1
      %p257 = por %p255, %p256
      %p259 = scmp.ne.s32.totalorder %s244, %s258
      %p260 = scmp.eq.s32.totalorder %s26, 0
      %p261 = por %p259, %p260
      %s263 = sadd.s32 %s262, 1
      %p266 = scmp.eq.s32.totalorder %s20, 1
      %p267 = scmp.ne.s32.totalorder %s262, %s264
      %p268 = scmp.eq.s32.totalorder %s20, 0
      %p269 = por %p267, %p268
      %p270 = scmp.ne.s32.totalorder %s262, %s264
      %p271 = scmp.eq.s32.totalorder %s25, 1
      %p272 = por %p270, %p271
      %p273 = scmp.ne.s32.totalorder %s264, %s265
      %p274 = scmp.eq.s32.totalorder %s25, 0
      %p275 = por %p273, %p274
      %p276 = scmp.ne.s32.totalorder %s264, %s265
      %p277 = scmp.eq.s32.totalorder %s26, 1
      %p278 = por %p276, %p277
      %p280 = scmp.ne.s32.totalorder %s265, %s279
      %p281 = scmp.eq.s32.totalorder %s26, 0
      %p282 = por %p280, %p281
      %s284 = sadd.s32 %s283, 1
      %p287 = scmp.eq.s32.totalorder %s20, 1
      %p288 = scmp.ne.s32.totalorder %s283, %s285
      %p289 = scmp.eq.s32.totalorder %s20, 0
      %p290 = por %p288, %p289
      %p291 = scmp.ne.s32.totalorder %s283, %s285
      %p292 = scmp.eq.s32.totalorder %s25, 1
      %p293 = por %p291, %p292
      %p294 = scmp.ne.s32.totalorder %s285, %s286
      %p295 = scmp.eq.s32.totalorder %s25, 0
      %p296 = por %p294, %p295
      %p297 = scmp.ne.s32.totalorder %s285, %s286
      %p298 = scmp.eq.s32.totalorder %s26, 1
      %p299 = por %p297, %p298
      %p301 = scmp.ne.s32.totalorder %s286, %s300
      %p302 = scmp.eq.s32.totalorder %s26, 0
      %p303 = por %p301, %p302
      %s304 = ssub.s32 %s27, %s39
      %s305 = ssub.s32 %s28, %s35
      %s306 = sor.u32 %s304, %s305
      %p307 = scmp.eq.s32.totalorder %s306, 0
      %s309 = sadd.s32 %s308, 1
      %s310 = scalar_select %p307, %s308, %s309
      %p313 = pneg %p307
      %p314 = scmp.eq.s32.totalorder %s20, 1
      %p315 = por %p313, %p314
      %p316 = scmp.ne.s32.totalorder %s308, %s311
      %p317 = scmp.eq.s32.totalorder %s20, 0
      %p318 = por %p316, %p317
      %p319 = scmp.ne.s32.totalorder %s308, %s311
      %p320 = scmp.eq.s32.totalorder %s25, 1
      %p321 = por %p319, %p320
      %p322 = scmp.ne.s32.totalorder %s311, %s312
      %p323 = scmp.eq.s32.totalorder %s25, 0
      %p324 = por %p322, %p323
      %p325 = scmp.ne.s32.totalorder %s311, %s312
      %p326 = scmp.eq.s32.totalorder %s26, 1
      %p327 = por %p325, %p326
      %p329 = scmp.ne.s32.totalorder %s312, %s328
      %p330 = scmp.eq.s32.totalorder %s26, 0
      %p331 = por %p329, %p330
      %p332 = scmp.le.s32.totalorder 1, %s20
      %p333 = scmp.lt.s32.totalorder %s20, 3
      %p334 = pnand %p332, %p333
      %p335 = pneg %p334
      // Predicated region
      $region9: #{decoder_forward.3} parent=5 // pred_check
        _
      $region10: #{decoder_forward.3} parent=5 // pred_check_branch
        %337 = sbr.rel (%p334) target = $region12
      $region11: #{decoder_forward.3} parent=5 // pred_region
        %s338 = ssub.s32 %s20, 1
        // Predicated region
        $region13: #{decoder_forward.3} parent=11 // pred_check
          %p339 = pneg %p149
        $region14: #{decoder_forward.3} parent=11 // pred_check_branch
          %341 = sbr.rel (%p339) target = $region16
        $region15: #{decoder_forward.3} parent=11 // pred_region
          %s343 = ssub.s32 3072, 3072
          %344 = vsyncadd [#allocation3], %s343
          %s345 = sshll.u32 [#allocation2], 4
          %s346 = int_to_ptr.vmem [resolvable:$true] %s345
          %351 = dma.hbm_to_vmem [thread:$0]  %s3, 3072, %s346, [#allocation3], 64, 64, 4
        $region16: #{decoder_forward.3} parent=11 // pred_fallthru
          _
        // Predicated region
        $region17: #{decoder_forward.3} parent=11 // pred_check
          %p352 = pneg %p170
        $region18: #{decoder_forward.3} parent=11 // pred_check_branch
          %354 = sbr.rel (%p352) target = $region20
        $region19: #{decoder_forward.3} parent=11 // pred_region
          _
        $region20: #{decoder_forward.3} parent=11 // pred_fallthru
          _
        // Predicated region
        $region21: #{decoder_forward.3} parent=11 // pred_check
          %p355 = pneg %p191
        $region22: #{decoder_forward.3} parent=11 // pred_check_branch
          %357 = sbr.rel (%p355) target = $region24
        $region23: #{decoder_forward.3} parent=11 // pred_region
          %s359 = ssub.s32 3072, 3072
          %360 = vsyncadd [#allocation5], %s359
          %s361 = sshll.u32 [#allocation4], 4
          %s362 = int_to_ptr.vmem [resolvable:$true] %s361
          %367 = dma.hbm_to_vmem [thread:$0]  %s5, 3072, %s362, [#allocation5], 64, 64, 4
        $region24: #{decoder_forward.3} parent=11 // pred_fallthru
          _
        // Predicated region
        $region25: #{decoder_forward.3} parent=11 // pred_check
          %p368 = pneg %p212
        $region26: #{decoder_forward.3} parent=11 // pred_check_branch
          %370 = sbr.rel (%p368) target = $region28
        $region27: #{decoder_forward.3} parent=11 // pred_region
          _
        $region28: #{decoder_forward.3} parent=11 // pred_fallthru
          _
        // Predicated region
        $region29: #{decoder_forward.3} parent=11 // pred_check
          %p371 = pneg %p233
        $region30: #{decoder_forward.3} parent=11 // pred_check_branch
          %373 = sbr.rel (%p371) target = $region32
        $region31: #{decoder_forward.3} parent=11 // pred_region
          %s375 = ssub.s32 1024, 1024
          %376 = vsyncadd [#allocation5], %s375
          %s377 = sshll.u32 [#allocation6], 4
          %s378 = int_to_ptr.vmem [resolvable:$true] %s377
          %383 = dma.hbm_to_vmem [thread:$0]  %s7, 1024, %s378, [#allocation5], 64, 64, 4
        $region32: #{decoder_forward.3} parent=11 // pred_fallthru
          _
        // Predicated region
        $region33: #{decoder_forward.3} parent=11 // pred_check
          %p384 = pneg %p254
        $region34: #{decoder_forward.3} parent=11 // pred_check_branch
          %386 = sbr.rel (%p384) target = $region36
        $region35: #{decoder_forward.3} parent=11 // pred_region
          _
        $region36: #{decoder_forward.3} parent=11 // pred_fallthru
          _
        // Predicated region
        $region37: #{decoder_forward.3} parent=11 // pred_check
          %p387 = pneg %p275
        $region38: #{decoder_forward.3} parent=11 // pred_check_branch
          %389 = sbr.rel (%p387) target = $region40
        $region39: #{decoder_forward.3} parent=11 // pred_region
          %s391 = ssub.s32 6144, 6144
          %392 = vsyncadd [#allocation8], %s391
          %s393 = sshll.u32 [#allocation7], 4
          %s394 = int_to_ptr.vmem [resolvable:$true] %s393
          %399 = dma.hbm_to_vmem [thread:$0]  %s9, 6144, %s394, [#allocation8], 128, 128, 8
        $region40: #{decoder_forward.3} parent=11 // pred_fallthru
          _
        // Predicated region
        $region41: #{decoder_forward.3} parent=11 // pred_check
          %p400 = pneg %p296
        $region42: #{decoder_forward.3} parent=11 // pred_check_branch
          %402 = sbr.rel (%p400) target = $region44
        $region43: #{decoder_forward.3} parent=11 // pred_region
          _
        $region44: #{decoder_forward.3} parent=11 // pred_fallthru
          _
      $region12: #{decoder_forward.3} parent=5 // pred_fallthru
        _
      %p403 = scmp.lt.s32.totalorder %s20, 2
      // Predicated region
      $region45: #{decoder_forward.3} parent=5 // pred_check
        %p404 = pneg %p403
      $region46: #{decoder_forward.3} parent=5 // pred_check_branch
        %406 = sbr.rel (%p404) target = $region48
      $region47: #{decoder_forward.3} parent=5 // pred_region
        // Predicated region
        $region49: #{decoder_forward.3} parent=47 // pred_check
          %p407 = pneg %p54
        $region50: #{decoder_forward.3} parent=47 // pred_check_branch
          %409 = sbr.rel (%p407) target = $region52
        $region51: #{decoder_forward.3} parent=47 // pred_region
          %p410 = scmp.lt.s32.totalorder %s27, 1
          %s411 = scalar_select %p410, %s27, 1
          %p412 = scmp.lt.s32.totalorder %s28, 0
          %s413 = scalar_select %p412, %s28, 0
          %s414 = sadd.s32 %s413, %s411
          %s415 = smul.addr %s414, 8
          %s416 = scalar_lea.vmem %s0, %s415
        $region52: #{decoder_forward.3} parent=47 // pred_fallthru
          _
        // Predicated region
        $region53: #{decoder_forward.3} parent=47 // pred_check
          %p417 = pneg %p88
        $region54: #{decoder_forward.3} parent=47 // pred_check_branch
          %419 = sbr.rel (%p417) target = $region56
        $region55: #{decoder_forward.3} parent=47 // pred_region
          %s420 = ssub.s32 %s28, 1
          %p421 = scmp.gt.s32.totalorder %s420, 0
          %s422 = scalar_select %p421, %s420, 0
          %p423 = scmp.lt.s32.totalorder %s27, 1
          %s424 = scalar_select %p423, %s27, 1
          %p425 = scmp.lt.s32.totalorder %s422, 0
          %s426 = scalar_select %p425, %s422, 0
          %s427 = sadd.s32 %s426, %s424
          %s428 = smul.addr %s427, 8
          %s429 = scalar_lea.vmem %s1, %s428
          %s430 = ssub.s32 %s28, 1
          %p431 = scmp.gt.s32.totalorder %s430, 0
          %s432 = scalar_select %p431, %s430, 0
        $region56: #{decoder_forward.3} parent=47 // pred_fallthru
          _
        // Predicated region
        $region57: #{decoder_forward.3} parent=47 // pred_check
          %p433 = pneg %p122
        $region58: #{decoder_forward.3} parent=47 // pred_check_branch
          %435 = sbr.rel (%p433) target = $region60
        $region59: #{decoder_forward.3} parent=47 // pred_region
          %s436 = sadd.s32 %s28, 1
          %p437 = scmp.lt.s32.totalorder %s436, 0
          %s438 = scalar_select %p437, %s436, 0
          %p439 = scmp.lt.s32.totalorder %s27, 1
          %s440 = scalar_select %p439, %s27, 1
          %p441 = scmp.lt.s32.totalorder %s438, 0
          %s442 = scalar_select %p441, %s438, 0
          %s443 = sadd.s32 %s442, %s440
          %s444 = smul.addr %s443, 8
          %s445 = scalar_lea.vmem %s2, %s444
          %s446 = sadd.s32 %s28, 1
          %p447 = scmp.lt.s32.totalorder %s446, 0
          %s448 = scalar_select %p447, %s446, 0
        $region60: #{decoder_forward.3} parent=47 // pred_fallthru
          _
      $region48: #{decoder_forward.3} parent=5 // pred_fallthru
        _
      %p449 = scmp.le.s32.totalorder 1, %s20
      %p450 = scmp.lt.s32.totalorder %s20, 3
      %p451 = pnand %p449, %p450
      %p452 = pneg %p451
      // Predicated region
      $region61: #{decoder_forward.3} parent=5 // pred_check
        _
      $region62: #{decoder_forward.3} parent=5 // pred_check_branch
        %454 = sbr.rel (%p451) target = $region64
      $region63: #{decoder_forward.3} parent=5 // pred_region
        %s455 = ssub.s32 %s20, 1
        // Predicated region
        $region65: #{decoder_forward.3} parent=63 // pred_check
          %p456 = pneg %p149
        $region66: #{decoder_forward.3} parent=63 // pred_check_branch
          %458 = sbr.rel (%p456) target = $region68
        $region67: #{decoder_forward.3} parent=63 // pred_region
          %459 = dma.done [#allocation3], 3072
        $region68: #{decoder_forward.3} parent=63 // pred_fallthru
          _
        // Predicated region
        $region69: #{decoder_forward.3} parent=63 // pred_check
          %p460 = pneg %p191
        $region70: #{decoder_forward.3} parent=63 // pred_check_branch
          %462 = sbr.rel (%p460) target = $region72
        $region71: #{decoder_forward.3} parent=63 // pred_region
          %463 = dma.done [#allocation5], 3072
        $region72: #{decoder_forward.3} parent=63 // pred_fallthru
          _
        // Predicated region
        $region73: #{decoder_forward.3} parent=63 // pred_check
          %p464 = pneg %p233
        $region74: #{decoder_forward.3} parent=63 // pred_check_branch
          %466 = sbr.rel (%p464) target = $region76
        $region75: #{decoder_forward.3} parent=63 // pred_region
          %467 = dma.done [#allocation5], 1024
        $region76: #{decoder_forward.3} parent=63 // pred_fallthru
          _
        // Predicated region
        $region77: #{decoder_forward.3} parent=63 // pred_check
          %p468 = pneg %p275
        $region78: #{decoder_forward.3} parent=63 // pred_check_branch
          %470 = sbr.rel (%p468) target = $region80
        $region79: #{decoder_forward.3} parent=63 // pred_region
          %471 = dma.done [#allocation8], 6144
        $region80: #{decoder_forward.3} parent=63 // pred_fallthru
          _
        %p472 = scmp.lt.s32.totalorder %s29, 1
        %s473 = scalar_select %p472, %s29, 1
        %p474 = scmp.lt.s32.totalorder %s30, 0
        %s475 = scalar_select %p474, %s30, 0
        %s476 = sadd.s32 %s475, %s473
        %s477 = smul.addr %s476, 8
        %s478 = scalar_lea.vmem %s0, %s477
        %p479 = pneg %p60
        %p480 = pneg %p57
        %s481 = ssub.s32 %s30, 1
        %p482 = scmp.gt.s32.totalorder %s481, 0
        %s483 = scalar_select %p482, %s481, 0
        %p484 = scmp.lt.s32.totalorder %s29, 1
        %s485 = scalar_select %p484, %s29, 1
        %p486 = scmp.lt.s32.totalorder %s483, 0
        %s487 = scalar_select %p486, %s483, 0
        %s488 = sadd.s32 %s487, %s485
        %s489 = smul.addr %s488, 8
        %s490 = scalar_lea.vmem %s1, %s489
        %p491 = pneg %p94
        %p492 = pneg %p91
        %s493 = sadd.s32 %s30, 1
        %p494 = scmp.lt.s32.totalorder %s493, 0
        %s495 = scalar_select %p494, %s493, 0
        %p496 = scmp.lt.s32.totalorder %s29, 1
        %s497 = scalar_select %p496, %s29, 1
        %p498 = scmp.lt.s32.totalorder %s495, 0
        %s499 = scalar_select %p498, %s495, 0
        %s500 = sadd.s32 %s499, %s497
        %s501 = smul.addr %s500, 8
        %s502 = scalar_lea.vmem %s2, %s501
        %p503 = pneg %p128
        %p504 = pneg %p125
        %p505 = pneg %p149
        %p506 = pneg %p146
        %p507 = pneg %p170
        %p508 = pneg %p167
        %p509 = pneg %p191
        %p510 = pneg %p188
        %p511 = pneg %p212
        %p512 = pneg %p209
        %p513 = pneg %p233
        %p514 = pneg %p230
        %p515 = pneg %p254
        %p516 = pneg %p251
        %p517 = pneg %p275
        %p518 = pneg %p272
        %p519 = pneg %p296
        %p520 = pneg %p293
        %p521 = pneg %p324
        %p522 = pneg %p321
        %p523 = scmp.lt.s32.totalorder %s29, 1
        %s524 = scalar_select %p523, %s29, 1
        %p525 = scmp.lt.s32.totalorder %s30, 0
        %s526 = scalar_select %p525, %s30, 0
        %s527 = smul.addr %s526, 2
        %s528 = smul.addr %s524, 2
        %s529 = sadd.s32 %s527, %s528
        %s530 = smul.addr %s529, 4
        %s531 = scalar_lea.vmem %s11, %s530
        %p532 = scmp.lt.s32.totalorder %s29, 1
        %s533 = scalar_select %p532, %s29, 1
        %p534 = scmp.lt.s32.totalorder %s30, 0
        %s535 = scalar_select %p534, %s30, 0
        %s536 = sadd.s32 %s535, %s533
        %s537 = smul.addr %s536, 8
        %s538 = scalar_lea.vmem %s0, %s537
        %s539 = ssub.s32 %s30, 1
        %p540 = scmp.gt.s32.totalorder %s539, 0
        %s541 = scalar_select %p540, %s539, 0
        %p542 = scmp.lt.s32.totalorder %s29, 1
        %s543 = scalar_select %p542, %s29, 1
        %p544 = scmp.lt.s32.totalorder %s541, 0
        %s545 = scalar_select %p544, %s541, 0
        %s546 = sadd.s32 %s545, %s543
        %s547 = smul.addr %s546, 8
        %s548 = scalar_lea.vmem %s1, %s547
        %s549 = ssub.s32 %s30, 1
        %p550 = scmp.gt.s32.totalorder %s549, 0
        %s551 = scalar_select %p550, %s549, 0
        %s552 = sadd.s32 %s30, 1
        %p553 = scmp.lt.s32.totalorder %s552, 0
        %s554 = scalar_select %p553, %s552, 0
        %p555 = scmp.lt.s32.totalorder %s29, 1
        %s556 = scalar_select %p555, %s29, 1
        %p557 = scmp.lt.s32.totalorder %s554, 0
        %s558 = scalar_select %p557, %s554, 0
        %s559 = sadd.s32 %s558, %s556
        %s560 = smul.addr %s559, 8
        %s561 = scalar_lea.vmem %s2, %s560
        %s562 = sadd.s32 %s30, 1
        %p563 = scmp.lt.s32.totalorder %s562, 0
        %s564 = scalar_select %p563, %s562, 0
        %p565 = scmp.lt.s32.totalorder %s29, 1
        %s566 = scalar_select %p565, %s29, 1
        %p567 = scmp.lt.s32.totalorder %s30, 0
        %s568 = scalar_select %p567, %s30, 0
        %s569 = smul.addr %s568, 2
        %s570 = smul.addr %s566, 2
        %s571 = sadd.s32 %s569, %s570
        %s572 = smul.addr %s571, 4
        %s573 = scalar_lea.vmem %s11, %s572
        %v575 = vlaneseq
        %v576 = vshrl.u32 %v575, 7
        %v577 = vadd.s32 %v576, 8
        %v578 = vadd.s32 %v576, 16
        %vm579 = vcmp.lt.s32.totalorder %v576, 8
        %vm580 = vcmp.lt.s32.totalorder %v577, 8
        %vm581 = vcmp.lt.s32.totalorder %v578, 8
        %p582 = scmp.eq.s32.totalorder %s30, 0
        %s583 = scalar_select %p582, 1, 0
        %v584 = vstv %s583
        %vm585 = vcmp.eq.s32.totalorder %v584, 1
        %vm586 = vmand %vm579, %vm585
        %vm587 = vmand %vm580, %vm585
        %vm588 = vmand %vm581, %vm585
        %vm589 = vcmp.ge.s32.totalorder %v576, 16
        %vm590 = vcmp.ge.s32.totalorder %v577, 16
        %vm591 = vcmp.ge.s32.totalorder %v578, 16
        %vm592 = vmand %vm589, %vm585
        %vm593 = vmand %vm590, %vm585
        %vm594 = vmand %vm591, %vm585
        %vm595 = vmor %vm586, %vm592
        %vm596 = vmor %vm587, %vm593
        %vm597 = vmor %vm588, %vm594
        %v598 = vsel %vm595, 0.0, 1.0
        %v599 = vsel %vm596, 0.0, 1.0
        %v600 = vsel %vm597, 0.0, 1.0
        %vm601 = vcmp.gt.s32.totalorder %v576, 0
        %vm602 = vcmp.gt.s32.totalorder %v577, 0
        %vm603 = vcmp.gt.s32.totalorder %v578, 0
        %vm604 = vcmp.lt.s32.totalorder %v576, 23
        %vm605 = vcmp.lt.s32.totalorder %v577, 23
        %vm606 = vcmp.lt.s32.totalorder %v578, 23
        %v607 = vld [vmem:[%s548] sm:$0xff]
        %v608 = vld [vmem:[%s538] sm:$0xff]
        %v609 = vld [vmem:[%s561] sm:$0xff]
        %v610 = vmul.f32 %v607, %v598
        %v611 = vmul.f32 %v608, %v599
        %v612 = vmul.f32 %v609, %v600
        %v613 = vld [vmem:[#allocation2] sm:$0xf]
        %v614 = vld [vmem:[#allocation2 + $0x4] sm:$0xf]
        %v615 = vld [vmem:[#allocation2 + $0x8] sm:$0xf]
        %v616 = vld [vmem:[#allocation2 + $0xc] sm:$0xf]
        %v617 = vld [vmem:[#allocation2 + $0x10] sm:$0xf]
        %v618 = vld [vmem:[#allocation2 + $0x14] sm:$0xf]
        %v619 = vld [vmem:[#allocation2 + $0x18] sm:$0xf]
        %v620 = vld [vmem:[#allocation2 + $0x1c] sm:$0xf]
        %v621 = vld [vmem:[#allocation2 + $0x20] sm:$0xf]
        %v622 = vld [vmem:[#allocation2 + $0x24] sm:$0xf]
        %v623 = vld [vmem:[#allocation2 + $0x28] sm:$0xf]
        %v624 = vld [vmem:[#allocation2 + $0x2c] sm:$0xf]
        %v625 = vld [vmem:[#allocation2 + $0x30] sm:$0xf]
        %v626 = vld [vmem:[#allocation2 + $0x34] sm:$0xf]
        %v627 = vld [vmem:[#allocation2 + $0x38] sm:$0xf]
        %v628 = vld [vmem:[#allocation2 + $0x3c] sm:$0xf]
        %v629 = vld [vmem:[#allocation2 + $0x40] sm:$0xf]
        %v630 = vld [vmem:[#allocation2 + $0x44] sm:$0xf]
        %v631 = vld [vmem:[#allocation2 + $0x48] sm:$0xf]
        %v632 = vld [vmem:[#allocation2 + $0x4c] sm:$0xf]
        %v633 = vld [vmem:[#allocation2 + $0x50] sm:$0xf]
        %v634 = vld [vmem:[#allocation2 + $0x54] sm:$0xf]
        %v635 = vld [vmem:[#allocation2 + $0x58] sm:$0xf]
        %v636 = vld [vmem:[#allocation2 + $0x5c] sm:$0xf]
        %v637 = vld [vmem:[#allocation2 + $0x60] sm:$0xf]
        %v638 = vld [vmem:[#allocation2 + $0x64] sm:$0xf]
        %v639 = vld [vmem:[#allocation2 + $0x68] sm:$0xf]
        %v640 = vld [vmem:[#allocation2 + $0x6c] sm:$0xf]
        %v641 = vld [vmem:[#allocation2 + $0x70] sm:$0xf]
        %v642 = vld [vmem:[#allocation2 + $0x74] sm:$0xf]
        %v643 = vld [vmem:[#allocation2 + $0x78] sm:$0xf]
        %v644 = vld [vmem:[#allocation2 + $0x7c] sm:$0xf]
        %v645 = vld [vmem:[#allocation2 + $0x80] sm:$0xf]
        %v646 = vld [vmem:[#allocation2 + $0x84] sm:$0xf]
        %v647 = vld [vmem:[#allocation2 + $0x88] sm:$0xf]
        %v648 = vld [vmem:[#allocation2 + $0x8c] sm:$0xf]
        %v649 = vld [vmem:[#allocation2 + $0x90] sm:$0xf]
        %v650 = vld [vmem:[#allocation2 + $0x94] sm:$0xf]
        %v651 = vld [vmem:[#allocation2 + $0x98] sm:$0xf]
        %v652 = vld [vmem:[#allocation2 + $0x9c] sm:$0xf]
        %v653 = vld [vmem:[#allocation2 + $0xa0] sm:$0xf]
        %v654 = vld [vmem:[#allocation2 + $0xa4] sm:$0xf]
        %v655 = vld [vmem:[#allocation2 + $0xa8] sm:$0xf]
        %v656 = vld [vmem:[#allocation2 + $0xac] sm:$0xf]
        %v657 = vld [vmem:[#allocation2 + $0xb0] sm:$0xf]
        %v658 = vld [vmem:[#allocation2 + $0xb4] sm:$0xf]
        %v659 = vld [vmem:[#allocation2 + $0xb8] sm:$0xf]
        %v660 = vld [vmem:[#allocation2 + $0xbc] sm:$0xf]
        %v661 = vld [vmem:[%s4] sm:$0x1]
        %v662 = vrot.slane %v610, 7
        %v663 = vrot.slane %v611, 7
        %v664 = vrot.slane %v612, 7
        %vm665 = vcmp.lt.s32.totalorder %v576, 1
        %v666 = vsel %vm665, %v663, %v664
        %v667 = vsel %vm665, %v662, %v663
        %v668 = vsel %vm665, %v664, %v662
        %v669 = vsel %vm601, 1, 0
        %v670 = vsel %vm602, 1, 0
        %v671 = vsel %vm603, 1, 0
        %vm672 = vcmp.eq.s32.totalorder %v669, 1
        %vm673 = vcmp.eq.s32.totalorder %v670, 1
        %vm674 = vcmp.eq.s32.totalorder %v671, 1
        %v675 = vsel %vm672, %v668, 0.0
        %v676 = vsel %vm673, %v667, 0.0
        %v677 = vsel %vm674, %v666, 0.0
        %v678 = vrot.slane %v610, 1
        %v679 = vrot.slane %v611, 1
        %v680 = vrot.slane %v612, 1
        %vm681 = vcmp.lt.s32.totalorder %v576, 7
        %v682 = vsel %vm681, %v679, %v680
        %v683 = vsel %vm681, %v678, %v679
        %v684 = vsel %vm681, %v680, %v678
        %v685 = vsel %vm604, 1, 0
        %v686 = vsel %vm605, 1, 0
        %v687 = vsel %vm606, 1, 0
        %vm688 = vcmp.eq.s32.totalorder %v685, 1
        %vm689 = vcmp.eq.s32.totalorder %v686, 1
        %vm690 = vcmp.eq.s32.totalorder %v687, 1
        %v691 = vsel %vm688, %v683, 0.0
        %v692 = vsel %vm689, %v682, 0.0
        %v693 = vsel %vm690, %v684, 0.0
        %v694 = vpack.c.bf16 %v676, %v675
        %v695 = vpack.c.bf16 %v611, %v610
        %v696 = vpack.c.bf16 %v692, %v691
        %v697 = vpack.c.bf16 %v677, %v677
        %v698 = vpack.c.bf16 %v612, %v612
        %v699 = vpack.c.bf16 %v693, %v693
        %v701 = vlaneseq
        %v702 = vshrl.u32 %v701, 7
        %v703 = vsub.s32 0, %v702
        %v704 = vrot.slane %v661, %v703
        %v754 = vunpack.c.l.b16 %v613
        %v755 = vunpack.c.l.b16 %v614
        %v756 = vunpack.c.l.b16 %v615
        %v757 = vunpack.c.l.b16 %v616
        %v758 = vunpack.c.l.b16 %v617
        %v759 = vunpack.c.l.b16 %v618
        %v760 = vunpack.c.l.b16 %v619
        %v761 = vunpack.c.l.b16 %v620
        %v762 = vunpack.c.l.b16 %v621
        %v763 = vunpack.c.l.b16 %v622
        %v764 = vunpack.c.l.b16 %v623
        %v765 = vunpack.c.l.b16 %v624
        %v766 = vunpack.c.l.b16 %v625
        %v767 = vunpack.c.l.b16 %v626
        %v768 = vunpack.c.l.b16 %v627
        %v769 = vunpack.c.l.b16 %v628
        %v770 = vunpack.c.l.b16 %v629
        %v771 = vunpack.c.l.b16 %v630
        %v772 = vunpack.c.l.b16 %v631
        %v773 = vunpack.c.l.b16 %v632
        %v774 = vunpack.c.l.b16 %v633
        %v775 = vunpack.c.l.b16 %v634
        %v776 = vunpack.c.l.b16 %v635
        %v777 = vunpack.c.l.b16 %v636
        %v778 = vunpack.c.l.b16 %v637
        %v779 = vunpack.c.l.b16 %v638
        %v780 = vunpack.c.l.b16 %v639
        %v781 = vunpack.c.l.b16 %v640
        %v782 = vunpack.c.l.b16 %v641
        %v783 = vunpack.c.l.b16 %v642
        %v784 = vunpack.c.l.b16 %v643
        %v785 = vunpack.c.l.b16 %v644
        %v786 = vunpack.c.l.b16 %v645
        %v787 = vunpack.c.l.b16 %v646
        %v788 = vunpack.c.l.b16 %v647
        %v789 = vunpack.c.l.b16 %v648
        %v790 = vunpack.c.l.b16 %v649
        %v791 = vunpack.c.l.b16 %v650
        %v792 = vunpack.c.l.b16 %v651
        %v793 = vunpack.c.l.b16 %v652
        %v794 = vunpack.c.l.b16 %v653
        %v795 = vunpack.c.l.b16 %v654
        %v796 = vunpack.c.l.b16 %v655
        %v797 = vunpack.c.l.b16 %v656
        %v798 = vunpack.c.l.b16 %v657
        %v799 = vunpack.c.l.b16 %v658
        %v800 = vunpack.c.l.b16 %v659
        %v801 = vunpack.c.l.b16 %v660
        %v802 = vpack.c.b16 %v755, %v754
        %v803 = vpack.c.b16 %v757, %v756
        %v804 = vpack.c.b16 %v759, %v758
        %v805 = vpack.c.b16 %v761, %v760
        %v806 = vpack.c.b16 %v763, %v762
        %v807 = vpack.c.b16 %v765, %v764
        %v808 = vpack.c.b16 %v767, %v766
        %v809 = vpack.c.b16 %v769, %v768
        %v810 = vpack.c.b16 %v771, %v770
        %v811 = vpack.c.b16 %v773, %v772
        %v812 = vpack.c.b16 %v775, %v774
        %v813 = vpack.c.b16 %v777, %v776
        %v814 = vpack.c.b16 %v779, %v778
        %v815 = vpack.c.b16 %v781, %v780
        %v816 = vpack.c.b16 %v783, %v782
        %v817 = vpack.c.b16 %v785, %v784
        %v818 = vpack.c.b16 %v787, %v786
        %v819 = vpack.c.b16 %v789, %v788
        %v820 = vpack.c.b16 %v791, %v790
        %v821 = vpack.c.b16 %v793, %v792
        %v822 = vpack.c.b16 %v795, %v794
        %v823 = vpack.c.b16 %v797, %v796
        %v824 = vpack.c.b16 %v799, %v798
        %v825 = vpack.c.b16 %v801, %v800
        %850 = vmatprep.subr.bf16.mxu0 0
        %851 = vmatpush1.bf16.msra.mxu0 %v802
        %852 = vmatprep.subr.bf16.mxu0 0
        %853 = vmatpush1.bf16.msra.mxu0 %v803
        %854 = vmatprep.subr.bf16.mxu0 0
        %855 = vmatpush1.bf16.msra.mxu0 %v804
        %856 = vmatprep.subr.bf16.mxu0 0
        %857 = vmatpush1.bf16.msra.mxu0 %v805
        %858 = vmatprep.subr.bf16.mxu0 0
        %859 = vmatpush1.bf16.msra.mxu0 %v806
        %860 = vmatprep.subr.bf16.mxu0 0
        %861 = vmatpush1.bf16.msra.mxu0 %v807
        %862 = vmatprep.subr.bf16.mxu0 0
        %863 = vmatpush1.bf16.msra.mxu0 %v808
        %864 = vmatprep.subr.bf16.mxu0 0
        %865 = vmatpush1.bf16.msra.mxu0 %v809
        %866 = vmatprep.subr.bf16.mxu0 0
        %867 = vmatpush1.bf16.msra.mxu0 %v810
        %868 = vmatprep.subr.bf16.mxu0 0
        %869 = vmatpush1.bf16.msra.mxu0 %v811
        %870 = vmatprep.subr.bf16.mxu0 0
        %871 = vmatpush1.bf16.msra.mxu0 %v812
        %872 = vmatprep.subr.bf16.mxu0 0
        %873 = vmatpush1.bf16.msra.mxu0 %v813
        %874 = vmatprep.subr.bf16.mxu0 0
        %875 = vmatpush1.bf16.msra.mxu0 %v814
        %876 = vmatprep.subr.bf16.mxu0 0
        %877 = vmatpush1.bf16.msra.mxu0 %v815
        %878 = vmatprep.subr.bf16.mxu0 0
        %879 = vmatpush1.bf16.msra.mxu0 %v816
        %880 = vmatprep.subr.bf16.mxu0 0
        %881 = vmatpush1.bf16.msra.mxu0 %v817
        %882 = vmatprep.mubr.bf16.mxu0 %v695
        %883 = vmatmul.mubr.bf16.gmra.mrb[0].mxu0 %v694
        %v884 = vpop.f32.mrb[0].mxu0
        %v885 = vadd.f32 %v704, %v884
        %v886 = vpop.f32.mrb[0].mxu0
        %v887 = vpop.f32.mrb[0].mxu0
        %v888 = vadd.f32 %v704, %v887
        %v889 = vpop.f32.mrb[0].mxu0
        %890 = vmatprep.mubr.bf16.mxu0 %v698
        %891 = vmatmul.mubr.bf16.gmra.mrb[0].mxu0 %v697
        %v892 = vpop.f32.mrb[0].mxu0
        %v893 = vadd.f32 %v704, %v892
        %v894 = vpop.f32.mrb[0].mxu0
        %v895 = vpop.f32.mrb[0].mxu0
        %v896 = vpop.f32.mrb[0].mxu0
        %897 = vdwg.mxu0
        %898 = vmatprep.subr.bf16.mxu0 0
        %899 = vmatpush1.bf16.msra.mxu0 %v818
        %900 = vmatprep.subr.bf16.mxu0 0
        %901 = vmatpush1.bf16.msra.mxu0 %v819
        %902 = vmatprep.subr.bf16.mxu0 0
        %903 = vmatpush1.bf16.msra.mxu0 %v820
        %904 = vmatprep.subr.bf16.mxu0 0
        %905 = vmatpush1.bf16.msra.mxu0 %v821
        %906 = vmatprep.subr.bf16.mxu0 0
        %907 = vmatpush1.bf16.msra.mxu0 %v822
        %908 = vmatprep.subr.bf16.mxu0 0
        %909 = vmatpush1.bf16.msra.mxu0 %v823
        %910 = vmatprep.subr.bf16.mxu0 0
        %911 = vmatpush1.bf16.msra.mxu0 %v824
        %912 = vmatprep.subr.bf16.mxu0 0
        %913 = vmatpush1.bf16.msra.mxu0 %v825
        %914 = vmatprep.subr.bf16.mxu0 0
        %915 = vmatpush1.bf16.msra.mxu0 0
        %916 = vmatprep.subr.bf16.mxu0 0
        %917 = vmatpush1.bf16.msra.mxu0 0
        %918 = vmatprep.subr.bf16.mxu0 0
        %919 = vmatpush1.bf16.msra.mxu0 0
        %920 = vmatprep.subr.bf16.mxu0 0
        %921 = vmatpush1.bf16.msra.mxu0 0
        %922 = vmatprep.subr.bf16.mxu0 0
        %923 = vmatpush1.bf16.msra.mxu0 0
        %924 = vmatprep.subr.bf16.mxu0 0
        %925 = vmatpush1.bf16.msra.mxu0 0
        %926 = vmatprep.subr.bf16.mxu0 0
        %927 = vmatpush1.bf16.msra.mxu0 0
        %928 = vmatprep.subr.bf16.mxu0 0
        %929 = vmatpush1.bf16.msra.mxu0 0
        %930 = vmatprep.mubr.bf16.mxu0 0
        %931 = vmatmul.mubr.bf16.gmra.mrb[0].mxu0 %v696
        %v932 = vpop.f32.mrb[0].mxu0
        %v933 = vadd.f32 %v885, %v932
        %v934 = vpop.f32.mrb[0].mxu0
        %v935 = vpop.f32.mrb[0].mxu0
        %v936 = vadd.f32 %v888, %v935
        %v937 = vpop.f32.mrb[0].mxu0
        %938 = vmatprep.mubr.bf16.mxu0 0
        %939 = vmatmul.mubr.bf16.gmra.mrb[0].mxu0 %v699
        %v940 = vpop.f32.mrb[0].mxu0
        %v941 = vadd.f32 %v893, %v940
        %v942 = vpop.f32.mrb[0].mxu0
        %v943 = vpop.f32.mrb[0].mxu0
        %v944 = vpop.f32.mrb[0].mxu0
        %945 = vdwg.mxu0
        %v946 = vmul.f32 %v933, %v598
        %v947 = vmul.f32 %v936, %v599
        %v948 = vmul.f32 %v941, %v600
        %v949 = vmax.f32 %v946, 0.0
        %v950 = vmax.f32 %v947, 0.0
        %v951 = vmax.f32 %v948, 0.0
        %v952 = vld [vmem:[#allocation4] sm:$0xf]
        %v953 = vld [vmem:[#allocation4 + $0x4] sm:$0xf]
        %v954 = vld [vmem:[#allocation4 + $0x8] sm:$0xf]
        %v955 = vld [vmem:[#allocation4 + $0xc] sm:$0xf]
        %v956 = vld [vmem:[#allocation4 + $0x10] sm:$0xf]
        %v957 = vld [vmem:[#allocation4 + $0x14] sm:$0xf]
        %v958 = vld [vmem:[#allocation4 + $0x18] sm:$0xf]
        %v959 = vld [vmem:[#allocation4 + $0x1c] sm:$0xf]
        %v960 = vld [vmem:[#allocation4 + $0x20] sm:$0xf]
        %v961 = vld [vmem:[#allocation4 + $0x24] sm:$0xf]
        %v962 = vld [vmem:[#allocation4 + $0x28] sm:$0xf]
        %v963 = vld [vmem:[#allocation4 + $0x2c] sm:$0xf]
        %v964 = vld [vmem:[#allocation4 + $0x30] sm:$0xf]
        %v965 = vld [vmem:[#allocation4 + $0x34] sm:$0xf]
        %v966 = vld [vmem:[#allocation4 + $0x38] sm:$0xf]
        %v967 = vld [vmem:[#allocation4 + $0x3c] sm:$0xf]
        %v968 = vld [vmem:[#allocation4 + $0x40] sm:$0xf]
        %v969 = vld [vmem:[#allocation4 + $0x44] sm:$0xf]
        %v970 = vld [vmem:[#allocation4 + $0x48] sm:$0xf]
        %v971 = vld [vmem:[#allocation4 + $0x4c] sm:$0xf]
        %v972 = vld [vmem:[#allocation4 + $0x50] sm:$0xf]
        %v973 = vld [vmem:[#allocation4 + $0x54] sm:$0xf]
        %v974 = vld [vmem:[#allocation4 + $0x58] sm:$0xf]
        %v975 = vld [vmem:[#allocation4 + $0x5c] sm:$0xf]
        %v976 = vld [vmem:[#allocation4 + $0x60] sm:$0xf]
        %v977 = vld [vmem:[#allocation4 + $0x64] sm:$0xf]
        %v978 = vld [vmem:[#allocation4 + $0x68] sm:$0xf]
        %v979 = vld [vmem:[#allocation4 + $0x6c] sm:$0xf]
        %v980 = vld [vmem:[#allocation4 + $0x70] sm:$0xf]
        %v981 = vld [vmem:[#allocation4 + $0x74] sm:$0xf]
        %v982 = vld [vmem:[#allocation4 + $0x78] sm:$0xf]
        %v983 = vld [vmem:[#allocation4 + $0x7c] sm:$0xf]
        %v984 = vld [vmem:[#allocation4 + $0x80] sm:$0xf]
        %v985 = vld [vmem:[#allocation4 + $0x84] sm:$0xf]
        %v986 = vld [vmem:[#allocation4 + $0x88] sm:$0xf]
        %v987 = vld [vmem:[#allocation4 + $0x8c] sm:$0xf]
        %v988 = vld [vmem:[#allocation4 + $0x90] sm:$0xf]
        %v989 = vld [vmem:[#allocation4 + $0x94] sm:$0xf]
        %v990 = vld [vmem:[#allocation4 + $0x98] sm:$0xf]
        %v991 = vld [vmem:[#allocation4 + $0x9c] sm:$0xf]
        %v992 = vld [vmem:[#allocation4 + $0xa0] sm:$0xf]
        %v993 = vld [vmem:[#allocation4 + $0xa4] sm:$0xf]
        %v994 = vld [vmem:[#allocation4 + $0xa8] sm:$0xf]
        %v995 = vld [vmem:[#allocation4 + $0xac] sm:$0xf]
        %v996 = vld [vmem:[#allocation4 + $0xb0] sm:$0xf]
        %v997 = vld [vmem:[#allocation4 + $0xb4] sm:$0xf]
        %v998 = vld [vmem:[#allocation4 + $0xb8] sm:$0xf]
        %v999 = vld [vmem:[#allocation4 + $0xbc] sm:$0xf]
        %v1000 = vld [vmem:[%s6] sm:$0x1]
        %v1001 = vrot.slane %v949, 7
        %v1002 = vrot.slane %v950, 7
        %v1003 = vrot.slane %v951, 7
        %v1004 = vsel %vm665, %v1002, %v1003
        %v1005 = vsel %vm665, %v1001, %v1002
        %v1006 = vsel %vm665, %v1003, %v1001
        %v1007 = vsel %vm672, %v1006, 0.0
        %v1008 = vsel %vm673, %v1005, 0.0
        %v1009 = vsel %vm674, %v1004, 0.0
        %v1010 = vrot.slane %v949, 1
        %v1011 = vrot.slane %v950, 1
        %v1012 = vrot.slane %v951, 1
        %v1013 = vsel %vm681, %v1011, %v1012
        %v1014 = vsel %vm681, %v1010, %v1011
        %v1015 = vsel %vm681, %v1012, %v1010
        %v1016 = vsel %vm688, %v1014, 0.0
        %v1017 = vsel %vm689, %v1013, 0.0
        %v1018 = vsel %vm690, %v1015, 0.0
        %v1019 = vpack.c.bf16 %v1008, %v1007
        %v1020 = vpack.c.bf16 %v950, %v949
        %v1021 = vpack.c.bf16 %v1017, %v1016
        %v1022 = vpack.c.bf16 %v1009, %v1009
        %v1023 = vpack.c.bf16 %v951, %v951
        %v1024 = vpack.c.bf16 %v1018, %v1018
        %v1026 = vlaneseq
        %v1027 = vshrl.u32 %v1026, 7
        %v1028 = vsub.s32 0, %v1027
        %v1029 = vrot.slane %v1000, %v1028
        %v1079 = vunpack.c.l.b16 %v952
        %v1080 = vunpack.c.l.b16 %v953
        %v1081 = vunpack.c.l.b16 %v954
        %v1082 = vunpack.c.l.b16 %v955
        %v1083 = vunpack.c.l.b16 %v956
        %v1084 = vunpack.c.l.b16 %v957
        %v1085 = vunpack.c.l.b16 %v958
        %v1086 = vunpack.c.l.b16 %v959
        %v1087 = vunpack.c.l.b16 %v960
        %v1088 = vunpack.c.l.b16 %v961
        %v1089 = vunpack.c.l.b16 %v962
        %v1090 = vunpack.c.l.b16 %v963
        %v1091 = vunpack.c.l.b16 %v964
        %v1092 = vunpack.c.l.b16 %v965
        %v1093 = vunpack.c.l.b16 %v966
        %v1094 = vunpack.c.l.b16 %v967
        %v1095 = vunpack.c.l.b16 %v968
        %v1096 = vunpack.c.l.b16 %v969
        %v1097 = vunpack.c.l.b16 %v970
        %v1098 = vunpack.c.l.b16 %v971
        %v1099 = vunpack.c.l.b16 %v972
        %v1100 = vunpack.c.l.b16 %v973
        %v1101 = vunpack.c.l.b16 %v974
        %v1102 = vunpack.c.l.b16 %v975
        %v1103 = vunpack.c.l.b16 %v976
        %v1104 = vunpack.c.l.b16 %v977
        %v1105 = vunpack.c.l.b16 %v978
        %v1106 = vunpack.c.l.b16 %v979
        %v1107 = vunpack.c.l.b16 %v980
        %v1108 = vunpack.c.l.b16 %v981
        %v1109 = vunpack.c.l.b16 %v982
        %v1110 = vunpack.c.l.b16 %v983
        %v1111 = vunpack.c.l.b16 %v984
        %v1112 = vunpack.c.l.b16 %v985
        %v1113 = vunpack.c.l.b16 %v986
        %v1114 = vunpack.c.l.b16 %v987
        %v1115 = vunpack.c.l.b16 %v988
        %v1116 = vunpack.c.l.b16 %v989
        %v1117 = vunpack.c.l.b16 %v990
        %v1118 = vunpack.c.l.b16 %v991
        %v1119 = vunpack.c.l.b16 %v992
        %v1120 = vunpack.c.l.b16 %v993
        %v1121 = vunpack.c.l.b16 %v994
        %v1122 = vunpack.c.l.b16 %v995
        %v1123 = vunpack.c.l.b16 %v996
        %v1124 = vunpack.c.l.b16 %v997
        %v1125 = vunpack.c.l.b16 %v998
        %v1126 = vunpack.c.l.b16 %v999
        %v1127 = vpack.c.b16 %v1080, %v1079
        %v1128 = vpack.c.b16 %v1082, %v1081
        %v1129 = vpack.c.b16 %v1084, %v1083
        %v1130 = vpack.c.b16 %v1086, %v1085
        %v1131 = vpack.c.b16 %v1088, %v1087
        %v1132 = vpack.c.b16 %v1090, %v1089
        %v1133 = vpack.c.b16 %v1092, %v1091
        %v1134 = vpack.c.b16 %v1094, %v1093
        %v1135 = vpack.c.b16 %v1096, %v1095
        %v1136 = vpack.c.b16 %v1098, %v1097
        %v1137 = vpack.c.b16 %v1100, %v1099
        %v1138 = vpack.c.b16 %v1102, %v1101
        %v1139 = vpack.c.b16 %v1104, %v1103
        %v1140 = vpack.c.b16 %v1106, %v1105
        %v1141 = vpack.c.b16 %v1108, %v1107
        %v1142 = vpack.c.b16 %v1110, %v1109
        %v1143 = vpack.c.b16 %v1112, %v1111
        %v1144 = vpack.c.b16 %v1114, %v1113
        %v1145 = vpack.c.b16 %v1116, %v1115
        %v1146 = vpack.c.b16 %v1118, %v1117
        %v1147 = vpack.c.b16 %v1120, %v1119
        %v1148 = vpack.c.b16 %v1122, %v1121
        %v1149 = vpack.c.b16 %v1124, %v1123
        %v1150 = vpack.c.b16 %v1126, %v1125
        %1175 = vmatprep.subr.bf16.mxu0 0
        %1176 = vmatpush1.bf16.msra.mxu0 %v1127
        %1177 = vmatprep.subr.bf16.mxu0 0
        %1178 = vmatpush1.bf16.msra.mxu0 %v1128
        %1179 = vmatprep.subr.bf16.mxu0 0
        %1180 = vmatpush1.bf16.msra.mxu0 %v1129
        %1181 = vmatprep.subr.bf16.mxu0 0
        %1182 = vmatpush1.bf16.msra.mxu0 %v1130
        %1183 = vmatprep.subr.bf16.mxu0 0
        %1184 = vmatpush1.bf16.msra.mxu0 %v1131
        %1185 = vmatprep.subr.bf16.mxu0 0
        %1186 = vmatpush1.bf16.msra.mxu0 %v1132
        %1187 = vmatprep.subr.bf16.mxu0 0
        %1188 = vmatpush1.bf16.msra.mxu0 %v1133
        %1189 = vmatprep.subr.bf16.mxu0 0
        %1190 = vmatpush1.bf16.msra.mxu0 %v1134
        %1191 = vmatprep.subr.bf16.mxu0 0
        %1192 = vmatpush1.bf16.msra.mxu0 %v1135
        %1193 = vmatprep.subr.bf16.mxu0 0
        %1194 = vmatpush1.bf16.msra.mxu0 %v1136
        %1195 = vmatprep.subr.bf16.mxu0 0
        %1196 = vmatpush1.bf16.msra.mxu0 %v1137
        %1197 = vmatprep.subr.bf16.mxu0 0
        %1198 = vmatpush1.bf16.msra.mxu0 %v1138
        %1199 = vmatprep.subr.bf16.mxu0 0
        %1200 = vmatpush1.bf16.msra.mxu0 %v1139
        %1201 = vmatprep.subr.bf16.mxu0 0
        %1202 = vmatpush1.bf16.msra.mxu0 %v1140
        %1203 = vmatprep.subr.bf16.mxu0 0
        %1204 = vmatpush1.bf16.msra.mxu0 %v1141
        %1205 = vmatprep.subr.bf16.mxu0 0
        %1206 = vmatpush1.bf16.msra.mxu0 %v1142
        %1207 = vmatprep.mubr.bf16.mxu0 %v1020
        %1208 = vmatmul.mubr.bf16.gmra.mrb[0].mxu0 %v1019
        %v1209 = vpop.f32.mrb[0].mxu0
        %v1210 = vadd.f32 %v1029, %v1209
        %v1211 = vpop.f32.mrb[0].mxu0
        %v1212 = vpop.f32.mrb[0].mxu0
        %v1213 = vadd.f32 %v1029, %v1212
        %v1214 = vpop.f32.mrb[0].mxu0
        %1215 = vmatprep.mubr.bf16.mxu0 %v1023
        %1216 = vmatmul.mubr.bf16.gmra.mrb[0].mxu0 %v1022
        %v1217 = vpop.f32.mrb[0].mxu0
        %v1218 = vadd.f32 %v1029, %v1217
        %v1219 = vpop.f32.mrb[0].mxu0
        %v1220 = vpop.f32.mrb[0].mxu0
        %v1221 = vpop.f32.mrb[0].mxu0
        %1222 = vdwg.mxu0
        %1223 = vmatprep.subr.bf16.mxu0 0
        %1224 = vmatpush1.bf16.msra.mxu0 %v1143
        %1225 = vmatprep.subr.bf16.mxu0 0
        %1226 = vmatpush1.bf16.msra.mxu0 %v1144
        %1227 = vmatprep.subr.bf16.mxu0 0
        %1228 = vmatpush1.bf16.msra.mxu0 %v1145
        %1229 = vmatprep.subr.bf16.mxu0 0
        %1230 = vmatpush1.bf16.msra.mxu0 %v1146
        %1231 = vmatprep.subr.bf16.mxu0 0
        %1232 = vmatpush1.bf16.msra.mxu0 %v1147
        %1233 = vmatprep.subr.bf16.mxu0 0
        %1234 = vmatpush1.bf16.msra.mxu0 %v1148
        %1235 = vmatprep.subr.bf16.mxu0 0
        %1236 = vmatpush1.bf16.msra.mxu0 %v1149
        %1237 = vmatprep.subr.bf16.mxu0 0
        %1238 = vmatpush1.bf16.msra.mxu0 %v1150
        %1239 = vmatprep.subr.bf16.mxu0 0
        %1240 = vmatpush1.bf16.msra.mxu0 0
        %1241 = vmatprep.subr.bf16.mxu0 0
        %1242 = vmatpush1.bf16.msra.mxu0 0
        %1243 = vmatprep.subr.bf16.mxu0 0
        %1244 = vmatpush1.bf16.msra.mxu0 0
        %1245 = vmatprep.subr.bf16.mxu0 0
        %1246 = vmatpush1.bf16.msra.mxu0 0
        %1247 = vmatprep.subr.bf16.mxu0 0
        %1248 = vmatpush1.bf16.msra.mxu0 0
        %1249 = vmatprep.subr.bf16.mxu0 0
        %1250 = vmatpush1.bf16.msra.mxu0 0
        %1251 = vmatprep.subr.bf16.mxu0 0
        %1252 = vmatpush1.bf16.msra.mxu0 0
        %1253 = vmatprep.subr.bf16.mxu0 0
        %1254 = vmatpush1.bf16.msra.mxu0 0
        %1255 = vmatprep.mubr.bf16.mxu0 0
        %1256 = vmatmul.mubr.bf16.gmra.mrb[0].mxu0 %v1021
        %v1257 = vpop.f32.mrb[0].mxu0
        %v1258 = vadd.f32 %v1210, %v1257
        %v1259 = vpop.f32.mrb[0].mxu0
        %v1260 = vpop.f32.mrb[0].mxu0
        %v1261 = vadd.f32 %v1213, %v1260
        %v1262 = vpop.f32.mrb[0].mxu0
        %1263 = vmatprep.mubr.bf16.mxu0 0
        %1264 = vmatmul.mubr.bf16.gmra.mrb[0].mxu0 %v1024
        %v1265 = vpop.f32.mrb[0].mxu0
        %v1266 = vadd.f32 %v1218, %v1265
        %v1267 = vpop.f32.mrb[0].mxu0
        %v1268 = vpop.f32.mrb[0].mxu0
        %v1269 = vpop.f32.mrb[0].mxu0
        %1270 = vdwg.mxu0
        %v1271 = vmax.f32 %v1258, 0.0
        %v1272 = vmax.f32 %v1261, 0.0
        %v1273 = vmax.f32 %v1266, 0.0
        %v1274 = vpack.c.bf16 %v1272, %v1271
        %v1275 = vpack.c.bf16 %v1273, %v1273
        %v1276 = vld [vmem:[#allocation6] sm:$0xf]
        %v1277 = vld [vmem:[#allocation6 + $0x4] sm:$0xf]
        %v1278 = vld [vmem:[#allocation6 + $0x8] sm:$0xf]
        %v1279 = vld [vmem:[#allocation6 + $0xc] sm:$0xf]
        %v1280 = vld [vmem:[#allocation6 + $0x10] sm:$0xf]
        %v1281 = vld [vmem:[#allocation6 + $0x14] sm:$0xf]
        %v1282 = vld [vmem:[#allocation6 + $0x18] sm:$0xf]
        %v1283 = vld [vmem:[#allocation6 + $0x1c] sm:$0xf]
        %v1284 = vld [vmem:[#allocation6 + $0x20] sm:$0xf]
        %v1285 = vld [vmem:[#allocation6 + $0x24] sm:$0xf]
        %v1286 = vld [vmem:[#allocation6 + $0x28] sm:$0xf]
        %v1287 = vld [vmem:[#allocation6 + $0x2c] sm:$0xf]
        %v1288 = vld [vmem:[#allocation6 + $0x30] sm:$0xf]
        %v1289 = vld [vmem:[#allocation6 + $0x34] sm:$0xf]
        %v1290 = vld [vmem:[#allocation6 + $0x38] sm:$0xf]
        %v1291 = vld [vmem:[#allocation6 + $0x3c] sm:$0xf]
        %v1292 = vld [vmem:[%s8] sm:$0x1]
        %v1294 = vlaneseq
        %v1295 = vshrl.u32 %v1294, 7
        %v1296 = vsub.s32 0, %v1295
        %v1297 = vrot.slane %v1292, %v1296
        %v1315 = vunpack.c.l.b16 %v1276
        %v1316 = vunpack.c.l.b16 %v1277
        %v1317 = vunpack.c.l.b16 %v1278
        %v1318 = vunpack.c.l.b16 %v1279
        %v1319 = vunpack.c.l.b16 %v1280
        %v1320 = vunpack.c.l.b16 %v1281
        %v1321 = vunpack.c.l.b16 %v1282
        %v1322 = vunpack.c.l.b16 %v1283
        %v1323 = vunpack.c.l.b16 %v1284
        %v1324 = vunpack.c.l.b16 %v1285
        %v1325 = vunpack.c.l.b16 %v1286
        %v1326 = vunpack.c.l.b16 %v1287
        %v1327 = vunpack.c.l.b16 %v1288
        %v1328 = vunpack.c.l.b16 %v1289
        %v1329 = vunpack.c.l.b16 %v1290
        %v1330 = vunpack.c.l.b16 %v1291
        %v1331 = vpack.c.b16 %v1316, %v1315
        %v1332 = vpack.c.b16 %v1318, %v1317
        %v1333 = vpack.c.b16 %v1320, %v1319
        %v1334 = vpack.c.b16 %v1322, %v1321
        %v1335 = vpack.c.b16 %v1324, %v1323
        %v1336 = vpack.c.b16 %v1326, %v1325
        %v1337 = vpack.c.b16 %v1328, %v1327
        %v1338 = vpack.c.b16 %v1330, %v1329
        %1347 = vmatprep.subr.bf16.mxu0 0
        %1348 = vmatpush1.bf16.msra.mxu0 %v1331
        %1349 = vmatprep.subr.bf16.mxu0 0
        %1350 = vmatpush1.bf16.msra.mxu0 %v1332
        %1351 = vmatprep.subr.bf16.mxu0 0
        %1352 = vmatpush1.bf16.msra.mxu0 %v1333
        %1353 = vmatprep.subr.bf16.mxu0 0
        %1354 = vmatpush1.bf16.msra.mxu0 %v1334
        %1355 = vmatprep.subr.bf16.mxu0 0
        %1356 = vmatpush1.bf16.msra.mxu0 %v1335
        %1357 = vmatprep.subr.bf16.mxu0 0
        %1358 = vmatpush1.bf16.msra.mxu0 %v1336
        %1359 = vmatprep.subr.bf16.mxu0 0
        %1360 = vmatpush1.bf16.msra.mxu0 %v1337
        %1361 = vmatprep.subr.bf16.mxu0 0
        %1362 = vmatpush1.bf16.msra.mxu0 %v1338
        %1363 = vmatprep.subr.bf16.mxu0 0
        %1364 = vmatpush1.bf16.msra.mxu0 0
        %1365 = vmatprep.subr.bf16.mxu0 0
        %1366 = vmatpush1.bf16.msra.mxu0 0
        %1367 = vmatprep.subr.bf16.mxu0 0
        %1368 = vmatpush1.bf16.msra.mxu0 0
        %1369 = vmatprep.subr.bf16.mxu0 0
        %1370 = vmatpush1.bf16.msra.mxu0 0
        %1371 = vmatprep.subr.bf16.mxu0 0
        %1372 = vmatpush1.bf16.msra.mxu0 0
        %1373 = vmatprep.subr.bf16.mxu0 0
        %1374 = vmatpush1.bf16.msra.mxu0 0
        %1375 = vmatprep.subr.bf16.mxu0 0
        %1376 = vmatpush1.bf16.msra.mxu0 0
        %1377 = vmatprep.subr.bf16.mxu0 0
        %1378 = vmatpush1.bf16.msra.mxu0 0
        %1379 = vmatprep.mubr.bf16.mxu0 0
        %1380 = vmatmul.mubr.bf16.gmra.mrb[0].mxu0 %v1274
        %v1381 = vpop.f32.mrb[0].mxu0
        %v1382 = vadd.f32 %v1297, %v1381
        %v1383 = vpop.f32.mrb[0].mxu0
        %v1384 = vpop.f32.mrb[0].mxu0
        %v1385 = vadd.f32 %v1297, %v1384
        %v1386 = vpop.f32.mrb[0].mxu0
        %1387 = vmatprep.mubr.bf16.mxu0 0
        %1388 = vmatmul.mubr.bf16.gmra.mrb[0].mxu0 %v1275
        %v1389 = vpop.f32.mrb[0].mxu0
        %v1390 = vadd.f32 %v1297, %v1389
        %v1391 = vpop.f32.mrb[0].mxu0
        %v1392 = vpop.f32.mrb[0].mxu0
        %v1393 = vpop.f32.mrb[0].mxu0
        %1394 = vdwg.mxu0
        %v1395 = vadd.f32 %v946, %v1382
        %v1396 = vadd.f32 %v947, %v1385
        %v1397 = vadd.f32 %v948, %v1390
        %v1398 = vmul.f32 %v1395, %v598
        %v1399 = vmul.f32 %v1396, %v599
        %v1400 = vmul.f32 %v1397, %v600
        %v1401 = vld [vmem:[#allocation7] sm:$0xff]
        %v1402 = vld [vmem:[#allocation7 + $0x8] sm:$0xff]
        %v1403 = vld [vmem:[#allocation7 + $0x10] sm:$0xff]
        %v1404 = vld [vmem:[#allocation7 + $0x18] sm:$0xff]
        %v1405 = vld [vmem:[#allocation7 + $0x20] sm:$0xff]
        %v1406 = vld [vmem:[#allocation7 + $0x28] sm:$0xff]
        %v1407 = vld [vmem:[#allocation7 + $0x30] sm:$0xff]
        %v1408 = vld [vmem:[#allocation7 + $0x38] sm:$0xff]
        %v1409 = vld [vmem:[#allocation7 + $0x40] sm:$0xff]
        %v1410 = vld [vmem:[#allocation7 + $0x48] sm:$0xff]
        %v1411 = vld [vmem:[#allocation7 + $0x50] sm:$0xff]
        %v1412 = vld [vmem:[#allocation7 + $0x58] sm:$0xff]
        %v1413 = vld [vmem:[#allocation7 + $0x60] sm:$0xff]
        %v1414 = vld [vmem:[#allocation7 + $0x68] sm:$0xff]
        %v1415 = vld [vmem:[#allocation7 + $0x70] sm:$0xff]
        %v1416 = vld [vmem:[#allocation7 + $0x78] sm:$0xff]
        %v1417 = vld [vmem:[#allocation7 + $0x80] sm:$0xff]
        %v1418 = vld [vmem:[#allocation7 + $0x88] sm:$0xff]
        %v1419 = vld [vmem:[#allocation7 + $0x90] sm:$0xff]
        %v1420 = vld [vmem:[#allocation7 + $0x98] sm:$0xff]
        %v1421 = vld [vmem:[#allocation7 + $0xa0] sm:$0xff]
        %v1422 = vld [vmem:[#allocation7 + $0xa8] sm:$0xff]
        %v1423 = vld [vmem:[#allocation7 + $0xb0] sm:$0xff]
        %v1424 = vld [vmem:[#allocation7 + $0xb8] sm:$0xff]
        %v1425 = vld [vmem:[#allocation7 + $0xc0] sm:$0xff]
        %v1426 = vld [vmem:[#allocation7 + $0xc8] sm:$0xff]
        %v1427 = vld [vmem:[#allocation7 + $0xd0] sm:$0xff]
        %v1428 = vld [vmem:[#allocation7 + $0xd8] sm:$0xff]
        %v1429 = vld [vmem:[#allocation7 + $0xe0] sm:$0xff]
        %v1430 = vld [vmem:[#allocation7 + $0xe8] sm:$0xff]
        %v1431 = vld [vmem:[#allocation7 + $0xf0] sm:$0xff]
        %v1432 = vld [vmem:[#allocation7 + $0xf8] sm:$0xff]
        %v1433 = vld [vmem:[#allocation7 + $0x100] sm:$0xff]
        %v1434 = vld [vmem:[#allocation7 + $0x108] sm:$0xff]
        %v1435 = vld [vmem:[#allocation7 + $0x110] sm:$0xff]
        %v1436 = vld [vmem:[#allocation7 + $0x118] sm:$0xff]
        %v1437 = vld [vmem:[#allocation7 + $0x120] sm:$0xff]
        %v1438 = vld [vmem:[#allocation7 + $0x128] sm:$0xff]
        %v1439 = vld [vmem:[#allocation7 + $0x130] sm:$0xff]
        %v1440 = vld [vmem:[#allocation7 + $0x138] sm:$0xff]
        %v1441 = vld [vmem:[#allocation7 + $0x140] sm:$0xff]
        %v1442 = vld [vmem:[#allocation7 + $0x148] sm:$0xff]
        %v1443 = vld [vmem:[#allocation7 + $0x150] sm:$0xff]
        %v1444 = vld [vmem:[#allocation7 + $0x158] sm:$0xff]
        %v1445 = vld [vmem:[#allocation7 + $0x160] sm:$0xff]
        %v1446 = vld [vmem:[#allocation7 + $0x168] sm:$0xff]
        %v1447 = vld [vmem:[#allocation7 + $0x170] sm:$0xff]
        %v1448 = vld [vmem:[#allocation7 + $0x178] sm:$0xff]
        %v1449 = vld [vmem:[%s10] sm:$0x3]
        %v1450 = vrot.slane %v1398, 7
        %v1451 = vrot.slane %v1399, 7
        %v1452 = vrot.slane %v1400, 7
        %v1453 = vsel %vm665, %v1451, %v1452
        %v1454 = vsel %vm665, %v1450, %v1451
        %v1455 = vsel %vm665, %v1452, %v1450
        %v1456 = vsel %vm672, %v1455, 0.0
        %v1457 = vsel %vm673, %v1454, 0.0
        %v1458 = vsel %vm674, %v1453, 0.0
        %v1459 = vrot.slane %v1398, 1
        %v1460 = vrot.slane %v1399, 1
        %v1461 = vrot.slane %v1400, 1
        %v1462 = vsel %vm681, %v1460, %v1461
        %v1463 = vsel %vm681, %v1459, %v1460
        %v1464 = vsel %vm681, %v1461, %v1459
        %v1465 = vsel %vm688, %v1463, 0.0
        %v1466 = vsel %vm689, %v1462, 0.0
        %v1467 = vsel %vm690, %v1464, 0.0
        %v1468 = vpack.c.bf16 %v1457, %v1456
        %v1469 = vpack.c.bf16 %v1399, %v1398
        %v1470 = vpack.c.bf16 %v1466, %v1465
        %v1471 = vpack.c.bf16 %v1458, %v1458
        %v1472 = vpack.c.bf16 %v1400, %v1400
        %v1473 = vpack.c.bf16 %v1467, %v1467
        %v1475 = vlaneseq
        %v1476 = vshrl.u32 %v1475, 7
        %v1477 = vsub.s32 0, %v1476
        %v1478 = vrot.slane %v1449, %v1477
        %v1479 = vlaneseq
        %v1480 = vshrl.u32 %v1479, 7
        %v1481 = vsub.s32 1, %v1480
        %v1482 = vrot.slane %v1449, %v1481
        %v1533 = vunpack.c.l.b16 %v1401
        %v1534 = vunpack.c.h.b16 %v1401
        %v1535 = vunpack.c.l.b16 %v1402
        %v1536 = vunpack.c.h.b16 %v1402
        %v1537 = vunpack.c.l.b16 %v1403
        %v1538 = vunpack.c.h.b16 %v1403
        %v1539 = vunpack.c.l.b16 %v1404
        %v1540 = vunpack.c.h.b16 %v1404
        %v1541 = vunpack.c.l.b16 %v1405
        %v1542 = vunpack.c.h.b16 %v1405
        %v1543 = vunpack.c.l.b16 %v1406
        %v1544 = vunpack.c.h.b16 %v1406
        %v1545 = vunpack.c.l.b16 %v1407
        %v1546 = vunpack.c.h.b16 %v1407
        %v1547 = vunpack.c.l.b16 %v1408
        %v1548 = vunpack.c.h.b16 %v1408
        %v1549 = vunpack.c.l.b16 %v1409
        %v1550 = vunpack.c.h.b16 %v1409
        %v1551 = vunpack.c.l.b16 %v1410
        %v1552 = vunpack.c.h.b16 %v1410
        %v1553 = vunpack.c.l.b16 %v1411
        %v1554 = vunpack.c.h.b16 %v1411
        %v1555 = vunpack.c.l.b16 %v1412
        %v1556 = vunpack.c.h.b16 %v1412
        %v1557 = vunpack.c.l.b16 %v1413
        %v1558 = vunpack.c.h.b16 %v1413
        %v1559 = vunpack.c.l.b16 %v1414
        %v1560 = vunpack.c.h.b16 %v1414
        %v1561 = vunpack.c.l.b16 %v1415
        %v1562 = vunpack.c.h.b16 %v1415
        %v1563 = vunpack.c.l.b16 %v1416
        %v1564 = vunpack.c.h.b16 %v1416
        %v1565 = vunpack.c.l.b16 %v1417
        %v1566 = vunpack.c.h.b16 %v1417
        %v1567 = vunpack.c.l.b16 %v1418
        %v1568 = vunpack.c.h.b16 %v1418
        %v1569 = vunpack.c.l.b16 %v1419
        %v1570 = vunpack.c.h.b16 %v1419
        %v1571 = vunpack.c.l.b16 %v1420
        %v1572 = vunpack.c.h.b16 %v1420
        %v1573 = vunpack.c.l.b16 %v1421
        %v1574 = vunpack.c.h.b16 %v1421
        %v1575 = vunpack.c.l.b16 %v1422
        %v1576 = vunpack.c.h.b16 %v1422
        %v1577 = vunpack.c.l.b16 %v1423
        %v1578 = vunpack.c.h.b16 %v1423
        %v1579 = vunpack.c.l.b16 %v1424
        %v1580 = vunpack.c.h.b16 %v1424
        %v1581 = vunpack.c.l.b16 %v1425
        %v1582 = vunpack.c.h.b16 %v1425
        %v1583 = vunpack.c.l.b16 %v1426
        %v1584 = vunpack.c.h.b16 %v1426
        %v1585 = vunpack.c.l.b16 %v1427
        %v1586 = vunpack.c.h.b16 %v1427
        %v1587 = vunpack.c.l.b16 %v1428
        %v1588 = vunpack.c.h.b16 %v1428
        %v1589 = vunpack.c.l.b16 %v1429
        %v1590 = vunpack.c.h.b16 %v1429
        %v1591 = vunpack.c.l.b16 %v1430
        %v1592 = vunpack.c.h.b16 %v1430
        %v1593 = vunpack.c.l.b16 %v1431
        %v1594 = vunpack.c.h.b16 %v1431
        %v1595 = vunpack.c.l.b16 %v1432
        %v1596 = vunpack.c.h.b16 %v1432
        %v1597 = vunpack.c.l.b16 %v1433
        %v1598 = vunpack.c.h.b16 %v1433
        %v1599 = vunpack.c.l.b16 %v1434
        %v1600 = vunpack.c.h.b16 %v1434
        %v1601 = vunpack.c.l.b16 %v1435
        %v1602 = vunpack.c.h.b16 %v1435
        %v1603 = vunpack.c.l.b16 %v1436
        %v1604 = vunpack.c.h.b16 %v1436
        %v1605 = vunpack.c.l.b16 %v1437
        %v1606 = vunpack.c.h.b16 %v1437
        %v1607 = vunpack.c.l.b16 %v1438
        %v1608 = vunpack.c.h.b16 %v1438
        %v1609 = vunpack.c.l.b16 %v1439
        %v1610 = vunpack.c.h.b16 %v1439
        %v1611 = vunpack.c.l.b16 %v1440
        %v1612 = vunpack.c.h.b16 %v1440
        %v1613 = vunpack.c.l.b16 %v1441
        %v1614 = vunpack.c.h.b16 %v1441
        %v1615 = vunpack.c.l.b16 %v1442
        %v1616 = vunpack.c.h.b16 %v1442
        %v1617 = vunpack.c.l.b16 %v1443
        %v1618 = vunpack.c.h.b16 %v1443
        %v1619 = vunpack.c.l.b16 %v1444
        %v1620 = vunpack.c.h.b16 %v1444
        %v1621 = vunpack.c.l.b16 %v1445
        %v1622 = vunpack.c.h.b16 %v1445
        %v1623 = vunpack.c.l.b16 %v1446
        %v1624 = vunpack.c.h.b16 %v1446
        %v1625 = vunpack.c.l.b16 %v1447
        %v1626 = vunpack.c.h.b16 %v1447
        %v1627 = vunpack.c.l.b16 %v1448
        %v1628 = vunpack.c.h.b16 %v1448
        %v1629 = vpack.c.b16 %v1535, %v1533
        %v1630 = vpack.c.b16 %v1536, %v1534
        %v1631 = vpack.c.b16 %v1539, %v1537
        %v1632 = vpack.c.b16 %v1540, %v1538
        %v1633 = vpack.c.b16 %v1543, %v1541
        %v1634 = vpack.c.b16 %v1544, %v1542
        %v1635 = vpack.c.b16 %v1547, %v1545
        %v1636 = vpack.c.b16 %v1548, %v1546
        %v1637 = vpack.c.b16 %v1551, %v1549
        %v1638 = vpack.c.b16 %v1552, %v1550
        %v1639 = vpack.c.b16 %v1555, %v1553
        %v1640 = vpack.c.b16 %v1556, %v1554
        %v1641 = vpack.c.b16 %v1559, %v1557
        %v1642 = vpack.c.b16 %v1560, %v1558
        %v1643 = vpack.c.b16 %v1563, %v1561
        %v1644 = vpack.c.b16 %v1564, %v1562
        %v1645 = vpack.c.b16 %v1567, %v1565
        %v1646 = vpack.c.b16 %v1568, %v1566
        %v1647 = vpack.c.b16 %v1571, %v1569
        %v1648 = vpack.c.b16 %v1572, %v1570
        %v1649 = vpack.c.b16 %v1575, %v1573
        %v1650 = vpack.c.b16 %v1576, %v1574
        %v1651 = vpack.c.b16 %v1579, %v1577
        %v1652 = vpack.c.b16 %v1580, %v1578
        %v1653 = vpack.c.b16 %v1583, %v1581
        %v1654 = vpack.c.b16 %v1584, %v1582
        %v1655 = vpack.c.b16 %v1587, %v1585
        %v1656 = vpack.c.b16 %v1588, %v1586
        %v1657 = vpack.c.b16 %v1591, %v1589
        %v1658 = vpack.c.b16 %v1592, %v1590
        %v1659 = vpack.c.b16 %v1595, %v1593
        %v1660 = vpack.c.b16 %v1596, %v1594
        %v1661 = vpack.c.b16 %v1599, %v1597
        %v1662 = vpack.c.b16 %v1600, %v1598
        %v1663 = vpack.c.b16 %v1603, %v1601
        %v1664 = vpack.c.b16 %v1604, %v1602
        %v1665 = vpack.c.b16 %v1607, %v1605
        %v1666 = vpack.c.b16 %v1608, %v1606
        %v1667 = vpack.c.b16 %v1611, %v1609
        %v1668 = vpack.c.b16 %v1612, %v1610
        %v1669 = vpack.c.b16 %v1615, %v1613
        %v1670 = vpack.c.b16 %v1616, %v1614
        %v1671 = vpack.c.b16 %v1619, %v1617
        %v1672 = vpack.c.b16 %v1620, %v1618
        %v1673 = vpack.c.b16 %v1623, %v1621
        %v1674 = vpack.c.b16 %v1624, %v1622
        %v1675 = vpack.c.b16 %v1627, %v1625
        %v1676 = vpack.c.b16 %v1628, %v1626
        %1725 = vmatprep.subr.bf16.mxu0 %v1630
        %1726 = vmatpush1.bf16.msra.mxu0 %v1629
        %1727 = vmatprep.subr.bf16.mxu0 %v1632
        %1728 = vmatpush1.bf16.msra.mxu0 %v1631
        %1729 = vmatprep.subr.bf16.mxu0 %v1634
        %1730 = vmatpush1.bf16.msra.mxu0 %v1633
        %1731 = vmatprep.subr.bf16.mxu0 %v1636
        %1732 = vmatpush1.bf16.msra.mxu0 %v1635
        %1733 = vmatprep.subr.bf16.mxu0 %v1638
        %1734 = vmatpush1.bf16.msra.mxu0 %v1637
        %1735 = vmatprep.subr.bf16.mxu0 %v1640
        %1736 = vmatpush1.bf16.msra.mxu0 %v1639
        %1737 = vmatprep.subr.bf16.mxu0 %v1642
        %1738 = vmatpush1.bf16.msra.mxu0 %v1641
        %1739 = vmatprep.subr.bf16.mxu0 %v1644
        %1740 = vmatpush1.bf16.msra.mxu0 %v1643
        %1741 = vmatprep.subr.bf16.mxu0 %v1646
        %1742 = vmatpush1.bf16.msra.mxu0 %v1645
        %1743 = vmatprep.subr.bf16.mxu0 %v1648
        %1744 = vmatpush1.bf16.msra.mxu0 %v1647
        %1745 = vmatprep.subr.bf16.mxu0 %v1650
        %1746 = vmatpush1.bf16.msra.mxu0 %v1649
        %1747 = vmatprep.subr.bf16.mxu0 %v1652
        %1748 = vmatpush1.bf16.msra.mxu0 %v1651
        %1749 = vmatprep.subr.bf16.mxu0 %v1654
        %1750 = vmatpush1.bf16.msra.mxu0 %v1653
        %1751 = vmatprep.subr.bf16.mxu0 %v1656
        %1752 = vmatpush1.bf16.msra.mxu0 %v1655
        %1753 = vmatprep.subr.bf16.mxu0 %v1658
        %1754 = vmatpush1.bf16.msra.mxu0 %v1657
        %1755 = vmatprep.subr.bf16.mxu0 %v1660
        %1756 = vmatpush1.bf16.msra.mxu0 %v1659
        %1757 = vmatprep.mubr.bf16.mxu0 %v1469
        %1758 = vmatmul.mubr.bf16.gmra.mrb[0].mxu0 %v1468
        %v1759 = vpop.f32.mrb[0].mxu0
        %v1760 = vpop.f32.mrb[0].mxu0
        %v1761 = vpop.f32.mrb[0].mxu0
        %v1762 = vadd.f32 %v1478, %v1761
        %v1763 = vpop.f32.mrb[0].mxu0
        %v1764 = vadd.f32 %v1482, %v1763
        %1765 = vmatprep.mubr.bf16.mxu0 %v1472
        %1766 = vmatmul.mubr.bf16.gmra.mrb[0].mxu0 %v1471
        %v1767 = vpop.f32.mrb[0].mxu0
        %v1768 = vpop.f32.mrb[0].mxu0
        %v1769 = vpop.f32.mrb[0].mxu0
        %v1770 = vpop.f32.mrb[0].mxu0
        %1771 = vdwg.mxu0
        %1772 = vmatprep.subr.bf16.mxu0 %v1662
        %1773 = vmatpush1.bf16.msra.mxu0 %v1661
        %1774 = vmatprep.subr.bf16.mxu0 %v1664
        %1775 = vmatpush1.bf16.msra.mxu0 %v1663
        %1776 = vmatprep.subr.bf16.mxu0 %v1666
        %1777 = vmatpush1.bf16.msra.mxu0 %v1665
        %1778 = vmatprep.subr.bf16.mxu0 %v1668
        %1779 = vmatpush1.bf16.msra.mxu0 %v1667
        %1780 = vmatprep.subr.bf16.mxu0 %v1670
        %1781 = vmatpush1.bf16.msra.mxu0 %v1669
        %1782 = vmatprep.subr.bf16.mxu0 %v1672
        %1783 = vmatpush1.bf16.msra.mxu0 %v1671
        %1784 = vmatprep.subr.bf16.mxu0 %v1674
        %1785 = vmatpush1.bf16.msra.mxu0 %v1673
        %1786 = vmatprep.subr.bf16.mxu0 %v1676
        %1787 = vmatpush1.bf16.msra.mxu0 %v1675
        %1788 = vmatprep.subr.bf16.mxu0 0
        %1789 = vmatpush1.bf16.msra.mxu0 0
        %1790 = vmatprep.subr.bf16.mxu0 0
        %1791 = vmatpush1.bf16.msra.mxu0 0
        %1792 = vmatprep.subr.bf16.mxu0 0
        %1793 = vmatpush1.bf16.msra.mxu0 0
        %1794 = vmatprep.subr.bf16.mxu0 0
        %1795 = vmatpush1.bf16.msra.mxu0 0
        %1796 = vmatprep.subr.bf16.mxu0 0
        %1797 = vmatpush1.bf16.msra.mxu0 0
        %1798 = vmatprep.subr.bf16.mxu0 0
        %1799 = vmatpush1.bf16.msra.mxu0 0
        %1800 = vmatprep.subr.bf16.mxu0 0
        %1801 = vmatpush1.bf16.msra.mxu0 0
        %1802 = vmatprep.subr.bf16.mxu0 0
        %1803 = vmatpush1.bf16.msra.mxu0 0
        %1804 = vmatprep.mubr.bf16.mxu0 0
        %1805 = vmatmul.mubr.bf16.gmra.mrb[0].mxu0 %v1470
        %v1806 = vpop.f32.mrb[0].mxu0
        %v1807 = vpop.f32.mrb[0].mxu0
        %v1808 = vpop.f32.mrb[0].mxu0
        %v1809 = vadd.f32 %v1762, %v1808
        %v1810 = vpop.f32.mrb[0].mxu0
        %v1811 = vadd.f32 %v1764, %v1810
        %1812 = vmatprep.mubr.bf16.mxu0 0
        %1813 = vmatmul.mubr.bf16.gmra.mrb[0].mxu0 %v1473
        %v1814 = vpop.f32.mrb[0].mxu0
        %v1815 = vpop.f32.mrb[0].mxu0
        %v1816 = vpop.f32.mrb[0].mxu0
        %v1817 = vpop.f32.mrb[0].mxu0
        %1818 = vdwg.mxu0
        %v1819 = vpack.c.bf16 %v1809, %v1809
        %v1820 = vpack.c.bf16 %v1811, %v1811
        %v1823 = vunpack.c.l.b16 %v1819
        %v1824 = vunpack.c.l.b16 %v1820
        %v1825 = vpack.c.b16 %v1824, %v1823
        %1827 = vst [vmem:[%s573] sm:$0xff] %v1825
        %p1828 = scmp.lt.s32.totalorder %s29, 1
        %s1829 = scalar_select %p1828, %s29, 1
        %p1830 = scmp.lt.s32.totalorder %s30, 0
        %s1831 = scalar_select %p1830, %s30, 0
        %s1832 = smul.addr %s1831, 2
        %s1833 = smul.addr %s1829, 2
        %s1834 = sadd.s32 %s1832, %s1833
        %s1835 = smul.addr %s1834, 4
        %s1836 = scalar_lea.vmem %s11, %s1835
        // Predicated region
        $region81: #{decoder_forward.3} parent=63 // pred_check
          %p1837 = pneg %p321
        $region82: #{decoder_forward.3} parent=63 // pred_check_branch
          %1839 = sbr.rel (%p1837) target = $region84
        $region83: #{decoder_forward.3} parent=63 // pred_region
          _
        $region84: #{decoder_forward.3} parent=63 // pred_fallthru
          _
      $region64: #{decoder_forward.3} parent=5 // pred_fallthru
        _
      %p1840 = scmp.le.s32.totalorder 2, %s20
      // Predicated region
      $region85: #{decoder_forward.3} parent=5 // pred_check
        %p1841 = pneg %p1840
      $region86: #{decoder_forward.3} parent=5 // pred_check_branch
        %1843 = sbr.rel (%p1841) target = $region88
      $region87: #{decoder_forward.3} parent=5 // pred_region
        %s1844 = ssub.s32 %s20, 2
        // Predicated region
        $region89: #{decoder_forward.3} parent=87 // pred_check
          %p1845 = pneg %p327
        $region90: #{decoder_forward.3} parent=87 // pred_check_branch
          %1847 = sbr.rel (%p1845) target = $region92
        $region91: #{decoder_forward.3} parent=87 // pred_region
          %p1848 = scmp.lt.s32.totalorder %s31, 1
          %s1849 = scalar_select %p1848, %s31, 1
          %p1850 = scmp.lt.s32.totalorder %s32, 0
          %s1851 = scalar_select %p1850, %s32, 0
          %s1852 = smul.addr %s1851, 2
          %s1853 = smul.addr %s1849, 2
          %s1854 = sadd.s32 %s1852, %s1853
          %s1855 = smul.addr %s1854, 4
          %s1856 = scalar_lea.vmem %s11, %s1855
        $region92: #{decoder_forward.3} parent=87 // pred_fallthru
          _
      $region88: #{decoder_forward.3} parent=5 // pred_fallthru
        _
    $region6: #{decoder_forward.3} parent=1 // loop_footer
      %s24 = sadd.s32 1, %s20
    $region7: #{decoder_forward.3} parent=1 // loop_footer_branch
      %19 = sbr.rel target = $region3
    $region8: #{decoder_forward.3} parent=1 // loop_exit
      _
    %1857 = vsyncpa [#allocation3], 1
    %s1858 = scalar_lea.sflag [#allocation3], 1
    %1859 = vsyncpa %s1858, 1
    %1860 = vsyncpa [#allocation5], 1
    %1861 = vsyncpa [#allocation8], 1

</llo_original>
